<compile_context>
chip_gen: v7x
topology: tpu7x:2x2x1
jax: 0.10.0
libtpu: 0.0.40
codegen_flags: <defaults>
</compile_context>

<pallas_src>
from functools import partial

import numpy as np
import jax
import jax.numpy as jnp
from jax.experimental import pallas as pl
from jax.experimental.pallas import tpu as pltpu


# ------------------------- host-side static helpers -------------------------

def _build_gather(H, W, k=3, stride=2, pad=1):
    """0/1 gather matrices G[t] : (H*W,) -> (Ho*Wo,) for tap t = ki*k + kj.

    (G_t @ x)[o, :] selects the input row feeding output position o through
    kernel tap t (or is 0 for out-of-bounds taps => exact zero padding)."""
    Ho = (H + 2 * pad - k) // stride + 1
    Wo = (W + 2 * pad - k) // stride + 1
    G = np.zeros((k * k, Ho * Wo, H * W), np.float32)
    for ki in range(k):
        for kj in range(k):
            t = ki * k + kj
            for oh in range(Ho):
                ih = oh * stride + ki - pad
                if not (0 <= ih < H):
                    continue
                for ow in range(Wo):
                    iw = ow * stride + kj - pad
                    if 0 <= iw < W:
                        G[t, oh * Wo + ow, ih * W + iw] = 1.0
    return G, Ho, Wo


def init_params(key, in_channel, num_classes, c0=32, num_layers=3):
    params = {}
    cin, cout = in_channel, c0
    keys = jax.random.split(key, num_layers + 1)
    for n in range(num_layers):
        scale = 1.0 / np.sqrt(3.0 * 3.0 * cin)
        params[f"conv{n}_w"] = (
            jax.random.normal(keys[n], (3, 3, cin, cout), jnp.float32) * scale)
        params[f"conv{n}_b"] = jnp.zeros((cout,), jnp.float32)
        cin, cout = cout, cout * 2
    num_last = cout // 2
    scale = 1.0 / np.sqrt(float(num_last))
    params["fc_w"] = (
        jax.random.normal(keys[-1], (num_last, num_classes), jnp.float32) * scale)
    params["fc_b"] = jnp.zeros((num_classes,), jnp.float32)
    return params


def build_model_constants(params, in_channel, spatial, num_classes,
                          num_layers=3):
    """Pack per-layer (gather, tap-weights, bias) triples + padded FC."""
    consts = []
    H = W = spatial
    cin = in_channel
    for n in range(num_layers):
        G, Ho, Wo = _build_gather(H, W, k=3, stride=2, pad=1)
        w = jnp.asarray(params[f"conv{n}_w"])               # (3,3,cin,cout) HWIO
        cout = w.shape[-1]
        consts += [
            jnp.asarray(G, jnp.bfloat16),                   # (9, Ho*Wo, H*W)
            w.reshape(9, cin, cout).astype(jnp.bfloat16),   # tap-major weights
            jnp.asarray(params[f"conv{n}_b"], jnp.float32).reshape(1, cout),
        ]
        H, W, cin = Ho, Wo, cout
    c_last = cin
    ncls_pad = max(128, ((num_classes + 127) // 128) * 128)  # lane-dense slab
    wfc = jnp.zeros((c_last, ncls_pad), jnp.float32)
    wfc = wfc.at[:, :num_classes].set(jnp.asarray(params["fc_w"], jnp.float32))
    bfc = jnp.zeros((1, ncls_pad), jnp.float32)
    bfc = bfc.at[0, :num_classes].set(jnp.asarray(params["fc_b"], jnp.float32))
    consts += [wfc, bfc]
    return consts


# ------------------------------ Pallas kernel --------------------------------

def fused_cnn_kernel(*refs):
    """Whole network for ONE image per grid step.

    refs = (x, [G, W, b] * num_layers, Wfc, bfc, out)
      x   : (1, H*W, Cin)       bf16
      G   : (9, HoWo, HW)       bf16   0/1 gather (stride-2 + zero pad)
      W   : (9, Cin_l, Cout_l)  bf16   conv weights, tap-major
      b   : (1, Cout_l)         f32
      Wfc : (C_last, 128k)      f32    (num_classes padded to lane-dense 128k)
      bfc : (1, 128k)           f32
      out : (1, 1, 128k)        f32
    """
    x_ref, o_ref = refs[0], refs[-1]
    wfc_ref, bfc_ref = refs[-3], refs[-2]
    conv_refs = refs[1:-3]
    num_layers = len(conv_refs) // 3

    a = x_ref[0]                                       # (HW, Cin) bf16
    a_f32 = None
    for layer in range(num_layers):
        g_ref, w_ref, b_ref = conv_refs[3 * layer:3 * layer + 3]
        n_taps, n_out, _ = g_ref.shape
        c_out = w_ref.shape[2]
        acc = jnp.zeros((n_out, c_out), jnp.float32)
        for t in range(n_taps):                        # unrolled 9-tap conv
            patch = jnp.dot(g_ref[t], a,
                            preferred_element_type=jnp.float32)
            acc = acc + jnp.dot(patch.astype(jnp.bfloat16), w_ref[t],
                                preferred_element_type=jnp.float32)
        a_f32 = jnp.maximum(acc + b_ref[...], 0.0)     # bias + ReLU in f32
        a = a_f32.astype(jnp.bfloat16)                 # bf16 for next matmuls

    pooled = jnp.mean(a_f32, axis=0, keepdims=True)    # GAP -> (1, C_last) f32
    logits = jnp.dot(pooled, wfc_ref[...],
                     preferred_element_type=jnp.float32) + bfc_ref[...]
    o_ref[0] = logits.astype(o_ref.dtype)


# ------------------------------ Pallas wrapper --------------------------------

def _const_spec(arr):
    nd = arr.ndim
    return pl.BlockSpec(arr.shape, lambda b: (0,) * nd)


def fused_forward(x_nchw, consts, num_classes):
    N, Cin, H, W = x_nchw.shape
    # NCHW (PyTorch) -> (N, H*W, C): spatial rows, channels on lanes; bf16.
    x = jnp.transpose(x_nchw, (0, 2, 3, 1)).reshape(N, H * W, Cin)
    x = x.astype(jnp.bfloat16)

    ncls_pad = consts[-1].shape[-1]
    num_layers = (len(consts) - 2) // 3

    # Advisory cost estimate so XLA schedules the surrounding ops correctly.
    flops = 0
    for li in range(num_layers):
        taps, hw_out, hw_in = consts[3 * li].shape
        _, ci, co = consts[3 * li + 1].shape
        flops += taps * (2 * hw_out * hw_in * ci + 2 * hw_out * ci * co)
    c_last, _ = consts[-2].shape
    flops = N * (flops + 2 * c_last * ncls_pad)
    bytes_accessed = (int(np.prod(x.shape)) * 2
                      + sum(int(np.prod(c.shape)) * c.dtype.itemsize
                            for c in consts)
                      + N * ncls_pad * 4)

    grid_spec = pltpu.PrefetchScalarGridSpec(
        num_scalar_prefetch=0,
        grid=(N,),
        in_specs=[pl.BlockSpec((1, H * W, Cin), lambda b: (b, 0, 0))]
                 + [_const_spec(c) for c in consts],
        out_specs=pl.BlockSpec((1, 1, ncls_pad), lambda b: (b, 0, 0)),
    )
    out = pl.pallas_call(
        fused_cnn_kernel,
        out_shape=jax.ShapeDtypeStruct((N, 1, ncls_pad), jnp.float32),
        grid_spec=grid_spec,
        compiler_params=pltpu.CompilerParams(
            dimension_semantics=("parallel",)),
        cost_estimate=pl.CostEstimate(flops=int(flops), transcendentals=0,
                                      bytes_accessed=int(bytes_accessed)),
    )(x, *consts)
    return out.reshape(N, ncls_pad)[:, :num_classes]


@partial(jax.jit, static_argnames=("num_classes",))
def model_forward(x_nchw, consts, num_classes):
    return fused_forward(x_nchw, consts, num_classes)


# ------------------------------ reference (XLA) -------------------------------

def reference_forward(x_nchw, params, num_layers=3):
    """Pure-JAX reference of the PyTorch forward, for correctness checking."""
    x = jnp.transpose(x_nchw, (0, 2, 3, 1)).astype(jnp.float32)
    for n in range(num_layers):
        x = jax.lax.conv_general_dilated(
            x, params[f"conv{n}_w"], window_strides=(2, 2),
            padding=((1, 1), (1, 1)),
            dimension_numbers=("NHWC", "HWIO", "NHWC"),
            precision=jax.lax.Precision.HIGHEST)
        x = jnp.maximum(x + params[f"conv{n}_b"], 0.0)
    pooled = jnp.mean(x, axis=(1, 2))
    return (jnp.dot(pooled, params["fc_w"],
                    precision=jax.lax.Precision.HIGHEST) + params["fc_b"])


# --------------------------------- main ---------------------------------------

if __name__ == "__main__":
    key = jax.random.PRNGKey(0)
    k_x, k_p = jax.random.split(key)

    batch, in_channel, spatial, num_classes = 2, 4, 16, 10
    x = jax.random.normal(k_x, (batch, in_channel, spatial, spatial),
                          jnp.float32)
    params = init_params(k_p, in_channel, num_classes)
    consts = build_model_constants(params, in_channel, spatial, num_classes)

    out = model_forward(x, consts, num_classes)
    out = jax.block_until_ready(out)
    assert out.shape == (batch, num_classes), out.shape

    ref = jax.block_until_ready(reference_forward(x, params))
    err = float(jnp.max(jnp.abs(out - ref)))
    assert np.allclose(np.asarray(out), np.asarray(ref),
                       atol=1e-1, rtol=1e-1), f"max abs err {err}"

    print("KERNEL_OK")
</pallas_src>

<mosaic_0001>
module attributes {stable_mosaic.version = 11 : i64} {
  func.func @fused_cnn_kernel(%arg0: i32, %arg1: memref<1x256x4xbf16, #tpu.memory_space<vmem>>, %arg2: memref<9x64x256xbf16, #tpu.memory_space<vmem>>, %arg3: memref<9x4x32xbf16, #tpu.memory_space<vmem>>, %arg4: memref<1x32xf32, #tpu.memory_space<vmem>>, %arg5: memref<9x16x64xbf16, #tpu.memory_space<vmem>>, %arg6: memref<9x32x64xbf16, #tpu.memory_space<vmem>>, %arg7: memref<1x64xf32, #tpu.memory_space<vmem>>, %arg8: memref<9x4x16xbf16, #tpu.memory_space<vmem>>, %arg9: memref<9x64x128xbf16, #tpu.memory_space<vmem>>, %arg10: memref<1x128xf32, #tpu.memory_space<vmem>>, %arg11: memref<128x128xf32, #tpu.memory_space<vmem>>, %arg12: memref<1x128xf32, #tpu.memory_space<vmem>>, %arg13: memref<1x1x128xf32, #tpu.memory_space<vmem>>) attributes {dimension_semantics = [#tpu.dimension_semantics<parallel>], iteration_bounds = array<i64: 2>, scalar_prefetch = 0 : i64, scratch_operands = 0 : i64, tpu.core_type = #tpu.core_type<tc>, window_params = [{transform_indices = @transform_0, window_bounds = array<i64: 1, 256, 4>}, {pipeline_mode = #tpu.pipeline_mode<synchronous>, transform_indices = @transform_1, window_bounds = array<i64: 9, 64, 256>}, {pipeline_mode = #tpu.pipeline_mode<synchronous>, transform_indices = @transform_2, window_bounds = array<i64: 9, 4, 32>}, {pipeline_mode = #tpu.pipeline_mode<synchronous>, transform_indices = @transform_3, window_bounds = array<i64: 1, 32>}, {pipeline_mode = #tpu.pipeline_mode<synchronous>, transform_indices = @transform_4, window_bounds = array<i64: 9, 16, 64>}, {pipeline_mode = #tpu.pipeline_mode<synchronous>, transform_indices = @transform_5, window_bounds = array<i64: 9, 32, 64>}, {pipeline_mode = #tpu.pipeline_mode<synchronous>, transform_indices = @transform_6, window_bounds = array<i64: 1, 64>}, {pipeline_mode = #tpu.pipeline_mode<synchronous>, transform_indices = @transform_7, window_bounds = array<i64: 9, 4, 16>}, {pipeline_mode = #tpu.pipeline_mode<synchronous>, transform_indices = @transform_8, window_bounds = array<i64: 9, 64, 128>}, {pipeline_mode = #tpu.pipeline_mode<synchronous>, transform_indices = @transform_9, window_bounds = array<i64: 1, 128>}, {pipeline_mode = #tpu.pipeline_mode<synchronous>, transform_indices = @transform_10, window_bounds = array<i64: 128, 128>}, {pipeline_mode = #tpu.pipeline_mode<synchronous>, transform_indices = @transform_11, window_bounds = array<i64: 1, 128>}, {transform_indices = @transform_12, window_bounds = array<i64: 1, 1, 128>}]} {
    %c0 = arith.constant 0 : index
    %c0_0 = arith.constant 0 : index
    %c0_1 = arith.constant 0 : index
    %0 = vector.load %arg1[%c0, %c0_0, %c0_1] : memref<1x256x4xbf16, #tpu.memory_space<vmem>>, vector<1x256x4xbf16>
    %1 = vector.shape_cast %0 : vector<1x256x4xbf16> to vector<256x4xbf16>
    %cst = arith.constant 0.000000e+00 : f32
    %2 = vector.broadcast %cst : f32 to vector<64x32xf32>
    %c0_2 = arith.constant 0 : index
    %c0_3 = arith.constant 0 : index
    %c0_4 = arith.constant 0 : index
    %3 = vector.load %arg2[%c0_2, %c0_3, %c0_4] : memref<9x64x256xbf16, #tpu.memory_space<vmem>>, vector<1x64x256xbf16>
    %4 = vector.shape_cast %3 : vector<1x64x256xbf16> to vector<64x256xbf16>
    %cst_5 = arith.constant dense<0.000000e+00> : vector<64x4xf32>
    %5 = tpu.matmul %4, %1, %cst_5 {dimension_numbers = #tpu.dot_dimension_numbers<[1], [0], [0], [1], [0, 0, 1, 1], [], []>} : vector<64x256xbf16>, vector<256x4xbf16>, vector<64x4xf32> -> vector<64x4xf32>
    %6 = arith.truncf %5 : vector<64x4xf32> to vector<64x4xbf16>
    %c0_6 = arith.constant 0 : index
    %c0_7 = arith.constant 0 : index
    %c0_8 = arith.constant 0 : index
    %7 = vector.load %arg3[%c0_6, %c0_7, %c0_8] : memref<9x4x32xbf16, #tpu.memory_space<vmem>>, vector<1x4x32xbf16>
    %8 = vector.shape_cast %7 : vector<1x4x32xbf16> to vector<4x32xbf16>
    %cst_9 = arith.constant dense<0.000000e+00> : vector<64x32xf32>
    %9 = tpu.matmul %6, %8, %cst_9 {dimension_numbers = #tpu.dot_dimension_numbers<[1], [0], [0], [1], [0, 0, 1, 1], [], []>} : vector<64x4xbf16>, vector<4x32xbf16>, vector<64x32xf32> -> vector<64x32xf32>
    %10 = arith.addf %2, %9 : vector<64x32xf32>
    %c1 = arith.constant 1 : index
    %c0_10 = arith.constant 0 : index
    %c0_11 = arith.constant 0 : index
    %11 = vector.load %arg2[%c1, %c0_10, %c0_11] : memref<9x64x256xbf16, #tpu.memory_space<vmem>>, vector<1x64x256xbf16>
    %12 = vector.shape_cast %11 : vector<1x64x256xbf16> to vector<64x256xbf16>
    %cst_12 = arith.constant dense<0.000000e+00> : vector<64x4xf32>
    %13 = tpu.matmul %12, %1, %cst_12 {dimension_numbers = #tpu.dot_dimension_numbers<[1], [0], [0], [1], [0, 0, 1, 1], [], []>} : vector<64x256xbf16>, vector<256x4xbf16>, vector<64x4xf32> -> vector<64x4xf32>
    %14 = arith.truncf %13 : vector<64x4xf32> to vector<64x4xbf16>
    %c1_13 = arith.constant 1 : index
    %c0_14 = arith.constant 0 : index
    %c0_15 = arith.constant 0 : index
    %15 = vector.load %arg3[%c1_13, %c0_14, %c0_15] : memref<9x4x32xbf16, #tpu.memory_space<vmem>>, vector<1x4x32xbf16>
    %16 = vector.shape_cast %15 : vector<1x4x32xbf16> to vector<4x32xbf16>
    %cst_16 = arith.constant dense<0.000000e+00> : vector<64x32xf32>
    %17 = tpu.matmul %14, %16, %cst_16 {dimension_numbers = #tpu.dot_dimension_numbers<[1], [0], [0], [1], [0, 0, 1, 1], [], []>} : vector<64x4xbf16>, vector<4x32xbf16>, vector<64x32xf32> -> vector<64x32xf32>
    %18 = arith.addf %10, %17 : vector<64x32xf32>
    %c2 = arith.constant 2 : index
    %c0_17 = arith.constant 0 : index
    %c0_18 = arith.constant 0 : index
    %19 = vector.load %arg2[%c2, %c0_17, %c0_18] : memref<9x64x256xbf16, #tpu.memory_space<vmem>>, vector<1x64x256xbf16>
    %20 = vector.shape_cast %19 : vector<1x64x256xbf16> to vector<64x256xbf16>
    %cst_19 = arith.constant dense<0.000000e+00> : vector<64x4xf32>
    %21 = tpu.matmul %20, %1, %cst_19 {dimension_numbers = #tpu.dot_dimension_numbers<[1], [0], [0], [1], [0, 0, 1, 1], [], []>} : vector<64x256xbf16>, vector<256x4xbf16>, vector<64x4xf32> -> vector<64x4xf32>
    %22 = arith.truncf %21 : vector<64x4xf32> to vector<64x4xbf16>
    %c2_20 = arith.constant 2 : index
    %c0_21 = arith.constant 0 : index
    %c0_22 = arith.constant 0 : index
    %23 = vector.load %arg3[%c2_20, %c0_21, %c0_22] : memref<9x4x32xbf16, #tpu.memory_space<vmem>>, vector<1x4x32xbf16>
    %24 = vector.shape_cast %23 : vector<1x4x32xbf16> to vector<4x32xbf16>
    %cst_23 = arith.constant dense<0.000000e+00> : vector<64x32xf32>
    %25 = tpu.matmul %22, %24, %cst_23 {dimension_numbers = #tpu.dot_dimension_numbers<[1], [0], [0], [1], [0, 0, 1, 1], [], []>} : vector<64x4xbf16>, vector<4x32xbf16>, vector<64x32xf32> -> vector<64x32xf32>
    %26 = arith.addf %18, %25 : vector<64x32xf32>
    %c3 = arith.constant 3 : index
    %c0_24 = arith.constant 0 : index
    %c0_25 = arith.constant 0 : index
    %27 = vector.load %arg2[%c3, %c0_24, %c0_25] : memref<9x64x256xbf16, #tpu.memory_space<vmem>>, vector<1x64x256xbf16>
    %28 = vector.shape_cast %27 : vector<1x64x256xbf16> to vector<64x256xbf16>
    %cst_26 = arith.constant dense<0.000000e+00> : vector<64x4xf32>
    %29 = tpu.matmul %28, %1, %cst_26 {dimension_numbers = #tpu.dot_dimension_numbers<[1], [0], [0], [1], [0, 0, 1, 1], [], []>} : vector<64x256xbf16>, vector<256x4xbf16>, vector<64x4xf32> -> vector<64x4xf32>
    %30 = arith.truncf %29 : vector<64x4xf32> to vector<64x4xbf16>
    %c3_27 = arith.constant 3 : index
    %c0_28 = arith.constant 0 : index
    %c0_29 = arith.constant 0 : index
    %31 = vector.load %arg3[%c3_27, %c0_28, %c0_29] : memref<9x4x32xbf16, #tpu.memory_space<vmem>>, vector<1x4x32xbf16>
    %32 = vector.shape_cast %31 : vector<1x4x32xbf16> to vector<4x32xbf16>
    %cst_30 = arith.constant dense<0.000000e+00> : vector<64x32xf32>
    %33 = tpu.matmul %30, %32, %cst_30 {dimension_numbers = #tpu.dot_dimension_numbers<[1], [0], [0], [1], [0, 0, 1, 1], [], []>} : vector<64x4xbf16>, vector<4x32xbf16>, vector<64x32xf32> -> vector<64x32xf32>
    %34 = arith.addf %26, %33 : vector<64x32xf32>
    %c4 = arith.constant 4 : index
    %c0_31 = arith.constant 0 : index
    %c0_32 = arith.constant 0 : index
    %35 = vector.load %arg2[%c4, %c0_31, %c0_32] : memref<9x64x256xbf16, #tpu.memory_space<vmem>>, vector<1x64x256xbf16>
    %36 = vector.shape_cast %35 : vector<1x64x256xbf16> to vector<64x256xbf16>
    %cst_33 = arith.constant dense<0.000000e+00> : vector<64x4xf32>
    %37 = tpu.matmul %36, %1, %cst_33 {dimension_numbers = #tpu.dot_dimension_numbers<[1], [0], [0], [1], [0, 0, 1, 1], [], []>} : vector<64x256xbf16>, vector<256x4xbf16>, vector<64x4xf32> -> vector<64x4xf32>
    %38 = arith.truncf %37 : vector<64x4xf32> to vector<64x4xbf16>
    %c4_34 = arith.constant 4 : index
    %c0_35 = arith.constant 0 : index
    %c0_36 = arith.constant 0 : index
    %39 = vector.load %arg3[%c4_34, %c0_35, %c0_36] : memref<9x4x32xbf16, #tpu.memory_space<vmem>>, vector<1x4x32xbf16>
    %40 = vector.shape_cast %39 : vector<1x4x32xbf16> to vector<4x32xbf16>
    %cst_37 = arith.constant dense<0.000000e+00> : vector<64x32xf32>
    %41 = tpu.matmul %38, %40, %cst_37 {dimension_numbers = #tpu.dot_dimension_numbers<[1], [0], [0], [1], [0, 0, 1, 1], [], []>} : vector<64x4xbf16>, vector<4x32xbf16>, vector<64x32xf32> -> vector<64x32xf32>
    %42 = arith.addf %34, %41 : vector<64x32xf32>
    %c5 = arith.constant 5 : index
    %c0_38 = arith.constant 0 : index
    %c0_39 = arith.constant 0 : index
    %43 = vector.load %arg2[%c5, %c0_38, %c0_39] : memref<9x64x256xbf16, #tpu.memory_space<vmem>>, vector<1x64x256xbf16>
    %44 = vector.shape_cast %43 : vector<1x64x256xbf16> to vector<64x256xbf16>
    %cst_40 = arith.constant dense<0.000000e+00> : vector<64x4xf32>
    %45 = tpu.matmul %44, %1, %cst_40 {dimension_numbers = #tpu.dot_dimension_numbers<[1], [0], [0], [1], [0, 0, 1, 1], [], []>} : vector<64x256xbf16>, vector<256x4xbf16>, vector<64x4xf32> -> vector<64x4xf32>
    %46 = arith.truncf %45 : vector<64x4xf32> to vector<64x4xbf16>
    %c5_41 = arith.constant 5 : index
    %c0_42 = arith.constant 0 : index
    %c0_43 = arith.constant 0 : index
    %47 = vector.load %arg3[%c5_41, %c0_42, %c0_43] : memref<9x4x32xbf16, #tpu.memory_space<vmem>>, vector<1x4x32xbf16>
    %48 = vector.shape_cast %47 : vector<1x4x32xbf16> to vector<4x32xbf16>
    %cst_44 = arith.constant dense<0.000000e+00> : vector<64x32xf32>
    %49 = tpu.matmul %46, %48, %cst_44 {dimension_numbers = #tpu.dot_dimension_numbers<[1], [0], [0], [1], [0, 0, 1, 1], [], []>} : vector<64x4xbf16>, vector<4x32xbf16>, vector<64x32xf32> -> vector<64x32xf32>
    %50 = arith.addf %42, %49 : vector<64x32xf32>
    %c6 = arith.constant 6 : index
    %c0_45 = arith.constant 0 : index
    %c0_46 = arith.constant 0 : index
    %51 = vector.load %arg2[%c6, %c0_45, %c0_46] : memref<9x64x256xbf16, #tpu.memory_space<vmem>>, vector<1x64x256xbf16>
    %52 = vector.shape_cast %51 : vector<1x64x256xbf16> to vector<64x256xbf16>
    %cst_47 = arith.constant dense<0.000000e+00> : vector<64x4xf32>
    %53 = tpu.matmul %52, %1, %cst_47 {dimension_numbers = #tpu.dot_dimension_numbers<[1], [0], [0], [1], [0, 0, 1, 1], [], []>} : vector<64x256xbf16>, vector<256x4xbf16>, vector<64x4xf32> -> vector<64x4xf32>
    %54 = arith.truncf %53 : vector<64x4xf32> to vector<64x4xbf16>
    %c6_48 = arith.constant 6 : index
    %c0_49 = arith.constant 0 : index
    %c0_50 = arith.constant 0 : index
    %55 = vector.load %arg3[%c6_48, %c0_49, %c0_50] : memref<9x4x32xbf16, #tpu.memory_space<vmem>>, vector<1x4x32xbf16>
    %56 = vector.shape_cast %55 : vector<1x4x32xbf16> to vector<4x32xbf16>
    %cst_51 = arith.constant dense<0.000000e+00> : vector<64x32xf32>
    %57 = tpu.matmul %54, %56, %cst_51 {dimension_numbers = #tpu.dot_dimension_numbers<[1], [0], [0], [1], [0, 0, 1, 1], [], []>} : vector<64x4xbf16>, vector<4x32xbf16>, vector<64x32xf32> -> vector<64x32xf32>
    %58 = arith.addf %50, %57 : vector<64x32xf32>
    %c7 = arith.constant 7 : index
    %c0_52 = arith.constant 0 : index
    %c0_53 = arith.constant 0 : index
    %59 = vector.load %arg2[%c7, %c0_52, %c0_53] : memref<9x64x256xbf16, #tpu.memory_space<vmem>>, vector<1x64x256xbf16>
    %60 = vector.shape_cast %59 : vector<1x64x256xbf16> to vector<64x256xbf16>
    %cst_54 = arith.constant dense<0.000000e+00> : vector<64x4xf32>
    %61 = tpu.matmul %60, %1, %cst_54 {dimension_numbers = #tpu.dot_dimension_numbers<[1], [0], [0], [1], [0, 0, 1, 1], [], []>} : vector<64x256xbf16>, vector<256x4xbf16>, vector<64x4xf32> -> vector<64x4xf32>
    %62 = arith.truncf %61 : vector<64x4xf32> to vector<64x4xbf16>
    %c7_55 = arith.constant 7 : index
    %c0_56 = arith.constant 0 : index
    %c0_57 = arith.constant 0 : index
    %63 = vector.load %arg3[%c7_55, %c0_56, %c0_57] : memref<9x4x32xbf16, #tpu.memory_space<vmem>>, vector<1x4x32xbf16>
    %64 = vector.shape_cast %63 : vector<1x4x32xbf16> to vector<4x32xbf16>
    %cst_58 = arith.constant dense<0.000000e+00> : vector<64x32xf32>
    %65 = tpu.matmul %62, %64, %cst_58 {dimension_numbers = #tpu.dot_dimension_numbers<[1], [0], [0], [1], [0, 0, 1, 1], [], []>} : vector<64x4xbf16>, vector<4x32xbf16>, vector<64x32xf32> -> vector<64x32xf32>
    %66 = arith.addf %58, %65 : vector<64x32xf32>
    %c8 = arith.constant 8 : index
    %c0_59 = arith.constant 0 : index
    %c0_60 = arith.constant 0 : index
    %67 = vector.load %arg2[%c8, %c0_59, %c0_60] : memref<9x64x256xbf16, #tpu.memory_space<vmem>>, vector<1x64x256xbf16>
    %68 = vector.shape_cast %67 : vector<1x64x256xbf16> to vector<64x256xbf16>
    %cst_61 = arith.constant dense<0.000000e+00> : vector<64x4xf32>
    %69 = tpu.matmul %68, %1, %cst_61 {dimension_numbers = #tpu.dot_dimension_numbers<[1], [0], [0], [1], [0, 0, 1, 1], [], []>} : vector<64x256xbf16>, vector<256x4xbf16>, vector<64x4xf32> -> vector<64x4xf32>
    %70 = arith.truncf %69 : vector<64x4xf32> to vector<64x4xbf16>
    %c8_62 = arith.constant 8 : index
    %c0_63 = arith.constant 0 : index
    %c0_64 = arith.constant 0 : index
    %71 = vector.load %arg3[%c8_62, %c0_63, %c0_64] : memref<9x4x32xbf16, #tpu.memory_space<vmem>>, vector<1x4x32xbf16>
    %72 = vector.shape_cast %71 : vector<1x4x32xbf16> to vector<4x32xbf16>
    %cst_65 = arith.constant dense<0.000000e+00> : vector<64x32xf32>
    %73 = tpu.matmul %70, %72, %cst_65 {dimension_numbers = #tpu.dot_dimension_numbers<[1], [0], [0], [1], [0, 0, 1, 1], [], []>} : vector<64x4xbf16>, vector<4x32xbf16>, vector<64x32xf32> -> vector<64x32xf32>
    %74 = arith.addf %66, %73 : vector<64x32xf32>
    %c0_66 = arith.constant 0 : index
    %c0_67 = arith.constant 0 : index
    %75 = vector.load %arg4[%c0_66, %c0_67] : memref<1x32xf32, #tpu.memory_space<vmem>>, vector<1x32xf32>
    %76 = vector.broadcast %75 : vector<1x32xf32> to vector<64x32xf32>
    %77 = arith.addf %74, %76 : vector<64x32xf32>
    %cst_68 = arith.constant 0.000000e+00 : f32
    %78 = vector.broadcast %cst_68 : f32 to vector<64x32xf32>
    %79 = arith.maximumf %77, %78 : vector<64x32xf32>
    %80 = arith.truncf %79 : vector<64x32xf32> to vector<64x32xbf16>
    %cst_69 = arith.constant 0.000000e+00 : f32
    %81 = vector.broadcast %cst_69 : f32 to vector<16x64xf32>
    %c0_70 = arith.constant 0 : index
    %c0_71 = arith.constant 0 : index
    %c0_72 = arith.constant 0 : index
    %82 = vector.load %arg5[%c0_70, %c0_71, %c0_72] : memref<9x16x64xbf16, #tpu.memory_space<vmem>>, vector<1x16x64xbf16>
    %83 = vector.shape_cast %82 : vector<1x16x64xbf16> to vector<16x64xbf16>
    %cst_73 = arith.constant dense<0.000000e+00> : vector<16x32xf32>
    %84 = tpu.matmul %83, %80, %cst_73 {dimension_numbers = #tpu.dot_dimension_numbers<[1], [0], [0], [1], [0, 0, 1, 1], [], []>} : vector<16x64xbf16>, vector<64x32xbf16>, vector<16x32xf32> -> vector<16x32xf32>
    %85 = arith.truncf %84 : vector<16x32xf32> to vector<16x32xbf16>
    %c0_74 = arith.constant 0 : index
    %c0_75 = arith.constant 0 : index
    %c0_76 = arith.constant 0 : index
    %86 = vector.load %arg6[%c0_74, %c0_75, %c0_76] : memref<9x32x64xbf16, #tpu.memory_space<vmem>>, vector<1x32x64xbf16>
    %87 = vector.shape_cast %86 : vector<1x32x64xbf16> to vector<32x64xbf16>
    %cst_77 = arith.constant dense<0.000000e+00> : vector<16x64xf32>
    %88 = tpu.matmul %85, %87, %cst_77 {dimension_numbers = #tpu.dot_dimension_numbers<[1], [0], [0], [1], [0, 0, 1, 1], [], []>} : vector<16x32xbf16>, vector<32x64xbf16>, vector<16x64xf32> -> vector<16x64xf32>
    %89 = arith.addf %81, %88 : vector<16x64xf32>
    %c1_78 = arith.constant 1 : index
    %c0_79 = arith.constant 0 : index
    %c0_80 = arith.constant 0 : index
    %90 = vector.load %arg5[%c1_78, %c0_79, %c0_80] : memref<9x16x64xbf16, #tpu.memory_space<vmem>>, vector<1x16x64xbf16>
    %91 = vector.shape_cast %90 : vector<1x16x64xbf16> to vector<16x64xbf16>
    %cst_81 = arith.constant dense<0.000000e+00> : vector<16x32xf32>
    %92 = tpu.matmul %91, %80, %cst_81 {dimension_numbers = #tpu.dot_dimension_numbers<[1], [0], [0], [1], [0, 0, 1, 1], [], []>} : vector<16x64xbf16>, vector<64x32xbf16>, vector<16x32xf32> -> vector<16x32xf32>
    %93 = arith.truncf %92 : vector<16x32xf32> to vector<16x32xbf16>
    %c1_82 = arith.constant 1 : index
    %c0_83 = arith.constant 0 : index
    %c0_84 = arith.constant 0 : index
    %94 = vector.load %arg6[%c1_82, %c0_83, %c0_84] : memref<9x32x64xbf16, #tpu.memory_space<vmem>>, vector<1x32x64xbf16>
    %95 = vector.shape_cast %94 : vector<1x32x64xbf16> to vector<32x64xbf16>
    %cst_85 = arith.constant dense<0.000000e+00> : vector<16x64xf32>
    %96 = tpu.matmul %93, %95, %cst_85 {dimension_numbers = #tpu.dot_dimension_numbers<[1], [0], [0], [1], [0, 0, 1, 1], [], []>} : vector<16x32xbf16>, vector<32x64xbf16>, vector<16x64xf32> -> vector<16x64xf32>
    %97 = arith.addf %89, %96 : vector<16x64xf32>
    %c2_86 = arith.constant 2 : index
    %c0_87 = arith.constant 0 : index
    %c0_88 = arith.constant 0 : index
    %98 = vector.load %arg5[%c2_86, %c0_87, %c0_88] : memref<9x16x64xbf16, #tpu.memory_space<vmem>>, vector<1x16x64xbf16>
    %99 = vector.shape_cast %98 : vector<1x16x64xbf16> to vector<16x64xbf16>
    %cst_89 = arith.constant dense<0.000000e+00> : vector<16x32xf32>
    %100 = tpu.matmul %99, %80, %cst_89 {dimension_numbers = #tpu.dot_dimension_numbers<[1], [0], [0], [1], [0, 0, 1, 1], [], []>} : vector<16x64xbf16>, vector<64x32xbf16>, vector<16x32xf32> -> vector<16x32xf32>
    %101 = arith.truncf %100 : vector<16x32xf32> to vector<16x32xbf16>
    %c2_90 = arith.constant 2 : index
    %c0_91 = arith.constant 0 : index
    %c0_92 = arith.constant 0 : index
    %102 = vector.load %arg6[%c2_90, %c0_91, %c0_92] : memref<9x32x64xbf16, #tpu.memory_space<vmem>>, vector<1x32x64xbf16>
    %103 = vector.shape_cast %102 : vector<1x32x64xbf16> to vector<32x64xbf16>
    %cst_93 = arith.constant dense<0.000000e+00> : vector<16x64xf32>
    %104 = tpu.matmul %101, %103, %cst_93 {dimension_numbers = #tpu.dot_dimension_numbers<[1], [0], [0], [1], [0, 0, 1, 1], [], []>} : vector<16x32xbf16>, vector<32x64xbf16>, vector<16x64xf32> -> vector<16x64xf32>
    %105 = arith.addf %97, %104 : vector<16x64xf32>
    %c3_94 = arith.constant 3 : index
    %c0_95 = arith.constant 0 : index
    %c0_96 = arith.constant 0 : index
    %106 = vector.load %arg5[%c3_94, %c0_95, %c0_96] : memref<9x16x64xbf16, #tpu.memory_space<vmem>>, vector<1x16x64xbf16>
    %107 = vector.shape_cast %106 : vector<1x16x64xbf16> to vector<16x64xbf16>
    %cst_97 = arith.constant dense<0.000000e+00> : vector<16x32xf32>
    %108 = tpu.matmul %107, %80, %cst_97 {dimension_numbers = #tpu.dot_dimension_numbers<[1], [0], [0], [1], [0, 0, 1, 1], [], []>} : vector<16x64xbf16>, vector<64x32xbf16>, vector<16x32xf32> -> vector<16x32xf32>
    %109 = arith.truncf %108 : vector<16x32xf32> to vector<16x32xbf16>
    %c3_98 = arith.constant 3 : index
    %c0_99 = arith.constant 0 : index
    %c0_100 = arith.constant 0 : index
    %110 = vector.load %arg6[%c3_98, %c0_99, %c0_100] : memref<9x32x64xbf16, #tpu.memory_space<vmem>>, vector<1x32x64xbf16>
    %111 = vector.shape_cast %110 : vector<1x32x64xbf16> to vector<32x64xbf16>
    %cst_101 = arith.constant dense<0.000000e+00> : vector<16x64xf32>
    %112 = tpu.matmul %109, %111, %cst_101 {dimension_numbers = #tpu.dot_dimension_numbers<[1], [0], [0], [1], [0, 0, 1, 1], [], []>} : vector<16x32xbf16>, vector<32x64xbf16>, vector<16x64xf32> -> vector<16x64xf32>
    %113 = arith.addf %105, %112 : vector<16x64xf32>
    %c4_102 = arith.constant 4 : index
    %c0_103 = arith.constant 0 : index
    %c0_104 = arith.constant 0 : index
    %114 = vector.load %arg5[%c4_102, %c0_103, %c0_104] : memref<9x16x64xbf16, #tpu.memory_space<vmem>>, vector<1x16x64xbf16>
    %115 = vector.shape_cast %114 : vector<1x16x64xbf16> to vector<16x64xbf16>
    %cst_105 = arith.constant dense<0.000000e+00> : vector<16x32xf32>
    %116 = tpu.matmul %115, %80, %cst_105 {dimension_numbers = #tpu.dot_dimension_numbers<[1], [0], [0], [1], [0, 0, 1, 1], [], []>} : vector<16x64xbf16>, vector<64x32xbf16>, vector<16x32xf32> -> vector<16x32xf32>
    %117 = arith.truncf %116 : vector<16x32xf32> to vector<16x32xbf16>
    %c4_106 = arith.constant 4 : index
    %c0_107 = arith.constant 0 : index
    %c0_108 = arith.constant 0 : index
    %118 = vector.load %arg6[%c4_106, %c0_107, %c0_108] : memref<9x32x64xbf16, #tpu.memory_space<vmem>>, vector<1x32x64xbf16>
    %119 = vector.shape_cast %118 : vector<1x32x64xbf16> to vector<32x64xbf16>
    %cst_109 = arith.constant dense<0.000000e+00> : vector<16x64xf32>
    %120 = tpu.matmul %117, %119, %cst_109 {dimension_numbers = #tpu.dot_dimension_numbers<[1], [0], [0], [1], [0, 0, 1, 1], [], []>} : vector<16x32xbf16>, vector<32x64xbf16>, vector<16x64xf32> -> vector<16x64xf32>
    %121 = arith.addf %113, %120 : vector<16x64xf32>
    %c5_110 = arith.constant 5 : index
    %c0_111 = arith.constant 0 : index
    %c0_112 = arith.constant 0 : index
    %122 = vector.load %arg5[%c5_110, %c0_111, %c0_112] : memref<9x16x64xbf16, #tpu.memory_space<vmem>>, vector<1x16x64xbf16>
    %123 = vector.shape_cast %122 : vector<1x16x64xbf16> to vector<16x64xbf16>
    %cst_113 = arith.constant dense<0.000000e+00> : vector<16x32xf32>
    %124 = tpu.matmul %123, %80, %cst_113 {dimension_numbers = #tpu.dot_dimension_numbers<[1], [0], [0], [1], [0, 0, 1, 1], [], []>} : vector<16x64xbf16>, vector<64x32xbf16>, vector<16x32xf32> -> vector<16x32xf32>
    %125 = arith.truncf %124 : vector<16x32xf32> to vector<16x32xbf16>
    %c5_114 = arith.constant 5 : index
    %c0_115 = arith.constant 0 : index
    %c0_116 = arith.constant 0 : index
    %126 = vector.load %arg6[%c5_114, %c0_115, %c0_116] : memref<9x32x64xbf16, #tpu.memory_space<vmem>>, vector<1x32x64xbf16>
    %127 = vector.shape_cast %126 : vector<1x32x64xbf16> to vector<32x64xbf16>
    %cst_117 = arith.constant dense<0.000000e+00> : vector<16x64xf32>
    %128 = tpu.matmul %125, %127, %cst_117 {dimension_numbers = #tpu.dot_dimension_numbers<[1], [0], [0], [1], [0, 0, 1, 1], [], []>} : vector<16x32xbf16>, vector<32x64xbf16>, vector<16x64xf32> -> vector<16x64xf32>
    %129 = arith.addf %121, %128 : vector<16x64xf32>
    %c6_118 = arith.constant 6 : index
    %c0_119 = arith.constant 0 : index
    %c0_120 = arith.constant 0 : index
    %130 = vector.load %arg5[%c6_118, %c0_119, %c0_120] : memref<9x16x64xbf16, #tpu.memory_space<vmem>>, vector<1x16x64xbf16>
    %131 = vector.shape_cast %130 : vector<1x16x64xbf16> to vector<16x64xbf16>
    %cst_121 = arith.constant dense<0.000000e+00> : vector<16x32xf32>
    %132 = tpu.matmul %131, %80, %cst_121 {dimension_numbers = #tpu.dot_dimension_numbers<[1], [0], [0], [1], [0, 0, 1, 1], [], []>} : vector<16x64xbf16>, vector<64x32xbf16>, vector<16x32xf32> -> vector<16x32xf32>
    %133 = arith.truncf %132 : vector<16x32xf32> to vector<16x32xbf16>
    %c6_122 = arith.constant 6 : index
    %c0_123 = arith.constant 0 : index
    %c0_124 = arith.constant 0 : index
    %134 = vector.load %arg6[%c6_122, %c0_123, %c0_124] : memref<9x32x64xbf16, #tpu.memory_space<vmem>>, vector<1x32x64xbf16>
    %135 = vector.shape_cast %134 : vector<1x32x64xbf16> to vector<32x64xbf16>
    %cst_125 = arith.constant dense<0.000000e+00> : vector<16x64xf32>
    %136 = tpu.matmul %133, %135, %cst_125 {dimension_numbers = #tpu.dot_dimension_numbers<[1], [0], [0], [1], [0, 0, 1, 1], [], []>} : vector<16x32xbf16>, vector<32x64xbf16>, vector<16x64xf32> -> vector<16x64xf32>
    %137 = arith.addf %129, %136 : vector<16x64xf32>
    %c7_126 = arith.constant 7 : index
    %c0_127 = arith.constant 0 : index
    %c0_128 = arith.constant 0 : index
    %138 = vector.load %arg5[%c7_126, %c0_127, %c0_128] : memref<9x16x64xbf16, #tpu.memory_space<vmem>>, vector<1x16x64xbf16>
    %139 = vector.shape_cast %138 : vector<1x16x64xbf16> to vector<16x64xbf16>
    %cst_129 = arith.constant dense<0.000000e+00> : vector<16x32xf32>
    %140 = tpu.matmul %139, %80, %cst_129 {dimension_numbers = #tpu.dot_dimension_numbers<[1], [0], [0], [1], [0, 0, 1, 1], [], []>} : vector<16x64xbf16>, vector<64x32xbf16>, vector<16x32xf32> -> vector<16x32xf32>
    %141 = arith.truncf %140 : vector<16x32xf32> to vector<16x32xbf16>
    %c7_130 = arith.constant 7 : index
    %c0_131 = arith.constant 0 : index
    %c0_132 = arith.constant 0 : index
    %142 = vector.load %arg6[%c7_130, %c0_131, %c0_132] : memref<9x32x64xbf16, #tpu.memory_space<vmem>>, vector<1x32x64xbf16>
    %143 = vector.shape_cast %142 : vector<1x32x64xbf16> to vector<32x64xbf16>
    %cst_133 = arith.constant dense<0.000000e+00> : vector<16x64xf32>
    %144 = tpu.matmul %141, %143, %cst_133 {dimension_numbers = #tpu.dot_dimension_numbers<[1], [0], [0], [1], [0, 0, 1, 1], [], []>} : vector<16x32xbf16>, vector<32x64xbf16>, vector<16x64xf32> -> vector<16x64xf32>
    %145 = arith.addf %137, %144 : vector<16x64xf32>
    %c8_134 = arith.constant 8 : index
    %c0_135 = arith.constant 0 : index
    %c0_136 = arith.constant 0 : index
    %146 = vector.load %arg5[%c8_134, %c0_135, %c0_136] : memref<9x16x64xbf16, #tpu.memory_space<vmem>>, vector<1x16x64xbf16>
    %147 = vector.shape_cast %146 : vector<1x16x64xbf16> to vector<16x64xbf16>
    %cst_137 = arith.constant dense<0.000000e+00> : vector<16x32xf32>
    %148 = tpu.matmul %147, %80, %cst_137 {dimension_numbers = #tpu.dot_dimension_numbers<[1], [0], [0], [1], [0, 0, 1, 1], [], []>} : vector<16x64xbf16>, vector<64x32xbf16>, vector<16x32xf32> -> vector<16x32xf32>
    %149 = arith.truncf %148 : vector<16x32xf32> to vector<16x32xbf16>
    %c8_138 = arith.constant 8 : index
    %c0_139 = arith.constant 0 : index
    %c0_140 = arith.constant 0 : index
    %150 = vector.load %arg6[%c8_138, %c0_139, %c0_140] : memref<9x32x64xbf16, #tpu.memory_space<vmem>>, vector<1x32x64xbf16>
    %151 = vector.shape_cast %150 : vector<1x32x64xbf16> to vector<32x64xbf16>
    %cst_141 = arith.constant dense<0.000000e+00> : vector<16x64xf32>
    %152 = tpu.matmul %149, %151, %cst_141 {dimension_numbers = #tpu.dot_dimension_numbers<[1], [0], [0], [1], [0, 0, 1, 1], [], []>} : vector<16x32xbf16>, vector<32x64xbf16>, vector<16x64xf32> -> vector<16x64xf32>
    %153 = arith.addf %145, %152 : vector<16x64xf32>
    %c0_142 = arith.constant 0 : index
    %c0_143 = arith.constant 0 : index
    %154 = vector.load %arg7[%c0_142, %c0_143] : memref<1x64xf32, #tpu.memory_space<vmem>>, vector<1x64xf32>
    %155 = vector.broadcast %154 : vector<1x64xf32> to vector<16x64xf32>
    %156 = arith.addf %153, %155 : vector<16x64xf32>
    %cst_144 = arith.constant 0.000000e+00 : f32
    %157 = vector.broadcast %cst_144 : f32 to vector<16x64xf32>
    %158 = arith.maximumf %156, %157 : vector<16x64xf32>
    %159 = arith.truncf %158 : vector<16x64xf32> to vector<16x64xbf16>
    %cst_145 = arith.constant 0.000000e+00 : f32
    %160 = vector.broadcast %cst_145 : f32 to vector<4x128xf32>
    %c0_146 = arith.constant 0 : index
    %c0_147 = arith.constant 0 : index
    %c0_148 = arith.constant 0 : index
    %161 = vector.load %arg8[%c0_146, %c0_147, %c0_148] : memref<9x4x16xbf16, #tpu.memory_space<vmem>>, vector<1x4x16xbf16>
    %162 = vector.shape_cast %161 : vector<1x4x16xbf16> to vector<4x16xbf16>
    %cst_149 = arith.constant dense<0.000000e+00> : vector<4x64xf32>
    %163 = tpu.matmul %162, %159, %cst_149 {dimension_numbers = #tpu.dot_dimension_numbers<[1], [0], [0], [1], [0, 0, 1, 1], [], []>} : vector<4x16xbf16>, vector<16x64xbf16>, vector<4x64xf32> -> vector<4x64xf32>
    %164 = arith.truncf %163 : vector<4x64xf32> to vector<4x64xbf16>
    %c0_150 = arith.constant 0 : index
    %c0_151 = arith.constant 0 : index
    %c0_152 = arith.constant 0 : index
    %165 = vector.load %arg9[%c0_150, %c0_151, %c0_152] : memref<9x64x128xbf16, #tpu.memory_space<vmem>>, vector<1x64x128xbf16>
    %166 = vector.shape_cast %165 : vector<1x64x128xbf16> to vector<64x128xbf16>
    %cst_153 = arith.constant dense<0.000000e+00> : vector<4x128xf32>
    %167 = tpu.matmul %164, %166, %cst_153 {dimension_numbers = #tpu.dot_dimension_numbers<[1], [0], [0], [1], [0, 0, 1, 1], [], []>} : vector<4x64xbf16>, vector<64x128xbf16>, vector<4x128xf32> -> vector<4x128xf32>
    %168 = arith.addf %160, %167 : vector<4x128xf32>
    %c1_154 = arith.constant 1 : index
    %c0_155 = arith.constant 0 : index
    %c0_156 = arith.constant 0 : index
    %169 = vector.load %arg8[%c1_154, %c0_155, %c0_156] : memref<9x4x16xbf16, #tpu.memory_space<vmem>>, vector<1x4x16xbf16>
    %170 = vector.shape_cast %169 : vector<1x4x16xbf16> to vector<4x16xbf16>
    %cst_157 = arith.constant dense<0.000000e+00> : vector<4x64xf32>
    %171 = tpu.matmul %170, %159, %cst_157 {dimension_numbers = #tpu.dot_dimension_numbers<[1], [0], [0], [1], [0, 0, 1, 1], [], []>} : vector<4x16xbf16>, vector<16x64xbf16>, vector<4x64xf32> -> vector<4x64xf32>
    %172 = arith.truncf %171 : vector<4x64xf32> to vector<4x64xbf16>
    %c1_158 = arith.constant 1 : index
    %c0_159 = arith.constant 0 : index
    %c0_160 = arith.constant 0 : index
    %173 = vector.load %arg9[%c1_158, %c0_159, %c0_160] : memref<9x64x128xbf16, #tpu.memory_space<vmem>>, vector<1x64x128xbf16>
    %174 = vector.shape_cast %173 : vector<1x64x128xbf16> to vector<64x128xbf16>
    %cst_161 = arith.constant dense<0.000000e+00> : vector<4x128xf32>
    %175 = tpu.matmul %172, %174, %cst_161 {dimension_numbers = #tpu.dot_dimension_numbers<[1], [0], [0], [1], [0, 0, 1, 1], [], []>} : vector<4x64xbf16>, vector<64x128xbf16>, vector<4x128xf32> -> vector<4x128xf32>
    %176 = arith.addf %168, %175 : vector<4x128xf32>
    %c2_162 = arith.constant 2 : index
    %c0_163 = arith.constant 0 : index
    %c0_164 = arith.constant 0 : index
    %177 = vector.load %arg8[%c2_162, %c0_163, %c0_164] : memref<9x4x16xbf16, #tpu.memory_space<vmem>>, vector<1x4x16xbf16>
    %178 = vector.shape_cast %177 : vector<1x4x16xbf16> to vector<4x16xbf16>
    %cst_165 = arith.constant dense<0.000000e+00> : vector<4x64xf32>
    %179 = tpu.matmul %178, %159, %cst_165 {dimension_numbers = #tpu.dot_dimension_numbers<[1], [0], [0], [1], [0, 0, 1, 1], [], []>} : vector<4x16xbf16>, vector<16x64xbf16>, vector<4x64xf32> -> vector<4x64xf32>
    %180 = arith.truncf %179 : vector<4x64xf32> to vector<4x64xbf16>
    %c2_166 = arith.constant 2 : index
    %c0_167 = arith.constant 0 : index
    %c0_168 = arith.constant 0 : index
    %181 = vector.load %arg9[%c2_166, %c0_167, %c0_168] : memref<9x64x128xbf16, #tpu.memory_space<vmem>>, vector<1x64x128xbf16>
    %182 = vector.shape_cast %181 : vector<1x64x128xbf16> to vector<64x128xbf16>
    %cst_169 = arith.constant dense<0.000000e+00> : vector<4x128xf32>
    %183 = tpu.matmul %180, %182, %cst_169 {dimension_numbers = #tpu.dot_dimension_numbers<[1], [0], [0], [1], [0, 0, 1, 1], [], []>} : vector<4x64xbf16>, vector<64x128xbf16>, vector<4x128xf32> -> vector<4x128xf32>
    %184 = arith.addf %176, %183 : vector<4x128xf32>
    %c3_170 = arith.constant 3 : index
    %c0_171 = arith.constant 0 : index
    %c0_172 = arith.constant 0 : index
    %185 = vector.load %arg8[%c3_170, %c0_171, %c0_172] : memref<9x4x16xbf16, #tpu.memory_space<vmem>>, vector<1x4x16xbf16>
    %186 = vector.shape_cast %185 : vector<1x4x16xbf16> to vector<4x16xbf16>
    %cst_173 = arith.constant dense<0.000000e+00> : vector<4x64xf32>
    %187 = tpu.matmul %186, %159, %cst_173 {dimension_numbers = #tpu.dot_dimension_numbers<[1], [0], [0], [1], [0, 0, 1, 1], [], []>} : vector<4x16xbf16>, vector<16x64xbf16>, vector<4x64xf32> -> vector<4x64xf32>
    %188 = arith.truncf %187 : vector<4x64xf32> to vector<4x64xbf16>
    %c3_174 = arith.constant 3 : index
    %c0_175 = arith.constant 0 : index
    %c0_176 = arith.constant 0 : index
    %189 = vector.load %arg9[%c3_174, %c0_175, %c0_176] : memref<9x64x128xbf16, #tpu.memory_space<vmem>>, vector<1x64x128xbf16>
    %190 = vector.shape_cast %189 : vector<1x64x128xbf16> to vector<64x128xbf16>
    %cst_177 = arith.constant dense<0.000000e+00> : vector<4x128xf32>
    %191 = tpu.matmul %188, %190, %cst_177 {dimension_numbers = #tpu.dot_dimension_numbers<[1], [0], [0], [1], [0, 0, 1, 1], [], []>} : vector<4x64xbf16>, vector<64x128xbf16>, vector<4x128xf32> -> vector<4x128xf32>
    %192 = arith.addf %184, %191 : vector<4x128xf32>
    %c4_178 = arith.constant 4 : index
    %c0_179 = arith.constant 0 : index
    %c0_180 = arith.constant 0 : index
    %193 = vector.load %arg8[%c4_178, %c0_179, %c0_180] : memref<9x4x16xbf16, #tpu.memory_space<vmem>>, vector<1x4x16xbf16>
    %194 = vector.shape_cast %193 : vector<1x4x16xbf16> to vector<4x16xbf16>
    %cst_181 = arith.constant dense<0.000000e+00> : vector<4x64xf32>
    %195 = tpu.matmul %194, %159, %cst_181 {dimension_numbers = #tpu.dot_dimension_numbers<[1], [0], [0], [1], [0, 0, 1, 1], [], []>} : vector<4x16xbf16>, vector<16x64xbf16>, vector<4x64xf32> -> vector<4x64xf32>
    %196 = arith.truncf %195 : vector<4x64xf32> to vector<4x64xbf16>
    %c4_182 = arith.constant 4 : index
    %c0_183 = arith.constant 0 : index
    %c0_184 = arith.constant 0 : index
    %197 = vector.load %arg9[%c4_182, %c0_183, %c0_184] : memref<9x64x128xbf16, #tpu.memory_space<vmem>>, vector<1x64x128xbf16>
    %198 = vector.shape_cast %197 : vector<1x64x128xbf16> to vector<64x128xbf16>
    %cst_185 = arith.constant dense<0.000000e+00> : vector<4x128xf32>
    %199 = tpu.matmul %196, %198, %cst_185 {dimension_numbers = #tpu.dot_dimension_numbers<[1], [0], [0], [1], [0, 0, 1, 1], [], []>} : vector<4x64xbf16>, vector<64x128xbf16>, vector<4x128xf32> -> vector<4x128xf32>
    %200 = arith.addf %192, %199 : vector<4x128xf32>
    %c5_186 = arith.constant 5 : index
    %c0_187 = arith.constant 0 : index
    %c0_188 = arith.constant 0 : index
    %201 = vector.load %arg8[%c5_186, %c0_187, %c0_188] : memref<9x4x16xbf16, #tpu.memory_space<vmem>>, vector<1x4x16xbf16>
    %202 = vector.shape_cast %201 : vector<1x4x16xbf16> to vector<4x16xbf16>
    %cst_189 = arith.constant dense<0.000000e+00> : vector<4x64xf32>
    %203 = tpu.matmul %202, %159, %cst_189 {dimension_numbers = #tpu.dot_dimension_numbers<[1], [0], [0], [1], [0, 0, 1, 1], [], []>} : vector<4x16xbf16>, vector<16x64xbf16>, vector<4x64xf32> -> vector<4x64xf32>
    %204 = arith.truncf %203 : vector<4x64xf32> to vector<4x64xbf16>
    %c5_190 = arith.constant 5 : index
    %c0_191 = arith.constant 0 : index
    %c0_192 = arith.constant 0 : index
    %205 = vector.load %arg9[%c5_190, %c0_191, %c0_192] : memref<9x64x128xbf16, #tpu.memory_space<vmem>>, vector<1x64x128xbf16>
    %206 = vector.shape_cast %205 : vector<1x64x128xbf16> to vector<64x128xbf16>
    %cst_193 = arith.constant dense<0.000000e+00> : vector<4x128xf32>
    %207 = tpu.matmul %204, %206, %cst_193 {dimension_numbers = #tpu.dot_dimension_numbers<[1], [0], [0], [1], [0, 0, 1, 1], [], []>} : vector<4x64xbf16>, vector<64x128xbf16>, vector<4x128xf32> -> vector<4x128xf32>
    %208 = arith.addf %200, %207 : vector<4x128xf32>
    %c6_194 = arith.constant 6 : index
    %c0_195 = arith.constant 0 : index
    %c0_196 = arith.constant 0 : index
    %209 = vector.load %arg8[%c6_194, %c0_195, %c0_196] : memref<9x4x16xbf16, #tpu.memory_space<vmem>>, vector<1x4x16xbf16>
    %210 = vector.shape_cast %209 : vector<1x4x16xbf16> to vector<4x16xbf16>
    %cst_197 = arith.constant dense<0.000000e+00> : vector<4x64xf32>
    %211 = tpu.matmul %210, %159, %cst_197 {dimension_numbers = #tpu.dot_dimension_numbers<[1], [0], [0], [1], [0, 0, 1, 1], [], []>} : vector<4x16xbf16>, vector<16x64xbf16>, vector<4x64xf32> -> vector<4x64xf32>
    %212 = arith.truncf %211 : vector<4x64xf32> to vector<4x64xbf16>
    %c6_198 = arith.constant 6 : index
    %c0_199 = arith.constant 0 : index
    %c0_200 = arith.constant 0 : index
    %213 = vector.load %arg9[%c6_198, %c0_199, %c0_200] : memref<9x64x128xbf16, #tpu.memory_space<vmem>>, vector<1x64x128xbf16>
    %214 = vector.shape_cast %213 : vector<1x64x128xbf16> to vector<64x128xbf16>
    %cst_201 = arith.constant dense<0.000000e+00> : vector<4x128xf32>
    %215 = tpu.matmul %212, %214, %cst_201 {dimension_numbers = #tpu.dot_dimension_numbers<[1], [0], [0], [1], [0, 0, 1, 1], [], []>} : vector<4x64xbf16>, vector<64x128xbf16>, vector<4x128xf32> -> vector<4x128xf32>
    %216 = arith.addf %208, %215 : vector<4x128xf32>
    %c7_202 = arith.constant 7 : index
    %c0_203 = arith.constant 0 : index
    %c0_204 = arith.constant 0 : index
    %217 = vector.load %arg8[%c7_202, %c0_203, %c0_204] : memref<9x4x16xbf16, #tpu.memory_space<vmem>>, vector<1x4x16xbf16>
    %218 = vector.shape_cast %217 : vector<1x4x16xbf16> to vector<4x16xbf16>
    %cst_205 = arith.constant dense<0.000000e+00> : vector<4x64xf32>
    %219 = tpu.matmul %218, %159, %cst_205 {dimension_numbers = #tpu.dot_dimension_numbers<[1], [0], [0], [1], [0, 0, 1, 1], [], []>} : vector<4x16xbf16>, vector<16x64xbf16>, vector<4x64xf32> -> vector<4x64xf32>
    %220 = arith.truncf %219 : vector<4x64xf32> to vector<4x64xbf16>
    %c7_206 = arith.constant 7 : index
    %c0_207 = arith.constant 0 : index
    %c0_208 = arith.constant 0 : index
    %221 = vector.load %arg9[%c7_206, %c0_207, %c0_208] : memref<9x64x128xbf16, #tpu.memory_space<vmem>>, vector<1x64x128xbf16>
    %222 = vector.shape_cast %221 : vector<1x64x128xbf16> to vector<64x128xbf16>
    %cst_209 = arith.constant dense<0.000000e+00> : vector<4x128xf32>
    %223 = tpu.matmul %220, %222, %cst_209 {dimension_numbers = #tpu.dot_dimension_numbers<[1], [0], [0], [1], [0, 0, 1, 1], [], []>} : vector<4x64xbf16>, vector<64x128xbf16>, vector<4x128xf32> -> vector<4x128xf32>
    %224 = arith.addf %216, %223 : vector<4x128xf32>
    %c8_210 = arith.constant 8 : index
    %c0_211 = arith.constant 0 : index
    %c0_212 = arith.constant 0 : index
    %225 = vector.load %arg8[%c8_210, %c0_211, %c0_212] : memref<9x4x16xbf16, #tpu.memory_space<vmem>>, vector<1x4x16xbf16>
    %226 = vector.shape_cast %225 : vector<1x4x16xbf16> to vector<4x16xbf16>
    %cst_213 = arith.constant dense<0.000000e+00> : vector<4x64xf32>
    %227 = tpu.matmul %226, %159, %cst_213 {dimension_numbers = #tpu.dot_dimension_numbers<[1], [0], [0], [1], [0, 0, 1, 1], [], []>} : vector<4x16xbf16>, vector<16x64xbf16>, vector<4x64xf32> -> vector<4x64xf32>
    %228 = arith.truncf %227 : vector<4x64xf32> to vector<4x64xbf16>
    %c8_214 = arith.constant 8 : index
    %c0_215 = arith.constant 0 : index
    %c0_216 = arith.constant 0 : index
    %229 = vector.load %arg9[%c8_214, %c0_215, %c0_216] : memref<9x64x128xbf16, #tpu.memory_space<vmem>>, vector<1x64x128xbf16>
    %230 = vector.shape_cast %229 : vector<1x64x128xbf16> to vector<64x128xbf16>
    %cst_217 = arith.constant dense<0.000000e+00> : vector<4x128xf32>
    %231 = tpu.matmul %228, %230, %cst_217 {dimension_numbers = #tpu.dot_dimension_numbers<[1], [0], [0], [1], [0, 0, 1, 1], [], []>} : vector<4x64xbf16>, vector<64x128xbf16>, vector<4x128xf32> -> vector<4x128xf32>
    %232 = arith.addf %224, %231 : vector<4x128xf32>
    %c0_218 = arith.constant 0 : index
    %c0_219 = arith.constant 0 : index
    %233 = vector.load %arg10[%c0_218, %c0_219] : memref<1x128xf32, #tpu.memory_space<vmem>>, vector<1x128xf32>
    %234 = vector.broadcast %233 : vector<1x128xf32> to vector<4x128xf32>
    %235 = arith.addf %232, %234 : vector<4x128xf32>
    %cst_220 = arith.constant 0.000000e+00 : f32
    %236 = vector.broadcast %cst_220 : f32 to vector<4x128xf32>
    %237 = arith.maximumf %235, %236 : vector<4x128xf32>
    %cst_221 = arith.constant dense<0.000000e+00> : vector<128xf32>
    %238 = vector.multi_reduction <add>, %237, %cst_221 [0] : vector<4x128xf32> to vector<128xf32>
    %239 = vector.shape_cast %238 : vector<128xf32> to vector<1x128xf32>
    %cst_222 = arith.constant 4.000000e+00 : f32
    %240 = vector.broadcast %cst_222 : f32 to vector<1x128xf32>
    %241 = arith.divf %239, %240 : vector<1x128xf32>
    %c0_223 = arith.constant 0 : index
    %c0_224 = arith.constant 0 : index
    %242 = vector.load %arg11[%c0_223, %c0_224] : memref<128x128xf32, #tpu.memory_space<vmem>>, vector<128x128xf32>
    %cst_225 = arith.constant dense<0.000000e+00> : vector<1x128xf32>
    %243 = tpu.matmul %241, %242, %cst_225 {dimension_numbers = #tpu.dot_dimension_numbers<[1], [0], [0], [1], [0, 0, 1, 1], [], []>} : vector<1x128xf32>, vector<128x128xf32>, vector<1x128xf32> -> vector<1x128xf32>
    %c0_226 = arith.constant 0 : index
    %c0_227 = arith.constant 0 : index
    %244 = vector.load %arg12[%c0_226, %c0_227] : memref<1x128xf32, #tpu.memory_space<vmem>>, vector<1x128xf32>
    %245 = arith.addf %243, %244 : vector<1x128xf32>
    %c0_228 = arith.constant 0 : index
    %c0_229 = arith.constant 0 : index
    %c0_230 = arith.constant 0 : index
    %246 = vector.load %arg13[%c0_228, %c0_229, %c0_230] : memref<1x1x128xf32, #tpu.memory_space<vmem>>, vector<1x1x128xf32>
    %247 = vector.shape_cast %246 : vector<1x1x128xf32> to vector<1x128xf32>
    %248 = vector.shape_cast %245 : vector<1x128xf32> to vector<1x1x128xf32>
    tpu.vector_store %arg13[%c0_228, %c0_229, %c0_230], %248 {strides = array<i32>} : memref<1x1x128xf32, #tpu.memory_space<vmem>>, vector<1x1x128xf32>,
    return
  }
  func.func @transform_0(%arg0: i32) -> (i32, i32, i32) {
    %c0_i32 = arith.constant 0 : i32
    %c0_i32_0 = arith.constant 0 : i32
    %c0_i32_1 = arith.constant 0 : i32
    return %arg0, %c0_i32, %c0_i32_0 : i32, i32, i32
  }
  func.func @transform_1(%arg0: i32) -> (i32, i32, i32) {
    %c0_i32 = arith.constant 0 : i32
    %c0_i32_0 = arith.constant 0 : i32
    %c0_i32_1 = arith.constant 0 : i32
    %c0_i32_2 = arith.constant 0 : i32
    return %c0_i32, %c0_i32_0, %c0_i32_1 : i32, i32, i32
  }
  func.func @transform_2(%arg0: i32) -> (i32, i32, i32) {
    %c0_i32 = arith.constant 0 : i32
    %c0_i32_0 = arith.constant 0 : i32
    %c0_i32_1 = arith.constant 0 : i32
    %c0_i32_2 = arith.constant 0 : i32
    return %c0_i32, %c0_i32_0, %c0_i32_1 : i32, i32, i32
  }
  func.func @transform_3(%arg0: i32) -> (i32, i32) {
    %c0_i32 = arith.constant 0 : i32
    %c0_i32_0 = arith.constant 0 : i32
    %c0_i32_1 = arith.constant 0 : i32
    return %c0_i32, %c0_i32_0 : i32, i32
  }
  func.func @transform_4(%arg0: i32) -> (i32, i32, i32) {
    %c0_i32 = arith.constant 0 : i32
    %c0_i32_0 = arith.constant 0 : i32
    %c0_i32_1 = arith.constant 0 : i32
    %c0_i32_2 = arith.constant 0 : i32
    return %c0_i32, %c0_i32_0, %c0_i32_1 : i32, i32, i32
  }
  func.func @transform_5(%arg0: i32) -> (i32, i32, i32) {
    %c0_i32 = arith.constant 0 : i32
    %c0_i32_0 = arith.constant 0 : i32
    %c0_i32_1 = arith.constant 0 : i32
    %c0_i32_2 = arith.constant 0 : i32
    return %c0_i32, %c0_i32_0, %c0_i32_1 : i32, i32, i32
  }
  func.func @transform_6(%arg0: i32) -> (i32, i32) {
    %c0_i32 = arith.constant 0 : i32
    %c0_i32_0 = arith.constant 0 : i32
    %c0_i32_1 = arith.constant 0 : i32
    return %c0_i32, %c0_i32_0 : i32, i32
  }
  func.func @transform_7(%arg0: i32) -> (i32, i32, i32) {
    %c0_i32 = arith.constant 0 : i32
    %c0_i32_0 = arith.constant 0 : i32
    %c0_i32_1 = arith.constant 0 : i32
    %c0_i32_2 = arith.constant 0 : i32
    return %c0_i32, %c0_i32_0, %c0_i32_1 : i32, i32, i32
  }
  func.func @transform_8(%arg0: i32) -> (i32, i32, i32) {
    %c0_i32 = arith.constant 0 : i32
    %c0_i32_0 = arith.constant 0 : i32
    %c0_i32_1 = arith.constant 0 : i32
    %c0_i32_2 = arith.constant 0 : i32
    return %c0_i32, %c0_i32_0, %c0_i32_1 : i32, i32, i32
  }
  func.func @transform_9(%arg0: i32) -> (i32, i32) {
    %c0_i32 = arith.constant 0 : i32
    %c0_i32_0 = arith.constant 0 : i32
    %c0_i32_1 = arith.constant 0 : i32
    return %c0_i32, %c0_i32_0 : i32, i32
  }
  func.func @transform_10(%arg0: i32) -> (i32, i32) {
    %c0_i32 = arith.constant 0 : i32
    %c0_i32_0 = arith.constant 0 : i32
    %c0_i32_1 = arith.constant 0 : i32
    return %c0_i32, %c0_i32_0 : i32, i32
  }
  func.func @transform_11(%arg0: i32) -> (i32, i32) {
    %c0_i32 = arith.constant 0 : i32
    %c0_i32_0 = arith.constant 0 : i32
    %c0_i32_1 = arith.constant 0 : i32
    return %c0_i32, %c0_i32_0 : i32, i32
  }
  func.func @transform_12(%arg0: i32) -> (i32, i32, i32) {
    %c0_i32 = arith.constant 0 : i32
    %c0_i32_0 = arith.constant 0 : i32
    %c0_i32_1 = arith.constant 0 : i32
    return %arg0, %c0_i32, %c0_i32_0 : i32, i32, i32
  }
}

</mosaic_0001>

<llo_original>
// kernel: model_forward.1
$region0: #{model_forward.1}
  #allocation0 [shape = 'u32[]', space=smem, size = 0x4, offset = 0x4, fixed_abs, tag = 'smem constant byte address 0x4 - core index']
  #allocation1 [shape = 'u32[144,128]{1,0:T(1,128)}', space=vmem, size = 0x12000, scoped, tag = 'internal scratch']
  %s0 = inlined_call_operand.vmem [shape: bf16[2,256,4], index: 0, kind: input, shape index: {}]
  %s1 = inlined_call_operand.hbm [shape: bf16[9,64,256], index: 1, kind: input, shape index: {}]
  %s2 = inlined_call_operand.vmem [shape: bf16[9,4,32], index: 2, kind: input, shape index: {}]
  %s3 = inlined_call_operand.vmem [shape: f32[1,32], index: 3, kind: input, shape index: {}]
  %s4 = inlined_call_operand.vmem [shape: bf16[9,16,64], index: 4, kind: input, shape index: {}]
  %s5 = inlined_call_operand.vmem [shape: bf16[9,32,64], index: 5, kind: input, shape index: {}]
  %s6 = inlined_call_operand.vmem [shape: f32[1,64], index: 6, kind: input, shape index: {}]
  %s7 = inlined_call_operand.vmem [shape: bf16[9,4,16], index: 7, kind: input, shape index: {}]
  %s8 = inlined_call_operand.vmem [shape: bf16[9,64,128], index: 8, kind: input, shape index: {}]
  %s9 = inlined_call_operand.vmem [shape: f32[1,128], index: 9, kind: input, shape index: {}]
  %s10 = inlined_call_operand.hbm [shape: f32[128,128], index: 10, kind: input, shape index: {}]
  %s11 = inlined_call_operand.vmem [shape: f32[1,128], index: 11, kind: input, shape index: {}]
  %s12 = inlined_call_operand.hbm [shape: f32[2,1,128], index: 12, kind: output, shape index: {}]
  %s13 = sld [smem:[#allocation0]]
  $region89: #{model_forward.1} parent=0
    _
  %s15 = ssub.s32 1, %s13
  %s16 = scalar_select 0, %s15, %s13
  $region1: #{model_forward.1} parent=0
    #allocation2 [shape = 'u8[294912]{0}', space=vmem, size = 0x48000, scoped, tag = 'input window, operand 1, single buffered']
    #allocation3 [shape = 's32[2]{0}', space=sflag, size = 0x8, scoped, tag = 'scoped memory for model_forward.1']
    #allocation4 [shape = 's32[2]{0}', space=sflag, size = 0x8, scoped, tag = 'scoped memory for model_forward.1']
    #allocation5 [shape = 'u8[65536]{0}', space=vmem, size = 0x10000, scoped, tag = 'input window, operand 10, single buffered']
    #allocation6 [shape = 's32[1]{0}', space=sflag, size = 0x4, scoped, tag = 'scoped memory for model_forward.1']
    #allocation7 [shape = 'u8[1024]{0}', space=vmem, size = 0x400, scoped, tag = 'output window, operand 0']
    %17 = vsyncpa [#allocation3], 0
    %18 = vsyncpa [#allocation6], 0
    %19 = vsyncpa [#allocation4], 0
    %s20 = scalar_lea.sflag [#allocation4], 1
    %21 = vsyncpa %s20, 0
    loop: start=0, step=1, limit=4
    $region2: #{model_forward.1} parent=1 // loop_pre_header
      _
    $region3: #{model_forward.1} parent=1 // loop_header
      %s23 = sphi 0, %s27
      %p24 = scmp.ge.s32.totalorder %s23, 4
      %s33 = sphi 0, %s35
      %s36 = sphi 0, %s33
      %s37 = sphi 0, %s36
      %s53 = sphi 0, %s37
      %s57 = sphi 0, %s57
      %s59 = sphi 0, %s57
      %s60 = sphi 0, %s59
      %s74 = sphi 0, %s60
      %s78 = sphi 0, %s78
      %s80 = sphi 0, %s78
      %s81 = sphi 0, %s80
      %s95 = sphi 0, %s81
      %s99 = sphi 0, %s99
      %s101 = sphi 0, %s99
      %s102 = sphi 0, %s101
      %s116 = sphi 0, %s102
      %s120 = sphi 0, %s120
      %s122 = sphi 0, %s120
      %s123 = sphi 0, %s122
      %s137 = sphi 0, %s123
      %s141 = sphi 0, %s141
      %s143 = sphi 0, %s141
      %s144 = sphi 0, %s143
      %s158 = sphi 0, %s144
      %s162 = sphi 0, %s162
      %s164 = sphi 0, %s162
      %s165 = sphi 0, %s164
      %s179 = sphi 0, %s165
      %s183 = sphi 0, %s183
      %s185 = sphi 0, %s183
      %s186 = sphi 0, %s185
      %s200 = sphi 0, %s186
      %s204 = sphi 0, %s204
      %s206 = sphi 0, %s204
      %s207 = sphi 0, %s206
      %s221 = sphi 0, %s207
      %s225 = sphi 0, %s225
      %s227 = sphi 0, %s225
      %s228 = sphi 0, %s227
      %s242 = sphi 0, %s228
      %s246 = sphi 0, %s246
      %s248 = sphi 0, %s246
      %s249 = sphi 0, %s248
      %s263 = sphi 0, %s249
      %s267 = sphi 0, %s267
      %s269 = sphi 0, %s267
      %s270 = sphi 0, %s269
      %s284 = sphi 0, %s270
      %s290 = sphi 0, %s292
      %s293 = sphi 0, %s290
      %s294 = sphi 0, %s293
      %s310 = sphi 0, %s294
    $region4: #{model_forward.1} parent=1 // loop_header_branch
      %26 = sbr.rel (%p24) target = $region8
    $region5: #{model_forward.1} parent=1 // loop_body
      %s28 = ssub.s32 %s23, 1
      %s29 = ssub.s32 %s23, 2
      %s30 = sadd.s32 %s23, 1
      %s31 = ssub.s32 %s23, %s30
      %p32 = scmp.eq.s32.totalorder %s31, 0
      %s34 = sadd.s32 %s33, 1
      %s35 = scalar_select %p32, %s33, %s34
      %p38 = pneg %p32
      %p39 = scmp.eq.s32.totalorder %s23, 1
      %p40 = por %p38, %p39
      %p41 = scmp.ne.s32.totalorder %s33, %s36
      %p42 = scmp.eq.s32.totalorder %s23, 0
      %p43 = por %p41, %p42
      %p44 = scmp.ne.s32.totalorder %s33, %s36
      %p45 = scmp.eq.s32.totalorder %s28, 1
      %p46 = por %p44, %p45
      %p47 = scmp.ne.s32.totalorder %s36, %s37
      %p48 = scmp.eq.s32.totalorder %s28, 0
      %p49 = por %p47, %p48
      %p50 = scmp.ne.s32.totalorder %s36, %s37
      %p51 = scmp.eq.s32.totalorder %s29, 1
      %p52 = por %p50, %p51
      %p54 = scmp.ne.s32.totalorder %s37, %s53
      %p55 = scmp.eq.s32.totalorder %s29, 0
      %p56 = por %p54, %p55
      %s58 = sadd.s32 %s57, 1
      %p61 = scmp.eq.s32.totalorder %s23, 1
      %p62 = scmp.ne.s32.totalorder %s57, %s59
      %p63 = scmp.eq.s32.totalorder %s23, 0
      %p64 = por %p62, %p63
      %p65 = scmp.ne.s32.totalorder %s57, %s59
      %p66 = scmp.eq.s32.totalorder %s28, 1
      %p67 = por %p65, %p66
      %p68 = scmp.ne.s32.totalorder %s59, %s60
      %p69 = scmp.eq.s32.totalorder %s28, 0
      %p70 = por %p68, %p69
      %p71 = scmp.ne.s32.totalorder %s59, %s60
      %p72 = scmp.eq.s32.totalorder %s29, 1
      %p73 = por %p71, %p72
      %p75 = scmp.ne.s32.totalorder %s60, %s74
      %p76 = scmp.eq.s32.totalorder %s29, 0
      %p77 = por %p75, %p76
      %s79 = sadd.s32 %s78, 1
      %p82 = scmp.eq.s32.totalorder %s23, 1
      %p83 = scmp.ne.s32.totalorder %s78, %s80
      %p84 = scmp.eq.s32.totalorder %s23, 0
      %p85 = por %p83, %p84
      %p86 = scmp.ne.s32.totalorder %s78, %s80
      %p87 = scmp.eq.s32.totalorder %s28, 1
      %p88 = por %p86, %p87
      %p89 = scmp.ne.s32.totalorder %s80, %s81
      %p90 = scmp.eq.s32.totalorder %s28, 0
      %p91 = por %p89, %p90
      %p92 = scmp.ne.s32.totalorder %s80, %s81
      %p93 = scmp.eq.s32.totalorder %s29, 1
      %p94 = por %p92, %p93
      %p96 = scmp.ne.s32.totalorder %s81, %s95
      %p97 = scmp.eq.s32.totalorder %s29, 0
      %p98 = por %p96, %p97
      %s100 = sadd.s32 %s99, 1
      %p103 = scmp.eq.s32.totalorder %s23, 1
      %p104 = scmp.ne.s32.totalorder %s99, %s101
      %p105 = scmp.eq.s32.totalorder %s23, 0
      %p106 = por %p104, %p105
      %p107 = scmp.ne.s32.totalorder %s99, %s101
      %p108 = scmp.eq.s32.totalorder %s28, 1
      %p109 = por %p107, %p108
      %p110 = scmp.ne.s32.totalorder %s101, %s102
      %p111 = scmp.eq.s32.totalorder %s28, 0
      %p112 = por %p110, %p111
      %p113 = scmp.ne.s32.totalorder %s101, %s102
      %p114 = scmp.eq.s32.totalorder %s29, 1
      %p115 = por %p113, %p114
      %p117 = scmp.ne.s32.totalorder %s102, %s116
      %p118 = scmp.eq.s32.totalorder %s29, 0
      %p119 = por %p117, %p118
      %s121 = sadd.s32 %s120, 1
      %p124 = scmp.eq.s32.totalorder %s23, 1
      %p125 = scmp.ne.s32.totalorder %s120, %s122
      %p126 = scmp.eq.s32.totalorder %s23, 0
      %p127 = por %p125, %p126
      %p128 = scmp.ne.s32.totalorder %s120, %s122
      %p129 = scmp.eq.s32.totalorder %s28, 1
      %p130 = por %p128, %p129
      %p131 = scmp.ne.s32.totalorder %s122, %s123
      %p132 = scmp.eq.s32.totalorder %s28, 0
      %p133 = por %p131, %p132
      %p134 = scmp.ne.s32.totalorder %s122, %s123
      %p135 = scmp.eq.s32.totalorder %s29, 1
      %p136 = por %p134, %p135
      %p138 = scmp.ne.s32.totalorder %s123, %s137
      %p139 = scmp.eq.s32.totalorder %s29, 0
      %p140 = por %p138, %p139
      %s142 = sadd.s32 %s141, 1
      %p145 = scmp.eq.s32.totalorder %s23, 1
      %p146 = scmp.ne.s32.totalorder %s141, %s143
      %p147 = scmp.eq.s32.totalorder %s23, 0
      %p148 = por %p146, %p147
      %p149 = scmp.ne.s32.totalorder %s141, %s143
      %p150 = scmp.eq.s32.totalorder %s28, 1
      %p151 = por %p149, %p150
      %p152 = scmp.ne.s32.totalorder %s143, %s144
      %p153 = scmp.eq.s32.totalorder %s28, 0
      %p154 = por %p152, %p153
      %p155 = scmp.ne.s32.totalorder %s143, %s144
      %p156 = scmp.eq.s32.totalorder %s29, 1
      %p157 = por %p155, %p156
      %p159 = scmp.ne.s32.totalorder %s144, %s158
      %p160 = scmp.eq.s32.totalorder %s29, 0
      %p161 = por %p159, %p160
      %s163 = sadd.s32 %s162, 1
      %p166 = scmp.eq.s32.totalorder %s23, 1
      %p167 = scmp.ne.s32.totalorder %s162, %s164
      %p168 = scmp.eq.s32.totalorder %s23, 0
      %p169 = por %p167, %p168
      %p170 = scmp.ne.s32.totalorder %s162, %s164
      %p171 = scmp.eq.s32.totalorder %s28, 1
      %p172 = por %p170, %p171
      %p173 = scmp.ne.s32.totalorder %s164, %s165
      %p174 = scmp.eq.s32.totalorder %s28, 0
      %p175 = por %p173, %p174
      %p176 = scmp.ne.s32.totalorder %s164, %s165
      %p177 = scmp.eq.s32.totalorder %s29, 1
      %p178 = por %p176, %p177
      %p180 = scmp.ne.s32.totalorder %s165, %s179
      %p181 = scmp.eq.s32.totalorder %s29, 0
      %p182 = por %p180, %p181
      %s184 = sadd.s32 %s183, 1
      %p187 = scmp.eq.s32.totalorder %s23, 1
      %p188 = scmp.ne.s32.totalorder %s183, %s185
      %p189 = scmp.eq.s32.totalorder %s23, 0
      %p190 = por %p188, %p189
      %p191 = scmp.ne.s32.totalorder %s183, %s185
      %p192 = scmp.eq.s32.totalorder %s28, 1
      %p193 = por %p191, %p192
      %p194 = scmp.ne.s32.totalorder %s185, %s186
      %p195 = scmp.eq.s32.totalorder %s28, 0
      %p196 = por %p194, %p195
      %p197 = scmp.ne.s32.totalorder %s185, %s186
      %p198 = scmp.eq.s32.totalorder %s29, 1
      %p199 = por %p197, %p198
      %p201 = scmp.ne.s32.totalorder %s186, %s200
      %p202 = scmp.eq.s32.totalorder %s29, 0
      %p203 = por %p201, %p202
      %s205 = sadd.s32 %s204, 1
      %p208 = scmp.eq.s32.totalorder %s23, 1
      %p209 = scmp.ne.s32.totalorder %s204, %s206
      %p210 = scmp.eq.s32.totalorder %s23, 0
      %p211 = por %p209, %p210
      %p212 = scmp.ne.s32.totalorder %s204, %s206
      %p213 = scmp.eq.s32.totalorder %s28, 1
      %p214 = por %p212, %p213
      %p215 = scmp.ne.s32.totalorder %s206, %s207
      %p216 = scmp.eq.s32.totalorder %s28, 0
      %p217 = por %p215, %p216
      %p218 = scmp.ne.s32.totalorder %s206, %s207
      %p219 = scmp.eq.s32.totalorder %s29, 1
      %p220 = por %p218, %p219
      %p222 = scmp.ne.s32.totalorder %s207, %s221
      %p223 = scmp.eq.s32.totalorder %s29, 0
      %p224 = por %p222, %p223
      %s226 = sadd.s32 %s225, 1
      %p229 = scmp.eq.s32.totalorder %s23, 1
      %p230 = scmp.ne.s32.totalorder %s225, %s227
      %p231 = scmp.eq.s32.totalorder %s23, 0
      %p232 = por %p230, %p231
      %p233 = scmp.ne.s32.totalorder %s225, %s227
      %p234 = scmp.eq.s32.totalorder %s28, 1
      %p235 = por %p233, %p234
      %p236 = scmp.ne.s32.totalorder %s227, %s228
      %p237 = scmp.eq.s32.totalorder %s28, 0
      %p238 = por %p236, %p237
      %p239 = scmp.ne.s32.totalorder %s227, %s228
      %p240 = scmp.eq.s32.totalorder %s29, 1
      %p241 = por %p239, %p240
      %p243 = scmp.ne.s32.totalorder %s228, %s242
      %p244 = scmp.eq.s32.totalorder %s29, 0
      %p245 = por %p243, %p244
      %s247 = sadd.s32 %s246, 1
      %p250 = scmp.eq.s32.totalorder %s23, 1
      %p251 = scmp.ne.s32.totalorder %s246, %s248
      %p252 = scmp.eq.s32.totalorder %s23, 0
      %p253 = por %p251, %p252
      %p254 = scmp.ne.s32.totalorder %s246, %s248
      %p255 = scmp.eq.s32.totalorder %s28, 1
      %p256 = por %p254, %p255
      %p257 = scmp.ne.s32.totalorder %s248, %s249
      %p258 = scmp.eq.s32.totalorder %s28, 0
      %p259 = por %p257, %p258
      %p260 = scmp.ne.s32.totalorder %s248, %s249
      %p261 = scmp.eq.s32.totalorder %s29, 1
      %p262 = por %p260, %p261
      %p264 = scmp.ne.s32.totalorder %s249, %s263
      %p265 = scmp.eq.s32.totalorder %s29, 0
      %p266 = por %p264, %p265
      %s268 = sadd.s32 %s267, 1
      %p271 = scmp.eq.s32.totalorder %s23, 1
      %p272 = scmp.ne.s32.totalorder %s267, %s269
      %p273 = scmp.eq.s32.totalorder %s23, 0
      %p274 = por %p272, %p273
      %p275 = scmp.ne.s32.totalorder %s267, %s269
      %p276 = scmp.eq.s32.totalorder %s28, 1
      %p277 = por %p275, %p276
      %p278 = scmp.ne.s32.totalorder %s269, %s270
      %p279 = scmp.eq.s32.totalorder %s28, 0
      %p280 = por %p278, %p279
      %p281 = scmp.ne.s32.totalorder %s269, %s270
      %p282 = scmp.eq.s32.totalorder %s29, 1
      %p283 = por %p281, %p282
      %p285 = scmp.ne.s32.totalorder %s270, %s284
      %p286 = scmp.eq.s32.totalorder %s29, 0
      %p287 = por %p285, %p286
      %s288 = ssub.s32 %s23, %s30
      %p289 = scmp.eq.s32.totalorder %s288, 0
      %s291 = sadd.s32 %s290, 1
      %s292 = scalar_select %p289, %s290, %s291
      %p295 = pneg %p289
      %p296 = scmp.eq.s32.totalorder %s23, 1
      %p297 = por %p295, %p296
      %p298 = scmp.ne.s32.totalorder %s290, %s293
      %p299 = scmp.eq.s32.totalorder %s23, 0
      %p300 = por %p298, %p299
      %p301 = scmp.ne.s32.totalorder %s290, %s293
      %p302 = scmp.eq.s32.totalorder %s28, 1
      %p303 = por %p301, %p302
      %p304 = scmp.ne.s32.totalorder %s293, %s294
      %p305 = scmp.eq.s32.totalorder %s28, 0
      %p306 = por %p304, %p305
      %p307 = scmp.ne.s32.totalorder %s293, %s294
      %p308 = scmp.eq.s32.totalorder %s29, 1
      %p309 = por %p307, %p308
      %p311 = scmp.ne.s32.totalorder %s294, %s310
      %p312 = scmp.eq.s32.totalorder %s29, 0
      %p313 = por %p311, %p312
      %p314 = scmp.le.s32.totalorder 1, %s23
      %p315 = scmp.lt.s32.totalorder %s23, 3
      %p316 = pnand %p314, %p315
      %p317 = pneg %p316
      // Predicated region
      $region9: #{model_forward.1} parent=5 // pred_check
        _
      $region10: #{model_forward.1} parent=5 // pred_check_branch
        %319 = sbr.rel (%p316) target = $region12
      $region11: #{model_forward.1} parent=5 // pred_region
        %s320 = ssub.s32 %s23, 1
        // Predicated region
        $region13: #{model_forward.1} parent=11 // pred_check
          %p321 = pneg %p70
        $region14: #{model_forward.1} parent=11 // pred_check_branch
          %323 = sbr.rel (%p321) target = $region16
        $region15: #{model_forward.1} parent=11 // pred_region
          %s325 = ssub.s32 9216, 9216
          %326 = vsyncadd [#allocation3], %s325
          %s327 = sshll.u32 [#allocation2], 4
          %s328 = int_to_ptr.vmem [resolvable:$true] %s327
          %333 = dma.hbm_to_vmem [thread:$0]  %s1, 9216, %s328, [#allocation3], 128, 128, 8
        $region16: #{model_forward.1} parent=11 // pred_fallthru
          _
        // Predicated region
        $region17: #{model_forward.1} parent=11 // pred_check
          %p334 = pneg %p91
        $region18: #{model_forward.1} parent=11 // pred_check_branch
          %336 = sbr.rel (%p334) target = $region20
        $region19: #{model_forward.1} parent=11 // pred_region
          _
        $region20: #{model_forward.1} parent=11 // pred_fallthru
          _
        // Predicated region
        $region21: #{model_forward.1} parent=11 // pred_check
          %p337 = pneg %p112
        $region22: #{model_forward.1} parent=11 // pred_check_branch
          %339 = sbr.rel (%p337) target = $region24
        $region23: #{model_forward.1} parent=11 // pred_region
          _
        $region24: #{model_forward.1} parent=11 // pred_fallthru
          _
        // Predicated region
        $region25: #{model_forward.1} parent=11 // pred_check
          %p340 = pneg %p133
        $region26: #{model_forward.1} parent=11 // pred_check_branch
          %342 = sbr.rel (%p340) target = $region28
        $region27: #{model_forward.1} parent=11 // pred_region
          _
        $region28: #{model_forward.1} parent=11 // pred_fallthru
          _
        // Predicated region
        $region29: #{model_forward.1} parent=11 // pred_check
          %p343 = pneg %p154
        $region30: #{model_forward.1} parent=11 // pred_check_branch
          %345 = sbr.rel (%p343) target = $region32
        $region31: #{model_forward.1} parent=11 // pred_region
          _
        $region32: #{model_forward.1} parent=11 // pred_fallthru
          _
        // Predicated region
        $region33: #{model_forward.1} parent=11 // pred_check
          %p346 = pneg %p175
        $region34: #{model_forward.1} parent=11 // pred_check_branch
          %348 = sbr.rel (%p346) target = $region36
        $region35: #{model_forward.1} parent=11 // pred_region
          _
        $region36: #{model_forward.1} parent=11 // pred_fallthru
          _
        // Predicated region
        $region37: #{model_forward.1} parent=11 // pred_check
          %p349 = pneg %p196
        $region38: #{model_forward.1} parent=11 // pred_check_branch
          %351 = sbr.rel (%p349) target = $region40
        $region39: #{model_forward.1} parent=11 // pred_region
          _
        $region40: #{model_forward.1} parent=11 // pred_fallthru
          _
        // Predicated region
        $region41: #{model_forward.1} parent=11 // pred_check
          %p352 = pneg %p217
        $region42: #{model_forward.1} parent=11 // pred_check_branch
          %354 = sbr.rel (%p352) target = $region44
        $region43: #{model_forward.1} parent=11 // pred_region
          _
        $region44: #{model_forward.1} parent=11 // pred_fallthru
          _
        // Predicated region
        $region45: #{model_forward.1} parent=11 // pred_check
          %p355 = pneg %p238
        $region46: #{model_forward.1} parent=11 // pred_check_branch
          %357 = sbr.rel (%p355) target = $region48
        $region47: #{model_forward.1} parent=11 // pred_region
          _
        $region48: #{model_forward.1} parent=11 // pred_fallthru
          _
        // Predicated region
        $region49: #{model_forward.1} parent=11 // pred_check
          %p358 = pneg %p259
        $region50: #{model_forward.1} parent=11 // pred_check_branch
          %360 = sbr.rel (%p358) target = $region52
        $region51: #{model_forward.1} parent=11 // pred_region
          %s362 = ssub.s32 2048, 2048
          %363 = vsyncadd [#allocation6], %s362
          %s364 = sshll.u32 [#allocation5], 4
          %s365 = int_to_ptr.vmem [resolvable:$true] %s364
          %370 = dma.hbm_to_vmem [thread:$0]  %s10, 2048, %s365, [#allocation6], 128, 128, 8
        $region52: #{model_forward.1} parent=11 // pred_fallthru
          _
        // Predicated region
        $region53: #{model_forward.1} parent=11 // pred_check
          %p371 = pneg %p280
        $region54: #{model_forward.1} parent=11 // pred_check_branch
          %373 = sbr.rel (%p371) target = $region56
        $region55: #{model_forward.1} parent=11 // pred_region
          _
        $region56: #{model_forward.1} parent=11 // pred_fallthru
          _
      $region12: #{model_forward.1} parent=5 // pred_fallthru
        _
      %p374 = scmp.lt.s32.totalorder %s23, 2
      // Predicated region
      $region57: #{model_forward.1} parent=5 // pred_check
        %p375 = pneg %p374
      $region58: #{model_forward.1} parent=5 // pred_check_branch
        %377 = sbr.rel (%p375) target = $region60
      $region59: #{model_forward.1} parent=5 // pred_region
        // Predicated region
        $region61: #{model_forward.1} parent=59 // pred_check
          %p378 = pneg %p43
        $region62: #{model_forward.1} parent=59 // pred_check_branch
          %380 = sbr.rel (%p378) target = $region64
        $region63: #{model_forward.1} parent=59 // pred_region
          %p381 = scmp.lt.s32.totalorder %s23, 1
          %s382 = scalar_select %p381, %s23, 1
          %s383 = smul.addr %s382, 32
          %s384 = smul.addr %s383, 4
          %s385 = scalar_lea.vmem %s0, %s384
        $region64: #{model_forward.1} parent=59 // pred_fallthru
          _
      $region60: #{model_forward.1} parent=5 // pred_fallthru
        _
      %p386 = scmp.le.s32.totalorder 1, %s23
      %p387 = scmp.lt.s32.totalorder %s23, 3
      %p388 = pnand %p386, %p387
      %p389 = pneg %p388
      // Predicated region
      $region65: #{model_forward.1} parent=5 // pred_check
        _
      $region66: #{model_forward.1} parent=5 // pred_check_branch
        %391 = sbr.rel (%p388) target = $region68
      $region67: #{model_forward.1} parent=5 // pred_region
        %s392 = ssub.s32 %s23, 1
        // Predicated region
        $region69: #{model_forward.1} parent=67 // pred_check
          %p393 = pneg %p70
        $region70: #{model_forward.1} parent=67 // pred_check_branch
          %395 = sbr.rel (%p393) target = $region72
        $region71: #{model_forward.1} parent=67 // pred_region
          %396 = dma.done [#allocation3], 9216
        $region72: #{model_forward.1} parent=67 // pred_fallthru
          _
        // Predicated region
        $region73: #{model_forward.1} parent=67 // pred_check
          %p397 = pneg %p259
        $region74: #{model_forward.1} parent=67 // pred_check_branch
          %399 = sbr.rel (%p397) target = $region76
        $region75: #{model_forward.1} parent=67 // pred_region
          %400 = dma.done [#allocation6], 2048
        $region76: #{model_forward.1} parent=67 // pred_fallthru
          _
        %p401 = scmp.lt.s32.totalorder %s28, 1
        %s402 = scalar_select %p401, %s28, 1
        %s403 = smul.addr %s402, 32
        %s404 = smul.addr %s403, 4
        %s405 = scalar_lea.vmem %s0, %s404
        %p406 = pneg %p49
        %p407 = pneg %p46
        %p408 = pneg %p70
        %p409 = pneg %p67
        %p410 = pneg %p91
        %p411 = pneg %p88
        %p412 = pneg %p112
        %p413 = pneg %p109
        %p414 = pneg %p133
        %p415 = pneg %p130
        %p416 = pneg %p154
        %p417 = pneg %p151
        %p418 = pneg %p175
        %p419 = pneg %p172
        %p420 = pneg %p196
        %p421 = pneg %p193
        %p422 = pneg %p217
        %p423 = pneg %p214
        %p424 = pneg %p238
        %p425 = pneg %p235
        %p426 = pneg %p259
        %p427 = pneg %p256
        %p428 = pneg %p280
        %p429 = pneg %p277
        %p430 = pneg %p306
        %p431 = pneg %p303
        %s432 = sand.u32 %s293, 1
        %s433 = scalar_lea.sflag [#allocation4], %s432
        %s434 = sand.u32 %s293, 1
        %s435 = scalar_lea.vmem [#allocation7], %s434
        %p436 = scmp.lt.s32.totalorder %s28, 1
        %s437 = scalar_select %p436, %s28, 1
        %s438 = smul.addr %s437, 32
        %s439 = smul.addr %s438, 4
        %s440 = scalar_lea.vmem %s0, %s439
        %v442 = vld [vmem:[%s440] sm:$0xf]
        %v443 = vld [vmem:[%s440 + $0x4] sm:$0xf]
        %v444 = vld [vmem:[%s440 + $0x8] sm:$0xf]
        %v445 = vld [vmem:[%s440 + $0xc] sm:$0xf]
        %v446 = vld [vmem:[%s440 + $0x10] sm:$0xf]
        %v447 = vld [vmem:[%s440 + $0x14] sm:$0xf]
        %v448 = vld [vmem:[%s440 + $0x18] sm:$0xf]
        %v449 = vld [vmem:[%s440 + $0x1c] sm:$0xf]
        %v450 = vld [vmem:[%s440 + $0x20] sm:$0xf]
        %v451 = vld [vmem:[%s440 + $0x24] sm:$0xf]
        %v452 = vld [vmem:[%s440 + $0x28] sm:$0xf]
        %v453 = vld [vmem:[%s440 + $0x2c] sm:$0xf]
        %v454 = vld [vmem:[%s440 + $0x30] sm:$0xf]
        %v455 = vld [vmem:[%s440 + $0x34] sm:$0xf]
        %v456 = vld [vmem:[%s440 + $0x38] sm:$0xf]
        %v457 = vld [vmem:[%s440 + $0x3c] sm:$0xf]
        %v458 = vld [vmem:[%s440 + $0x40] sm:$0xf]
        %v459 = vld [vmem:[%s440 + $0x44] sm:$0xf]
        %v460 = vld [vmem:[%s440 + $0x48] sm:$0xf]
        %v461 = vld [vmem:[%s440 + $0x4c] sm:$0xf]
        %v462 = vld [vmem:[%s440 + $0x50] sm:$0xf]
        %v463 = vld [vmem:[%s440 + $0x54] sm:$0xf]
        %v464 = vld [vmem:[%s440 + $0x58] sm:$0xf]
        %v465 = vld [vmem:[%s440 + $0x5c] sm:$0xf]
        %v466 = vld [vmem:[%s440 + $0x60] sm:$0xf]
        %v467 = vld [vmem:[%s440 + $0x64] sm:$0xf]
        %v468 = vld [vmem:[%s440 + $0x68] sm:$0xf]
        %v469 = vld [vmem:[%s440 + $0x6c] sm:$0xf]
        %v470 = vld [vmem:[%s440 + $0x70] sm:$0xf]
        %v471 = vld [vmem:[%s440 + $0x74] sm:$0xf]
        %v472 = vld [vmem:[%s440 + $0x78] sm:$0xf]
        %v473 = vld [vmem:[%s440 + $0x7c] sm:$0xf]
        %v474 = vld [vmem:[#allocation2] sm:$0xff]
        %v475 = vld [vmem:[#allocation2 + $0x8] sm:$0xff]
        %v476 = vld [vmem:[#allocation2 + $0x10] sm:$0xff]
        %v477 = vld [vmem:[#allocation2 + $0x18] sm:$0xff]
        %v478 = vld [vmem:[#allocation2 + $0x20] sm:$0xff]
        %v479 = vld [vmem:[#allocation2 + $0x28] sm:$0xff]
        %v480 = vld [vmem:[#allocation2 + $0x30] sm:$0xff]
        %v481 = vld [vmem:[#allocation2 + $0x38] sm:$0xff]
        %v490 = vunpack.c.l.b16 %v474
        %v491 = vunpack.c.h.b16 %v474
        %v492 = vunpack.c.l.b16 %v475
        %v493 = vunpack.c.h.b16 %v475
        %v494 = vunpack.c.l.b16 %v476
        %v495 = vunpack.c.h.b16 %v476
        %v496 = vunpack.c.l.b16 %v477
        %v497 = vunpack.c.h.b16 %v477
        %v498 = vunpack.c.l.b16 %v478
        %v499 = vunpack.c.h.b16 %v478
        %v500 = vunpack.c.l.b16 %v479
        %v501 = vunpack.c.h.b16 %v479
        %v502 = vunpack.c.l.b16 %v480
        %v503 = vunpack.c.h.b16 %v480
        %v504 = vunpack.c.l.b16 %v481
        %v505 = vunpack.c.h.b16 %v481
        %v506 = vpack.c.b16 %v492, %v490
        %v507 = vpack.c.b16 %v493, %v491
        %v508 = vpack.c.b16 %v496, %v494
        %v509 = vpack.c.b16 %v497, %v495
        %v510 = vpack.c.b16 %v500, %v498
        %v511 = vpack.c.b16 %v501, %v499
        %v512 = vpack.c.b16 %v504, %v502
        %v513 = vpack.c.b16 %v505, %v503
        %v554 = vunpack.c.l.b16 %v442
        %v555 = vunpack.c.l.b16 %v443
        %v556 = vunpack.c.l.b16 %v444
        %v557 = vunpack.c.l.b16 %v445
        %v558 = vunpack.c.l.b16 %v446
        %v559 = vunpack.c.l.b16 %v447
        %v560 = vunpack.c.l.b16 %v448
        %v561 = vunpack.c.l.b16 %v449
        %v562 = vunpack.c.l.b16 %v450
        %v563 = vunpack.c.l.b16 %v451
        %v564 = vunpack.c.l.b16 %v452
        %v565 = vunpack.c.l.b16 %v453
        %v566 = vunpack.c.l.b16 %v454
        %v567 = vunpack.c.l.b16 %v455
        %v568 = vunpack.c.l.b16 %v456
        %v569 = vunpack.c.l.b16 %v457
        %v570 = vunpack.c.l.b16 %v458
        %v571 = vunpack.c.l.b16 %v459
        %v572 = vunpack.c.l.b16 %v460
        %v573 = vunpack.c.l.b16 %v461
        %v574 = vunpack.c.l.b16 %v462
        %v575 = vunpack.c.l.b16 %v463
        %v576 = vunpack.c.l.b16 %v464
        %v577 = vunpack.c.l.b16 %v465
        %v578 = vunpack.c.l.b16 %v466
        %v579 = vunpack.c.l.b16 %v467
        %v580 = vunpack.c.l.b16 %v468
        %v581 = vunpack.c.l.b16 %v469
        %v582 = vunpack.c.l.b16 %v470
        %v583 = vunpack.c.l.b16 %v471
        %v584 = vunpack.c.l.b16 %v472
        %v585 = vunpack.c.l.b16 %v473
        %v586 = vpack.c.b16 %v555, %v554
        %v587 = vpack.c.b16 %v557, %v556
        %v588 = vpack.c.b16 %v559, %v558
        %v589 = vpack.c.b16 %v561, %v560
        %v590 = vpack.c.b16 %v563, %v562
        %v591 = vpack.c.b16 %v565, %v564
        %v592 = vpack.c.b16 %v567, %v566
        %v593 = vpack.c.b16 %v569, %v568
        %v594 = vpack.c.b16 %v571, %v570
        %v595 = vpack.c.b16 %v573, %v572
        %v596 = vpack.c.b16 %v575, %v574
        %v597 = vpack.c.b16 %v577, %v576
        %v598 = vpack.c.b16 %v579, %v578
        %v599 = vpack.c.b16 %v581, %v580
        %v600 = vpack.c.b16 %v583, %v582
        %v601 = vpack.c.b16 %v585, %v584
        %618 = vmatprep.subr.bf16.mxu0 0
        %619 = vmatpush1.bf16.msra.mxu0 %v586
        %620 = vmatprep.subr.bf16.mxu0 0
        %621 = vmatpush1.bf16.msra.mxu0 %v587
        %622 = vmatprep.subr.bf16.mxu0 0
        %623 = vmatpush1.bf16.msra.mxu0 %v588
        %624 = vmatprep.subr.bf16.mxu0 0
        %625 = vmatpush1.bf16.msra.mxu0 %v589
        %626 = vmatprep.subr.bf16.mxu0 0
        %627 = vmatpush1.bf16.msra.mxu0 %v590
        %628 = vmatprep.subr.bf16.mxu0 0
        %629 = vmatpush1.bf16.msra.mxu0 %v591
        %630 = vmatprep.subr.bf16.mxu0 0
        %631 = vmatpush1.bf16.msra.mxu0 %v592
        %632 = vmatprep.subr.bf16.mxu0 0
        %633 = vmatpush1.bf16.msra.mxu0 %v593
        %634 = vmatprep.subr.bf16.mxu0 0
        %635 = vmatpush1.bf16.msra.mxu0 %v594
        %636 = vmatprep.subr.bf16.mxu0 0
        %637 = vmatpush1.bf16.msra.mxu0 %v595
        %638 = vmatprep.subr.bf16.mxu0 0
        %639 = vmatpush1.bf16.msra.mxu0 %v596
        %640 = vmatprep.subr.bf16.mxu0 0
        %641 = vmatpush1.bf16.msra.mxu0 %v597
        %642 = vmatprep.subr.bf16.mxu0 0
        %643 = vmatpush1.bf16.msra.mxu0 %v598
        %644 = vmatprep.subr.bf16.mxu0 0
        %645 = vmatpush1.bf16.msra.mxu0 %v599
        %646 = vmatprep.subr.bf16.mxu0 0
        %647 = vmatpush1.bf16.msra.mxu0 %v600
        %648 = vmatprep.subr.bf16.mxu0 0
        %649 = vmatpush1.bf16.msra.mxu0 %v601
        %650 = vmatprep.mubr.bf16.mxu0 %v507
        %651 = vmatmul.mubr.bf16.gmra.mrb[0].mxu0 %v506
        %v652 = vpop.f32.mrb[0].mxu0
        %v653 = vadd.f32 0.0, %v652
        %v654 = vpop.f32.mrb[0].mxu0
        %v655 = vpop.f32.mrb[0].mxu0
        %v656 = vadd.f32 0.0, %v655
        %v657 = vpop.f32.mrb[0].mxu0
        %658 = vmatprep.mubr.bf16.mxu0 %v509
        %659 = vmatmul.mubr.bf16.gmra.mrb[0].mxu0 %v508
        %v660 = vpop.f32.mrb[0].mxu0
        %v661 = vadd.f32 0.0, %v660
        %v662 = vpop.f32.mrb[0].mxu0
        %v663 = vpop.f32.mrb[0].mxu0
        %v664 = vadd.f32 0.0, %v663
        %v665 = vpop.f32.mrb[0].mxu0
        %666 = vmatprep.mubr.bf16.mxu0 %v511
        %667 = vmatmul.mubr.bf16.gmra.mrb[0].mxu0 %v510
        %v668 = vpop.f32.mrb[0].mxu0
        %v669 = vadd.f32 0.0, %v668
        %v670 = vpop.f32.mrb[0].mxu0
        %v671 = vpop.f32.mrb[0].mxu0
        %v672 = vadd.f32 0.0, %v671
        %v673 = vpop.f32.mrb[0].mxu0
        %674 = vmatprep.mubr.bf16.mxu0 %v513
        %675 = vmatmul.mubr.bf16.gmra.mrb[0].mxu0 %v512
        %v676 = vpop.f32.mrb[0].mxu0
        %v677 = vadd.f32 0.0, %v676
        %v678 = vpop.f32.mrb[0].mxu0
        %v679 = vpop.f32.mrb[0].mxu0
        %v680 = vadd.f32 0.0, %v679
        %v681 = vpop.f32.mrb[0].mxu0
        %682 = vdwg.mxu0
        %v683 = vpack.c.bf16 %v656, %v653
        %v684 = vpack.c.bf16 %v664, %v661
        %v685 = vpack.c.bf16 %v672, %v669
        %v686 = vpack.c.bf16 %v680, %v677
        %v687 = vld [vmem:[%s2] sm:$0x3]
        %s688 = scalar_lea.vmem [#allocation2], 64
        %v689 = vld [vmem:[%s688] sm:$0xff]
        %v690 = vld [vmem:[%s688 + $0x8] sm:$0xff]
        %v691 = vld [vmem:[%s688 + $0x10] sm:$0xff]
        %v692 = vld [vmem:[%s688 + $0x18] sm:$0xff]
        %v693 = vld [vmem:[%s688 + $0x20] sm:$0xff]
        %v694 = vld [vmem:[%s688 + $0x28] sm:$0xff]
        %v695 = vld [vmem:[%s688 + $0x30] sm:$0xff]
        %v696 = vld [vmem:[%s688 + $0x38] sm:$0xff]
        %v705 = vunpack.c.l.b16 %v689
        %v706 = vunpack.c.h.b16 %v689
        %v707 = vunpack.c.l.b16 %v690
        %v708 = vunpack.c.h.b16 %v690
        %v709 = vunpack.c.l.b16 %v691
        %v710 = vunpack.c.h.b16 %v691
        %v711 = vunpack.c.l.b16 %v692
        %v712 = vunpack.c.h.b16 %v692
        %v713 = vunpack.c.l.b16 %v693
        %v714 = vunpack.c.h.b16 %v693
        %v715 = vunpack.c.l.b16 %v694
        %v716 = vunpack.c.h.b16 %v694
        %v717 = vunpack.c.l.b16 %v695
        %v718 = vunpack.c.h.b16 %v695
        %v719 = vunpack.c.l.b16 %v696
        %v720 = vunpack.c.h.b16 %v696
        %v721 = vpack.c.b16 %v707, %v705
        %v722 = vpack.c.b16 %v708, %v706
        %v723 = vpack.c.b16 %v711, %v709
        %v724 = vpack.c.b16 %v712, %v710
        %v725 = vpack.c.b16 %v715, %v713
        %v726 = vpack.c.b16 %v716, %v714
        %v727 = vpack.c.b16 %v719, %v717
        %v728 = vpack.c.b16 %v720, %v718
        %737 = vmatprep.subr.bf16.mxu0 0
        %738 = vmatpush1.bf16.msra.mxu0 %v586
        %739 = vmatprep.subr.bf16.mxu0 0
        %740 = vmatpush1.bf16.msra.mxu0 %v587
        %741 = vmatprep.subr.bf16.mxu0 0
        %742 = vmatpush1.bf16.msra.mxu0 %v588
        %743 = vmatprep.subr.bf16.mxu0 0
        %744 = vmatpush1.bf16.msra.mxu0 %v589
        %745 = vmatprep.subr.bf16.mxu0 0
        %746 = vmatpush1.bf16.msra.mxu0 %v590
        %747 = vmatprep.subr.bf16.mxu0 0
        %748 = vmatpush1.bf16.msra.mxu0 %v591
        %749 = vmatprep.subr.bf16.mxu0 0
        %750 = vmatpush1.bf16.msra.mxu0 %v592
        %751 = vmatprep.subr.bf16.mxu0 0
        %752 = vmatpush1.bf16.msra.mxu0 %v593
        %753 = vmatprep.subr.bf16.mxu0 0
        %754 = vmatpush1.bf16.msra.mxu0 %v594
        %755 = vmatprep.subr.bf16.mxu0 0
        %756 = vmatpush1.bf16.msra.mxu0 %v595
        %757 = vmatprep.subr.bf16.mxu0 0
        %758 = vmatpush1.bf16.msra.mxu0 %v596
        %759 = vmatprep.subr.bf16.mxu0 0
        %760 = vmatpush1.bf16.msra.mxu0 %v597
        %761 = vmatprep.subr.bf16.mxu0 0
        %762 = vmatpush1.bf16.msra.mxu0 %v598
        %763 = vmatprep.subr.bf16.mxu0 0
        %764 = vmatpush1.bf16.msra.mxu0 %v599
        %765 = vmatprep.subr.bf16.mxu0 0
        %766 = vmatpush1.bf16.msra.mxu0 %v600
        %767 = vmatprep.subr.bf16.mxu0 0
        %768 = vmatpush1.bf16.msra.mxu0 %v601
        %769 = vmatprep.mubr.bf16.mxu0 %v722
        %770 = vmatmul.mubr.bf16.gmra.mrb[0].mxu0 %v721
        %v771 = vpop.f32.mrb[0].mxu0
        %v772 = vadd.f32 0.0, %v771
        %v773 = vpop.f32.mrb[0].mxu0
        %v774 = vpop.f32.mrb[0].mxu0
        %v775 = vadd.f32 0.0, %v774
        %v776 = vpop.f32.mrb[0].mxu0
        %777 = vmatprep.mubr.bf16.mxu0 %v724
        %778 = vmatmul.mubr.bf16.gmra.mrb[0].mxu0 %v723
        %v779 = vpop.f32.mrb[0].mxu0
        %v780 = vadd.f32 0.0, %v779
        %v781 = vpop.f32.mrb[0].mxu0
        %v782 = vpop.f32.mrb[0].mxu0
        %v783 = vadd.f32 0.0, %v782
        %v784 = vpop.f32.mrb[0].mxu0
        %785 = vmatprep.mubr.bf16.mxu0 %v726
        %786 = vmatmul.mubr.bf16.gmra.mrb[0].mxu0 %v725
        %v787 = vpop.f32.mrb[0].mxu0
        %v788 = vadd.f32 0.0, %v787
        %v789 = vpop.f32.mrb[0].mxu0
        %v790 = vpop.f32.mrb[0].mxu0
        %v791 = vadd.f32 0.0, %v790
        %v792 = vpop.f32.mrb[0].mxu0
        %793 = vmatprep.mubr.bf16.mxu0 %v728
        %794 = vmatmul.mubr.bf16.gmra.mrb[0].mxu0 %v727
        %v795 = vpop.f32.mrb[0].mxu0
        %v796 = vadd.f32 0.0, %v795
        %v797 = vpop.f32.mrb[0].mxu0
        %v798 = vpop.f32.mrb[0].mxu0
        %v799 = vadd.f32 0.0, %v798
        %v800 = vpop.f32.mrb[0].mxu0
        %801 = vdwg.mxu0
        %v802 = vpack.c.bf16 %v775, %v772
        %v803 = vpack.c.bf16 %v783, %v780
        %v804 = vpack.c.bf16 %v791, %v788
        %v805 = vpack.c.bf16 %v799, %v796
        %s806 = scalar_lea.vmem %s2, 2
        %v807 = vld [vmem:[%s806] sm:$0x3]
        %vm808 = vcmask 31744
        %v810 = vsel %vm808, %v802, 0
        %v813 = vsel %vm808, %v803, 0
        %v816 = vsel %vm808, %v804, 0
        %v819 = vsel %vm808, %v805, 0
        %vm821 = vcmask 1041408
        %v823 = vsel %vm821, %v807, 0
        %825 = vmatprep.subr.bf16.mxu0 0
        %826 = vmatpush1.bf16.msra.mxu0 %v823
        %827 = vmatprep.subr.bf16.mxu0 0
        %828 = vmatpush1.bf16.msra.mxu0 0
        %829 = vmatprep.subr.bf16.mxu0 0
        %830 = vmatpush1.bf16.msra.mxu0 0
        %831 = vmatprep.subr.bf16.mxu0 0
        %832 = vmatpush1.bf16.msra.mxu0 0
        %833 = vmatprep.subr.bf16.mxu0 0
        %834 = vmatpush1.bf16.msra.mxu0 0
        %835 = vmatprep.subr.bf16.mxu0 0
        %836 = vmatpush1.bf16.msra.mxu0 0
        %837 = vmatprep.subr.bf16.mxu0 0
        %838 = vmatpush1.bf16.msra.mxu0 0
        %839 = vmatprep.subr.bf16.mxu0 0
        %840 = vmatpush1.bf16.msra.mxu0 0
        %841 = vmatprep.subr.bf16.mxu0 0
        %842 = vmatpush1.bf16.msra.mxu0 0
        %843 = vmatprep.subr.bf16.mxu0 0
        %844 = vmatpush1.bf16.msra.mxu0 0
        %845 = vmatprep.subr.bf16.mxu0 0
        %846 = vmatpush1.bf16.msra.mxu0 0
        %847 = vmatprep.subr.bf16.mxu0 0
        %848 = vmatpush1.bf16.msra.mxu0 0
        %849 = vmatprep.subr.bf16.mxu0 0
        %850 = vmatpush1.bf16.msra.mxu0 0
        %851 = vmatprep.subr.bf16.mxu0 0
        %852 = vmatpush1.bf16.msra.mxu0 0
        %853 = vmatprep.subr.bf16.mxu0 0
        %854 = vmatpush1.bf16.msra.mxu0 0
        %855 = vmatprep.subr.bf16.mxu0 0
        %856 = vmatpush1.bf16.msra.mxu0 0
        %857 = vmatprep.mubr.bf16.mxu0 0
        %858 = vmatmul.mubr.bf16.gmra.mrb[0].mxu0 %v810
        %v859 = vpop.f32.mrb[0].mxu0
        %v860 = vadd.f32 0.0, %v859
        %v861 = vpop.f32.mrb[0].mxu0
        %v862 = vpop.f32.mrb[0].mxu0
        %v863 = vadd.f32 0.0, %v862
        %v864 = vpop.f32.mrb[0].mxu0
        %865 = vmatprep.mubr.bf16.mxu0 0
        %866 = vmatmul.mubr.bf16.gmra.mrb[0].mxu0 %v813
        %v867 = vpop.f32.mrb[0].mxu0
        %v868 = vadd.f32 0.0, %v867
        %v869 = vpop.f32.mrb[0].mxu0
        %v870 = vpop.f32.mrb[0].mxu0
        %v871 = vadd.f32 0.0, %v870
        %v872 = vpop.f32.mrb[0].mxu0
        %873 = vmatprep.mubr.bf16.mxu0 0
        %874 = vmatmul.mubr.bf16.gmra.mrb[0].mxu0 %v816
        %v875 = vpop.f32.mrb[0].mxu0
        %v876 = vadd.f32 0.0, %v875
        %v877 = vpop.f32.mrb[0].mxu0
        %v878 = vpop.f32.mrb[0].mxu0
        %v879 = vadd.f32 0.0, %v878
        %v880 = vpop.f32.mrb[0].mxu0
        %881 = vmatprep.mubr.bf16.mxu0 0
        %882 = vmatmul.mubr.bf16.gmra.mrb[0].mxu0 %v819
        %v883 = vpop.f32.mrb[0].mxu0
        %v884 = vadd.f32 0.0, %v883
        %v885 = vpop.f32.mrb[0].mxu0
        %v886 = vpop.f32.mrb[0].mxu0
        %v887 = vadd.f32 0.0, %v886
        %v888 = vpop.f32.mrb[0].mxu0
        %889 = vdwg.mxu0
        %v891 = vsel %vm808, %v683, 0
        %v894 = vsel %vm808, %v684, 0
        %v897 = vsel %vm808, %v685, 0
        %v900 = vsel %vm808, %v686, 0
        %v903 = vsel %vm821, %v687, 0
        %905 = vmatprep.subr.bf16.mxu0 0
        %906 = vmatpush1.bf16.msra.mxu0 %v903
        %907 = vmatprep.subr.bf16.mxu0 0
        %908 = vmatpush1.bf16.msra.mxu0 0
        %909 = vmatprep.subr.bf16.mxu0 0
        %910 = vmatpush1.bf16.msra.mxu0 0
        %911 = vmatprep.subr.bf16.mxu0 0
        %912 = vmatpush1.bf16.msra.mxu0 0
        %913 = vmatprep.subr.bf16.mxu0 0
        %914 = vmatpush1.bf16.msra.mxu0 0
        %915 = vmatprep.subr.bf16.mxu0 0
        %916 = vmatpush1.bf16.msra.mxu0 0
        %917 = vmatprep.subr.bf16.mxu0 0
        %918 = vmatpush1.bf16.msra.mxu0 0
        %919 = vmatprep.subr.bf16.mxu0 0
        %920 = vmatpush1.bf16.msra.mxu0 0
        %921 = vmatprep.subr.bf16.mxu0 0
        %922 = vmatpush1.bf16.msra.mxu0 0
        %923 = vmatprep.subr.bf16.mxu0 0
        %924 = vmatpush1.bf16.msra.mxu0 0
        %925 = vmatprep.subr.bf16.mxu0 0
        %926 = vmatpush1.bf16.msra.mxu0 0
        %927 = vmatprep.subr.bf16.mxu0 0
        %928 = vmatpush1.bf16.msra.mxu0 0
        %929 = vmatprep.subr.bf16.mxu0 0
        %930 = vmatpush1.bf16.msra.mxu0 0
        %931 = vmatprep.subr.bf16.mxu0 0
        %932 = vmatpush1.bf16.msra.mxu0 0
        %933 = vmatprep.subr.bf16.mxu0 0
        %934 = vmatpush1.bf16.msra.mxu0 0
        %935 = vmatprep.subr.bf16.mxu0 0
        %936 = vmatpush1.bf16.msra.mxu0 0
        %937 = vmatprep.mubr.bf16.mxu0 0
        %938 = vmatmul.mubr.bf16.gmra.mrb[0].mxu0 %v891
        %v939 = vpop.f32.mrb[0].mxu0
        %v940 = vadd.f32 %v860, %v939
        %v941 = vpop.f32.mrb[0].mxu0
        %v942 = vpop.f32.mrb[0].mxu0
        %v943 = vadd.f32 %v863, %v942
        %v944 = vpop.f32.mrb[0].mxu0
        %945 = vmatprep.mubr.bf16.mxu0 0
        %946 = vmatmul.mubr.bf16.gmra.mrb[0].mxu0 %v894
        %v947 = vpop.f32.mrb[0].mxu0
        %v948 = vadd.f32 %v868, %v947
        %v949 = vpop.f32.mrb[0].mxu0
        %v950 = vpop.f32.mrb[0].mxu0
        %v951 = vadd.f32 %v871, %v950
        %v952 = vpop.f32.mrb[0].mxu0
        %953 = vmatprep.mubr.bf16.mxu0 0
        %954 = vmatmul.mubr.bf16.gmra.mrb[0].mxu0 %v897
        %v955 = vpop.f32.mrb[0].mxu0
        %v956 = vadd.f32 %v876, %v955
        %v957 = vpop.f32.mrb[0].mxu0
        %v958 = vpop.f32.mrb[0].mxu0
        %v959 = vadd.f32 %v879, %v958
        %v960 = vpop.f32.mrb[0].mxu0
        %961 = vmatprep.mubr.bf16.mxu0 0
        %962 = vmatmul.mubr.bf16.gmra.mrb[0].mxu0 %v900
        %v963 = vpop.f32.mrb[0].mxu0
        %v964 = vadd.f32 %v884, %v963
        %v965 = vpop.f32.mrb[0].mxu0
        %v966 = vpop.f32.mrb[0].mxu0
        %v967 = vadd.f32 %v887, %v966
        %v968 = vpop.f32.mrb[0].mxu0
        %969 = vdwg.mxu0
        %s970 = scalar_lea.vmem [#allocation2], 128
        %v971 = vld [vmem:[%s970] sm:$0xff]
        %v972 = vld [vmem:[%s970 + $0x8] sm:$0xff]
        %v973 = vld [vmem:[%s970 + $0x10] sm:$0xff]
        %v974 = vld [vmem:[%s970 + $0x18] sm:$0xff]
        %v975 = vld [vmem:[%s970 + $0x20] sm:$0xff]
        %v976 = vld [vmem:[%s970 + $0x28] sm:$0xff]
        %v977 = vld [vmem:[%s970 + $0x30] sm:$0xff]
        %v978 = vld [vmem:[%s970 + $0x38] sm:$0xff]
        %v987 = vunpack.c.l.b16 %v971
        %v988 = vunpack.c.h.b16 %v971
        %v989 = vunpack.c.l.b16 %v972
        %v990 = vunpack.c.h.b16 %v972
        %v991 = vunpack.c.l.b16 %v973
        %v992 = vunpack.c.h.b16 %v973
        %v993 = vunpack.c.l.b16 %v974
        %v994 = vunpack.c.h.b16 %v974
        %v995 = vunpack.c.l.b16 %v975
        %v996 = vunpack.c.h.b16 %v975
        %v997 = vunpack.c.l.b16 %v976
        %v998 = vunpack.c.h.b16 %v976
        %v999 = vunpack.c.l.b16 %v977
        %v1000 = vunpack.c.h.b16 %v977
        %v1001 = vunpack.c.l.b16 %v978
        %v1002 = vunpack.c.h.b16 %v978
        %v1003 = vpack.c.b16 %v989, %v987
        %v1004 = vpack.c.b16 %v990, %v988
        %v1005 = vpack.c.b16 %v993, %v991
        %v1006 = vpack.c.b16 %v994, %v992
        %v1007 = vpack.c.b16 %v997, %v995
        %v1008 = vpack.c.b16 %v998, %v996
        %v1009 = vpack.c.b16 %v1001, %v999
        %v1010 = vpack.c.b16 %v1002, %v1000
        %1019 = vmatprep.subr.bf16.mxu0 0
        %1020 = vmatpush1.bf16.msra.mxu0 %v586
        %1021 = vmatprep.subr.bf16.mxu0 0
        %1022 = vmatpush1.bf16.msra.mxu0 %v587
        %1023 = vmatprep.subr.bf16.mxu0 0
        %1024 = vmatpush1.bf16.msra.mxu0 %v588
        %1025 = vmatprep.subr.bf16.mxu0 0
        %1026 = vmatpush1.bf16.msra.mxu0 %v589
        %1027 = vmatprep.subr.bf16.mxu0 0
        %1028 = vmatpush1.bf16.msra.mxu0 %v590
        %1029 = vmatprep.subr.bf16.mxu0 0
        %1030 = vmatpush1.bf16.msra.mxu0 %v591
        %1031 = vmatprep.subr.bf16.mxu0 0
        %1032 = vmatpush1.bf16.msra.mxu0 %v592
        %1033 = vmatprep.subr.bf16.mxu0 0
        %1034 = vmatpush1.bf16.msra.mxu0 %v593
        %1035 = vmatprep.subr.bf16.mxu0 0
        %1036 = vmatpush1.bf16.msra.mxu0 %v594
        %1037 = vmatprep.subr.bf16.mxu0 0
        %1038 = vmatpush1.bf16.msra.mxu0 %v595
        %1039 = vmatprep.subr.bf16.mxu0 0
        %1040 = vmatpush1.bf16.msra.mxu0 %v596
        %1041 = vmatprep.subr.bf16.mxu0 0
        %1042 = vmatpush1.bf16.msra.mxu0 %v597
        %1043 = vmatprep.subr.bf16.mxu0 0
        %1044 = vmatpush1.bf16.msra.mxu0 %v598
        %1045 = vmatprep.subr.bf16.mxu0 0
        %1046 = vmatpush1.bf16.msra.mxu0 %v599
        %1047 = vmatprep.subr.bf16.mxu0 0
        %1048 = vmatpush1.bf16.msra.mxu0 %v600
        %1049 = vmatprep.subr.bf16.mxu0 0
        %1050 = vmatpush1.bf16.msra.mxu0 %v601
        %1051 = vmatprep.mubr.bf16.mxu0 %v1004
        %1052 = vmatmul.mubr.bf16.gmra.mrb[0].mxu0 %v1003
        %v1053 = vpop.f32.mrb[0].mxu0
        %v1054 = vadd.f32 0.0, %v1053
        %v1055 = vpop.f32.mrb[0].mxu0
        %v1056 = vpop.f32.mrb[0].mxu0
        %v1057 = vadd.f32 0.0, %v1056
        %v1058 = vpop.f32.mrb[0].mxu0
        %1059 = vmatprep.mubr.bf16.mxu0 %v1006
        %1060 = vmatmul.mubr.bf16.gmra.mrb[0].mxu0 %v1005
        %v1061 = vpop.f32.mrb[0].mxu0
        %v1062 = vadd.f32 0.0, %v1061
        %v1063 = vpop.f32.mrb[0].mxu0
        %v1064 = vpop.f32.mrb[0].mxu0
        %v1065 = vadd.f32 0.0, %v1064
        %v1066 = vpop.f32.mrb[0].mxu0
        %1067 = vmatprep.mubr.bf16.mxu0 %v1008
        %1068 = vmatmul.mubr.bf16.gmra.mrb[0].mxu0 %v1007
        %v1069 = vpop.f32.mrb[0].mxu0
        %v1070 = vadd.f32 0.0, %v1069
        %v1071 = vpop.f32.mrb[0].mxu0
        %v1072 = vpop.f32.mrb[0].mxu0
        %v1073 = vadd.f32 0.0, %v1072
        %v1074 = vpop.f32.mrb[0].mxu0
        %1075 = vmatprep.mubr.bf16.mxu0 %v1010
        %1076 = vmatmul.mubr.bf16.gmra.mrb[0].mxu0 %v1009
        %v1077 = vpop.f32.mrb[0].mxu0
        %v1078 = vadd.f32 0.0, %v1077
        %v1079 = vpop.f32.mrb[0].mxu0
        %v1080 = vpop.f32.mrb[0].mxu0
        %v1081 = vadd.f32 0.0, %v1080
        %v1082 = vpop.f32.mrb[0].mxu0
        %1083 = vdwg.mxu0
        %v1084 = vpack.c.bf16 %v1057, %v1054
        %v1085 = vpack.c.bf16 %v1065, %v1062
        %v1086 = vpack.c.bf16 %v1073, %v1070
        %v1087 = vpack.c.bf16 %v1081, %v1078
        %s1088 = scalar_lea.vmem %s2, 4
        %v1089 = vld [vmem:[%s1088] sm:$0x3]
        %v1091 = vsel %vm808, %v1084, 0
        %v1094 = vsel %vm808, %v1085, 0
        %v1097 = vsel %vm808, %v1086, 0
        %v1100 = vsel %vm808, %v1087, 0
        %v1103 = vsel %vm821, %v1089, 0
        %1105 = vmatprep.subr.bf16.mxu0 0
        %1106 = vmatpush1.bf16.msra.mxu0 %v1103
        %1107 = vmatprep.subr.bf16.mxu0 0
        %1108 = vmatpush1.bf16.msra.mxu0 0
        %1109 = vmatprep.subr.bf16.mxu0 0
        %1110 = vmatpush1.bf16.msra.mxu0 0
        %1111 = vmatprep.subr.bf16.mxu0 0
        %1112 = vmatpush1.bf16.msra.mxu0 0
        %1113 = vmatprep.subr.bf16.mxu0 0
        %1114 = vmatpush1.bf16.msra.mxu0 0
        %1115 = vmatprep.subr.bf16.mxu0 0
        %1116 = vmatpush1.bf16.msra.mxu0 0
        %1117 = vmatprep.subr.bf16.mxu0 0
        %1118 = vmatpush1.bf16.msra.mxu0 0
        %1119 = vmatprep.subr.bf16.mxu0 0
        %1120 = vmatpush1.bf16.msra.mxu0 0
        %1121 = vmatprep.subr.bf16.mxu0 0
        %1122 = vmatpush1.bf16.msra.mxu0 0
        %1123 = vmatprep.subr.bf16.mxu0 0
        %1124 = vmatpush1.bf16.msra.mxu0 0
        %1125 = vmatprep.subr.bf16.mxu0 0
        %1126 = vmatpush1.bf16.msra.mxu0 0
        %1127 = vmatprep.subr.bf16.mxu0 0
        %1128 = vmatpush1.bf16.msra.mxu0 0
        %1129 = vmatprep.subr.bf16.mxu0 0
        %1130 = vmatpush1.bf16.msra.mxu0 0
        %1131 = vmatprep.subr.bf16.mxu0 0
        %1132 = vmatpush1.bf16.msra.mxu0 0
        %1133 = vmatprep.subr.bf16.mxu0 0
        %1134 = vmatpush1.bf16.msra.mxu0 0
        %1135 = vmatprep.subr.bf16.mxu0 0
        %1136 = vmatpush1.bf16.msra.mxu0 0
        %1137 = vmatprep.mubr.bf16.mxu0 0
        %1138 = vmatmul.mubr.bf16.gmra.mrb[0].mxu0 %v1091
        %v1139 = vpop.f32.mrb[0].mxu0
        %v1140 = vadd.f32 0.0, %v1139
        %v1141 = vpop.f32.mrb[0].mxu0
        %v1142 = vpop.f32.mrb[0].mxu0
        %v1143 = vadd.f32 0.0, %v1142
        %v1144 = vpop.f32.mrb[0].mxu0
        %1145 = vmatprep.mubr.bf16.mxu0 0
        %1146 = vmatmul.mubr.bf16.gmra.mrb[0].mxu0 %v1094
        %v1147 = vpop.f32.mrb[0].mxu0
        %v1148 = vadd.f32 0.0, %v1147
        %v1149 = vpop.f32.mrb[0].mxu0
        %v1150 = vpop.f32.mrb[0].mxu0
        %v1151 = vadd.f32 0.0, %v1150
        %v1152 = vpop.f32.mrb[0].mxu0
        %1153 = vmatprep.mubr.bf16.mxu0 0
        %1154 = vmatmul.mubr.bf16.gmra.mrb[0].mxu0 %v1097
        %v1155 = vpop.f32.mrb[0].mxu0
        %v1156 = vadd.f32 0.0, %v1155
        %v1157 = vpop.f32.mrb[0].mxu0
        %v1158 = vpop.f32.mrb[0].mxu0
        %v1159 = vadd.f32 0.0, %v1158
        %v1160 = vpop.f32.mrb[0].mxu0
        %1161 = vmatprep.mubr.bf16.mxu0 0
        %1162 = vmatmul.mubr.bf16.gmra.mrb[0].mxu0 %v1100
        %v1163 = vpop.f32.mrb[0].mxu0
        %v1164 = vadd.f32 0.0, %v1163
        %v1165 = vpop.f32.mrb[0].mxu0
        %v1166 = vpop.f32.mrb[0].mxu0
        %v1167 = vadd.f32 0.0, %v1166
        %v1168 = vpop.f32.mrb[0].mxu0
        %1169 = vdwg.mxu0
        %v1170 = vadd.f32 %v940, %v1140
        %v1171 = vadd.f32 %v943, %v1143
        %v1172 = vadd.f32 %v948, %v1148
        %v1173 = vadd.f32 %v951, %v1151
        %v1174 = vadd.f32 %v956, %v1156
        %v1175 = vadd.f32 %v959, %v1159
        %v1176 = vadd.f32 %v964, %v1164
        %v1177 = vadd.f32 %v967, %v1167
        %s1178 = scalar_lea.vmem [#allocation2], 192
        %v1179 = vld [vmem:[%s1178] sm:$0xff]
        %v1180 = vld [vmem:[%s1178 + $0x8] sm:$0xff]
        %v1181 = vld [vmem:[%s1178 + $0x10] sm:$0xff]
        %v1182 = vld [vmem:[%s1178 + $0x18] sm:$0xff]
        %v1183 = vld [vmem:[%s1178 + $0x20] sm:$0xff]
        %v1184 = vld [vmem:[%s1178 + $0x28] sm:$0xff]
        %v1185 = vld [vmem:[%s1178 + $0x30] sm:$0xff]
        %v1186 = vld [vmem:[%s1178 + $0x38] sm:$0xff]
        %v1195 = vunpack.c.l.b16 %v1179
        %v1196 = vunpack.c.h.b16 %v1179
        %v1197 = vunpack.c.l.b16 %v1180
        %v1198 = vunpack.c.h.b16 %v1180
        %v1199 = vunpack.c.l.b16 %v1181
        %v1200 = vunpack.c.h.b16 %v1181
        %v1201 = vunpack.c.l.b16 %v1182
        %v1202 = vunpack.c.h.b16 %v1182
        %v1203 = vunpack.c.l.b16 %v1183
        %v1204 = vunpack.c.h.b16 %v1183
        %v1205 = vunpack.c.l.b16 %v1184
        %v1206 = vunpack.c.h.b16 %v1184
        %v1207 = vunpack.c.l.b16 %v1185
        %v1208 = vunpack.c.h.b16 %v1185
        %v1209 = vunpack.c.l.b16 %v1186
        %v1210 = vunpack.c.h.b16 %v1186
        %v1211 = vpack.c.b16 %v1197, %v1195
        %v1212 = vpack.c.b16 %v1198, %v1196
        %v1213 = vpack.c.b16 %v1201, %v1199
        %v1214 = vpack.c.b16 %v1202, %v1200
        %v1215 = vpack.c.b16 %v1205, %v1203
        %v1216 = vpack.c.b16 %v1206, %v1204
        %v1217 = vpack.c.b16 %v1209, %v1207
        %v1218 = vpack.c.b16 %v1210, %v1208
        %1227 = vmatprep.subr.bf16.mxu0 0
        %1228 = vmatpush1.bf16.msra.mxu0 %v586
        %1229 = vmatprep.subr.bf16.mxu0 0
        %1230 = vmatpush1.bf16.msra.mxu0 %v587
        %1231 = vmatprep.subr.bf16.mxu0 0
        %1232 = vmatpush1.bf16.msra.mxu0 %v588
        %1233 = vmatprep.subr.bf16.mxu0 0
        %1234 = vmatpush1.bf16.msra.mxu0 %v589
        %1235 = vmatprep.subr.bf16.mxu0 0
        %1236 = vmatpush1.bf16.msra.mxu0 %v590
        %1237 = vmatprep.subr.bf16.mxu0 0
        %1238 = vmatpush1.bf16.msra.mxu0 %v591
        %1239 = vmatprep.subr.bf16.mxu0 0
        %1240 = vmatpush1.bf16.msra.mxu0 %v592
        %1241 = vmatprep.subr.bf16.mxu0 0
        %1242 = vmatpush1.bf16.msra.mxu0 %v593
        %1243 = vmatprep.subr.bf16.mxu0 0
        %1244 = vmatpush1.bf16.msra.mxu0 %v594
        %1245 = vmatprep.subr.bf16.mxu0 0
        %1246 = vmatpush1.bf16.msra.mxu0 %v595
        %1247 = vmatprep.subr.bf16.mxu0 0
        %1248 = vmatpush1.bf16.msra.mxu0 %v596
        %1249 = vmatprep.subr.bf16.mxu0 0
        %1250 = vmatpush1.bf16.msra.mxu0 %v597
        %1251 = vmatprep.subr.bf16.mxu0 0
        %1252 = vmatpush1.bf16.msra.mxu0 %v598
        %1253 = vmatprep.subr.bf16.mxu0 0
        %1254 = vmatpush1.bf16.msra.mxu0 %v599
        %1255 = vmatprep.subr.bf16.mxu0 0
        %1256 = vmatpush1.bf16.msra.mxu0 %v600
        %1257 = vmatprep.subr.bf16.mxu0 0
        %1258 = vmatpush1.bf16.msra.mxu0 %v601
        %1259 = vmatprep.mubr.bf16.mxu0 %v1212
        %1260 = vmatmul.mubr.bf16.gmra.mrb[0].mxu0 %v1211
        %v1261 = vpop.f32.mrb[0].mxu0
        %v1262 = vadd.f32 0.0, %v1261
        %v1263 = vpop.f32.mrb[0].mxu0
        %v1264 = vpop.f32.mrb[0].mxu0
        %v1265 = vadd.f32 0.0, %v1264
        %v1266 = vpop.f32.mrb[0].mxu0
        %1267 = vmatprep.mubr.bf16.mxu0 %v1214
        %1268 = vmatmul.mubr.bf16.gmra.mrb[0].mxu0 %v1213
        %v1269 = vpop.f32.mrb[0].mxu0
        %v1270 = vadd.f32 0.0, %v1269
        %v1271 = vpop.f32.mrb[0].mxu0
        %v1272 = vpop.f32.mrb[0].mxu0
        %v1273 = vadd.f32 0.0, %v1272
        %v1274 = vpop.f32.mrb[0].mxu0
        %1275 = vmatprep.mubr.bf16.mxu0 %v1216
        %1276 = vmatmul.mubr.bf16.gmra.mrb[0].mxu0 %v1215
        %v1277 = vpop.f32.mrb[0].mxu0
        %v1278 = vadd.f32 0.0, %v1277
        %v1279 = vpop.f32.mrb[0].mxu0
        %v1280 = vpop.f32.mrb[0].mxu0
        %v1281 = vadd.f32 0.0, %v1280
        %v1282 = vpop.f32.mrb[0].mxu0
        %1283 = vmatprep.mubr.bf16.mxu0 %v1218
        %1284 = vmatmul.mubr.bf16.gmra.mrb[0].mxu0 %v1217
        %v1285 = vpop.f32.mrb[0].mxu0
        %v1286 = vadd.f32 0.0, %v1285
        %v1287 = vpop.f32.mrb[0].mxu0
        %v1288 = vpop.f32.mrb[0].mxu0
        %v1289 = vadd.f32 0.0, %v1288
        %v1290 = vpop.f32.mrb[0].mxu0
        %1291 = vdwg.mxu0
        %v1292 = vpack.c.bf16 %v1265, %v1262
        %v1293 = vpack.c.bf16 %v1273, %v1270
        %v1294 = vpack.c.bf16 %v1281, %v1278
        %v1295 = vpack.c.bf16 %v1289, %v1286
        %s1296 = scalar_lea.vmem %s2, 6
        %v1297 = vld [vmem:[%s1296] sm:$0x3]
        %v1299 = vsel %vm808, %v1292, 0
        %v1302 = vsel %vm808, %v1293, 0
        %v1305 = vsel %vm808, %v1294, 0
        %v1308 = vsel %vm808, %v1295, 0
        %v1311 = vsel %vm821, %v1297, 0
        %1313 = vmatprep.subr.bf16.mxu0 0
        %1314 = vmatpush1.bf16.msra.mxu0 %v1311
        %1315 = vmatprep.subr.bf16.mxu0 0
        %1316 = vmatpush1.bf16.msra.mxu0 0
        %1317 = vmatprep.subr.bf16.mxu0 0
        %1318 = vmatpush1.bf16.msra.mxu0 0
        %1319 = vmatprep.subr.bf16.mxu0 0
        %1320 = vmatpush1.bf16.msra.mxu0 0
        %1321 = vmatprep.subr.bf16.mxu0 0
        %1322 = vmatpush1.bf16.msra.mxu0 0
        %1323 = vmatprep.subr.bf16.mxu0 0
        %1324 = vmatpush1.bf16.msra.mxu0 0
        %1325 = vmatprep.subr.bf16.mxu0 0
        %1326 = vmatpush1.bf16.msra.mxu0 0
        %1327 = vmatprep.subr.bf16.mxu0 0
        %1328 = vmatpush1.bf16.msra.mxu0 0
        %1329 = vmatprep.subr.bf16.mxu0 0
        %1330 = vmatpush1.bf16.msra.mxu0 0
        %1331 = vmatprep.subr.bf16.mxu0 0
        %1332 = vmatpush1.bf16.msra.mxu0 0
        %1333 = vmatprep.subr.bf16.mxu0 0
        %1334 = vmatpush1.bf16.msra.mxu0 0
        %1335 = vmatprep.subr.bf16.mxu0 0
        %1336 = vmatpush1.bf16.msra.mxu0 0
        %1337 = vmatprep.subr.bf16.mxu0 0
        %1338 = vmatpush1.bf16.msra.mxu0 0
        %1339 = vmatprep.subr.bf16.mxu0 0
        %1340 = vmatpush1.bf16.msra.mxu0 0
        %1341 = vmatprep.subr.bf16.mxu0 0
        %1342 = vmatpush1.bf16.msra.mxu0 0
        %1343 = vmatprep.subr.bf16.mxu0 0
        %1344 = vmatpush1.bf16.msra.mxu0 0
        %1345 = vmatprep.mubr.bf16.mxu0 0
        %1346 = vmatmul.mubr.bf16.gmra.mrb[0].mxu0 %v1299
        %v1347 = vpop.f32.mrb[0].mxu0
        %v1348 = vadd.f32 0.0, %v1347
        %v1349 = vpop.f32.mrb[0].mxu0
        %v1350 = vpop.f32.mrb[0].mxu0
        %v1351 = vadd.f32 0.0, %v1350
        %v1352 = vpop.f32.mrb[0].mxu0
        %1353 = vmatprep.mubr.bf16.mxu0 0
        %1354 = vmatmul.mubr.bf16.gmra.mrb[0].mxu0 %v1302
        %v1355 = vpop.f32.mrb[0].mxu0
        %v1356 = vadd.f32 0.0, %v1355
        %v1357 = vpop.f32.mrb[0].mxu0
        %v1358 = vpop.f32.mrb[0].mxu0
        %v1359 = vadd.f32 0.0, %v1358
        %v1360 = vpop.f32.mrb[0].mxu0
        %1361 = vmatprep.mubr.bf16.mxu0 0
        %1362 = vmatmul.mubr.bf16.gmra.mrb[0].mxu0 %v1305
        %v1363 = vpop.f32.mrb[0].mxu0
        %v1364 = vadd.f32 0.0, %v1363
        %v1365 = vpop.f32.mrb[0].mxu0
        %v1366 = vpop.f32.mrb[0].mxu0
        %v1367 = vadd.f32 0.0, %v1366
        %v1368 = vpop.f32.mrb[0].mxu0
        %1369 = vmatprep.mubr.bf16.mxu0 0
        %1370 = vmatmul.mubr.bf16.gmra.mrb[0].mxu0 %v1308
        %v1371 = vpop.f32.mrb[0].mxu0
        %v1372 = vadd.f32 0.0, %v1371
        %v1373 = vpop.f32.mrb[0].mxu0
        %v1374 = vpop.f32.mrb[0].mxu0
        %v1375 = vadd.f32 0.0, %v1374
        %v1376 = vpop.f32.mrb[0].mxu0
        %1377 = vdwg.mxu0
        %v1378 = vadd.f32 %v1170, %v1348
        %v1379 = vadd.f32 %v1171, %v1351
        %v1380 = vadd.f32 %v1172, %v1356
        %v1381 = vadd.f32 %v1173, %v1359
        %v1382 = vadd.f32 %v1174, %v1364
        %v1383 = vadd.f32 %v1175, %v1367
        %v1384 = vadd.f32 %v1176, %v1372
        %v1385 = vadd.f32 %v1177, %v1375
        %s1386 = scalar_lea.vmem [#allocation2], 256
        %v1387 = vld [vmem:[%s1386] sm:$0xff]
        %v1388 = vld [vmem:[%s1386 + $0x8] sm:$0xff]
        %v1389 = vld [vmem:[%s1386 + $0x10] sm:$0xff]
        %v1390 = vld [vmem:[%s1386 + $0x18] sm:$0xff]
        %v1391 = vld [vmem:[%s1386 + $0x20] sm:$0xff]
        %v1392 = vld [vmem:[%s1386 + $0x28] sm:$0xff]
        %v1393 = vld [vmem:[%s1386 + $0x30] sm:$0xff]
        %v1394 = vld [vmem:[%s1386 + $0x38] sm:$0xff]
        %v1403 = vunpack.c.l.b16 %v1387
        %v1404 = vunpack.c.h.b16 %v1387
        %v1405 = vunpack.c.l.b16 %v1388
        %v1406 = vunpack.c.h.b16 %v1388
        %v1407 = vunpack.c.l.b16 %v1389
        %v1408 = vunpack.c.h.b16 %v1389
        %v1409 = vunpack.c.l.b16 %v1390
        %v1410 = vunpack.c.h.b16 %v1390
        %v1411 = vunpack.c.l.b16 %v1391
        %v1412 = vunpack.c.h.b16 %v1391
        %v1413 = vunpack.c.l.b16 %v1392
        %v1414 = vunpack.c.h.b16 %v1392
        %v1415 = vunpack.c.l.b16 %v1393
        %v1416 = vunpack.c.h.b16 %v1393
        %v1417 = vunpack.c.l.b16 %v1394
        %v1418 = vunpack.c.h.b16 %v1394
        %v1419 = vpack.c.b16 %v1405, %v1403
        %v1420 = vpack.c.b16 %v1406, %v1404
        %v1421 = vpack.c.b16 %v1409, %v1407
        %v1422 = vpack.c.b16 %v1410, %v1408
        %v1423 = vpack.c.b16 %v1413, %v1411
        %v1424 = vpack.c.b16 %v1414, %v1412
        %v1425 = vpack.c.b16 %v1417, %v1415
        %v1426 = vpack.c.b16 %v1418, %v1416
        %1435 = vmatprep.subr.bf16.mxu0 0
        %1436 = vmatpush1.bf16.msra.mxu0 %v586
        %1437 = vmatprep.subr.bf16.mxu0 0
        %1438 = vmatpush1.bf16.msra.mxu0 %v587
        %1439 = vmatprep.subr.bf16.mxu0 0
        %1440 = vmatpush1.bf16.msra.mxu0 %v588
        %1441 = vmatprep.subr.bf16.mxu0 0
        %1442 = vmatpush1.bf16.msra.mxu0 %v589
        %1443 = vmatprep.subr.bf16.mxu0 0
        %1444 = vmatpush1.bf16.msra.mxu0 %v590
        %1445 = vmatprep.subr.bf16.mxu0 0
        %1446 = vmatpush1.bf16.msra.mxu0 %v591
        %1447 = vmatprep.subr.bf16.mxu0 0
        %1448 = vmatpush1.bf16.msra.mxu0 %v592
        %1449 = vmatprep.subr.bf16.mxu0 0
        %1450 = vmatpush1.bf16.msra.mxu0 %v593
        %1451 = vmatprep.subr.bf16.mxu0 0
        %1452 = vmatpush1.bf16.msra.mxu0 %v594
        %1453 = vmatprep.subr.bf16.mxu0 0
        %1454 = vmatpush1.bf16.msra.mxu0 %v595
        %1455 = vmatprep.subr.bf16.mxu0 0
        %1456 = vmatpush1.bf16.msra.mxu0 %v596
        %1457 = vmatprep.subr.bf16.mxu0 0
        %1458 = vmatpush1.bf16.msra.mxu0 %v597
        %1459 = vmatprep.subr.bf16.mxu0 0
        %1460 = vmatpush1.bf16.msra.mxu0 %v598
        %1461 = vmatprep.subr.bf16.mxu0 0
        %1462 = vmatpush1.bf16.msra.mxu0 %v599
        %1463 = vmatprep.subr.bf16.mxu0 0
        %1464 = vmatpush1.bf16.msra.mxu0 %v600
        %1465 = vmatprep.subr.bf16.mxu0 0
        %1466 = vmatpush1.bf16.msra.mxu0 %v601
        %1467 = vmatprep.mubr.bf16.mxu0 %v1420
        %1468 = vmatmul.mubr.bf16.gmra.mrb[0].mxu0 %v1419
        %v1469 = vpop.f32.mrb[0].mxu0
        %v1470 = vadd.f32 0.0, %v1469
        %v1471 = vpop.f32.mrb[0].mxu0
        %v1472 = vpop.f32.mrb[0].mxu0
        %v1473 = vadd.f32 0.0, %v1472
        %v1474 = vpop.f32.mrb[0].mxu0
        %1475 = vmatprep.mubr.bf16.mxu0 %v1422
        %1476 = vmatmul.mubr.bf16.gmra.mrb[0].mxu0 %v1421
        %v1477 = vpop.f32.mrb[0].mxu0
        %v1478 = vadd.f32 0.0, %v1477
        %v1479 = vpop.f32.mrb[0].mxu0
        %v1480 = vpop.f32.mrb[0].mxu0
        %v1481 = vadd.f32 0.0, %v1480
        %v1482 = vpop.f32.mrb[0].mxu0
        %1483 = vmatprep.mubr.bf16.mxu0 %v1424
        %1484 = vmatmul.mubr.bf16.gmra.mrb[0].mxu0 %v1423
        %v1485 = vpop.f32.mrb[0].mxu0
        %v1486 = vadd.f32 0.0, %v1485
        %v1487 = vpop.f32.mrb[0].mxu0
        %v1488 = vpop.f32.mrb[0].mxu0
        %v1489 = vadd.f32 0.0, %v1488
        %v1490 = vpop.f32.mrb[0].mxu0
        %1491 = vmatprep.mubr.bf16.mxu0 %v1426
        %1492 = vmatmul.mubr.bf16.gmra.mrb[0].mxu0 %v1425
        %v1493 = vpop.f32.mrb[0].mxu0
        %v1494 = vadd.f32 0.0, %v1493
        %v1495 = vpop.f32.mrb[0].mxu0
        %v1496 = vpop.f32.mrb[0].mxu0
        %v1497 = vadd.f32 0.0, %v1496
        %v1498 = vpop.f32.mrb[0].mxu0
        %1499 = vdwg.mxu0
        %v1500 = vpack.c.bf16 %v1473, %v1470
        %v1501 = vpack.c.bf16 %v1481, %v1478
        %v1502 = vpack.c.bf16 %v1489, %v1486
        %v1503 = vpack.c.bf16 %v1497, %v1494
        %s1504 = scalar_lea.vmem %s2, 8
        %v1505 = vld [vmem:[%s1504] sm:$0x3]
        %v1507 = vsel %vm808, %v1500, 0
        %v1510 = vsel %vm808, %v1501, 0
        %v1513 = vsel %vm808, %v1502, 0
        %v1516 = vsel %vm808, %v1503, 0
        %v1519 = vsel %vm821, %v1505, 0
        %1521 = vmatprep.subr.bf16.mxu0 0
        %1522 = vmatpush1.bf16.msra.mxu0 %v1519
        %1523 = vmatprep.subr.bf16.mxu0 0
        %1524 = vmatpush1.bf16.msra.mxu0 0
        %1525 = vmatprep.subr.bf16.mxu0 0
        %1526 = vmatpush1.bf16.msra.mxu0 0
        %1527 = vmatprep.subr.bf16.mxu0 0
        %1528 = vmatpush1.bf16.msra.mxu0 0
        %1529 = vmatprep.subr.bf16.mxu0 0
        %1530 = vmatpush1.bf16.msra.mxu0 0
        %1531 = vmatprep.subr.bf16.mxu0 0
        %1532 = vmatpush1.bf16.msra.mxu0 0
        %1533 = vmatprep.subr.bf16.mxu0 0
        %1534 = vmatpush1.bf16.msra.mxu0 0
        %1535 = vmatprep.subr.bf16.mxu0 0
        %1536 = vmatpush1.bf16.msra.mxu0 0
        %1537 = vmatprep.subr.bf16.mxu0 0
        %1538 = vmatpush1.bf16.msra.mxu0 0
        %1539 = vmatprep.subr.bf16.mxu0 0
        %1540 = vmatpush1.bf16.msra.mxu0 0
        %1541 = vmatprep.subr.bf16.mxu0 0
        %1542 = vmatpush1.bf16.msra.mxu0 0
        %1543 = vmatprep.subr.bf16.mxu0 0
        %1544 = vmatpush1.bf16.msra.mxu0 0
        %1545 = vmatprep.subr.bf16.mxu0 0
        %1546 = vmatpush1.bf16.msra.mxu0 0
        %1547 = vmatprep.subr.bf16.mxu0 0
        %1548 = vmatpush1.bf16.msra.mxu0 0
        %1549 = vmatprep.subr.bf16.mxu0 0
        %1550 = vmatpush1.bf16.msra.mxu0 0
        %1551 = vmatprep.subr.bf16.mxu0 0
        %1552 = vmatpush1.bf16.msra.mxu0 0
        %1553 = vmatprep.mubr.bf16.mxu0 0
        %1554 = vmatmul.mubr.bf16.gmra.mrb[0].mxu0 %v1507
        %v1555 = vpop.f32.mrb[0].mxu0
        %v1556 = vadd.f32 0.0, %v1555
        %v1557 = vpop.f32.mrb[0].mxu0
        %v1558 = vpop.f32.mrb[0].mxu0
        %v1559 = vadd.f32 0.0, %v1558
        %v1560 = vpop.f32.mrb[0].mxu0
        %1561 = vmatprep.mubr.bf16.mxu0 0
        %1562 = vmatmul.mubr.bf16.gmra.mrb[0].mxu0 %v1510
        %v1563 = vpop.f32.mrb[0].mxu0
        %v1564 = vadd.f32 0.0, %v1563
        %v1565 = vpop.f32.mrb[0].mxu0
        %v1566 = vpop.f32.mrb[0].mxu0
        %v1567 = vadd.f32 0.0, %v1566
        %v1568 = vpop.f32.mrb[0].mxu0
        %1569 = vmatprep.mubr.bf16.mxu0 0
        %1570 = vmatmul.mubr.bf16.gmra.mrb[0].mxu0 %v1513
        %v1571 = vpop.f32.mrb[0].mxu0
        %v1572 = vadd.f32 0.0, %v1571
        %v1573 = vpop.f32.mrb[0].mxu0
        %v1574 = vpop.f32.mrb[0].mxu0
        %v1575 = vadd.f32 0.0, %v1574
        %v1576 = vpop.f32.mrb[0].mxu0
        %1577 = vmatprep.mubr.bf16.mxu0 0
        %1578 = vmatmul.mubr.bf16.gmra.mrb[0].mxu0 %v1516
        %v1579 = vpop.f32.mrb[0].mxu0
        %v1580 = vadd.f32 0.0, %v1579
        %v1581 = vpop.f32.mrb[0].mxu0
        %v1582 = vpop.f32.mrb[0].mxu0
        %v1583 = vadd.f32 0.0, %v1582
        %v1584 = vpop.f32.mrb[0].mxu0
        %1585 = vdwg.mxu0
        %v1586 = vadd.f32 %v1378, %v1556
        %v1587 = vadd.f32 %v1379, %v1559
        %v1588 = vadd.f32 %v1380, %v1564
        %v1589 = vadd.f32 %v1381, %v1567
        %v1590 = vadd.f32 %v1382, %v1572
        %v1591 = vadd.f32 %v1383, %v1575
        %v1592 = vadd.f32 %v1384, %v1580
        %v1593 = vadd.f32 %v1385, %v1583
        %s1594 = scalar_lea.vmem [#allocation2], 320
        %v1595 = vld [vmem:[%s1594] sm:$0xff]
        %v1596 = vld [vmem:[%s1594 + $0x8] sm:$0xff]
        %v1597 = vld [vmem:[%s1594 + $0x10] sm:$0xff]
        %v1598 = vld [vmem:[%s1594 + $0x18] sm:$0xff]
        %v1599 = vld [vmem:[%s1594 + $0x20] sm:$0xff]
        %v1600 = vld [vmem:[%s1594 + $0x28] sm:$0xff]
        %v1601 = vld [vmem:[%s1594 + $0x30] sm:$0xff]
        %v1602 = vld [vmem:[%s1594 + $0x38] sm:$0xff]
        %v1611 = vunpack.c.l.b16 %v1595
        %v1612 = vunpack.c.h.b16 %v1595
        %v1613 = vunpack.c.l.b16 %v1596
        %v1614 = vunpack.c.h.b16 %v1596
        %v1615 = vunpack.c.l.b16 %v1597
        %v1616 = vunpack.c.h.b16 %v1597
        %v1617 = vunpack.c.l.b16 %v1598
        %v1618 = vunpack.c.h.b16 %v1598
        %v1619 = vunpack.c.l.b16 %v1599
        %v1620 = vunpack.c.h.b16 %v1599
        %v1621 = vunpack.c.l.b16 %v1600
        %v1622 = vunpack.c.h.b16 %v1600
        %v1623 = vunpack.c.l.b16 %v1601
        %v1624 = vunpack.c.h.b16 %v1601
        %v1625 = vunpack.c.l.b16 %v1602
        %v1626 = vunpack.c.h.b16 %v1602
        %v1627 = vpack.c.b16 %v1613, %v1611
        %v1628 = vpack.c.b16 %v1614, %v1612
        %v1629 = vpack.c.b16 %v1617, %v1615
        %v1630 = vpack.c.b16 %v1618, %v1616
        %v1631 = vpack.c.b16 %v1621, %v1619
        %v1632 = vpack.c.b16 %v1622, %v1620
        %v1633 = vpack.c.b16 %v1625, %v1623
        %v1634 = vpack.c.b16 %v1626, %v1624
        %1643 = vmatprep.subr.bf16.mxu0 0
        %1644 = vmatpush1.bf16.msra.mxu0 %v586
        %1645 = vmatprep.subr.bf16.mxu0 0
        %1646 = vmatpush1.bf16.msra.mxu0 %v587
        %1647 = vmatprep.subr.bf16.mxu0 0
        %1648 = vmatpush1.bf16.msra.mxu0 %v588
        %1649 = vmatprep.subr.bf16.mxu0 0
        %1650 = vmatpush1.bf16.msra.mxu0 %v589
        %1651 = vmatprep.subr.bf16.mxu0 0
        %1652 = vmatpush1.bf16.msra.mxu0 %v590
        %1653 = vmatprep.subr.bf16.mxu0 0
        %1654 = vmatpush1.bf16.msra.mxu0 %v591
        %1655 = vmatprep.subr.bf16.mxu0 0
        %1656 = vmatpush1.bf16.msra.mxu0 %v592
        %1657 = vmatprep.subr.bf16.mxu0 0
        %1658 = vmatpush1.bf16.msra.mxu0 %v593
        %1659 = vmatprep.subr.bf16.mxu0 0
        %1660 = vmatpush1.bf16.msra.mxu0 %v594
        %1661 = vmatprep.subr.bf16.mxu0 0
        %1662 = vmatpush1.bf16.msra.mxu0 %v595
        %1663 = vmatprep.subr.bf16.mxu0 0
        %1664 = vmatpush1.bf16.msra.mxu0 %v596
        %1665 = vmatprep.subr.bf16.mxu0 0
        %1666 = vmatpush1.bf16.msra.mxu0 %v597
        %1667 = vmatprep.subr.bf16.mxu0 0
        %1668 = vmatpush1.bf16.msra.mxu0 %v598
        %1669 = vmatprep.subr.bf16.mxu0 0
        %1670 = vmatpush1.bf16.msra.mxu0 %v599
        %1671 = vmatprep.subr.bf16.mxu0 0
        %1672 = vmatpush1.bf16.msra.mxu0 %v600
        %1673 = vmatprep.subr.bf16.mxu0 0
        %1674 = vmatpush1.bf16.msra.mxu0 %v601
        %1675 = vmatprep.mubr.bf16.mxu0 %v1628
        %1676 = vmatmul.mubr.bf16.gmra.mrb[0].mxu0 %v1627
        %v1677 = vpop.f32.mrb[0].mxu0
        %v1678 = vadd.f32 0.0, %v1677
        %v1679 = vpop.f32.mrb[0].mxu0
        %v1680 = vpop.f32.mrb[0].mxu0
        %v1681 = vadd.f32 0.0, %v1680
        %v1682 = vpop.f32.mrb[0].mxu0
        %1683 = vmatprep.mubr.bf16.mxu0 %v1630
        %1684 = vmatmul.mubr.bf16.gmra.mrb[0].mxu0 %v1629
        %v1685 = vpop.f32.mrb[0].mxu0
        %v1686 = vadd.f32 0.0, %v1685
        %v1687 = vpop.f32.mrb[0].mxu0
        %v1688 = vpop.f32.mrb[0].mxu0
        %v1689 = vadd.f32 0.0, %v1688
        %v1690 = vpop.f32.mrb[0].mxu0
        %1691 = vmatprep.mubr.bf16.mxu0 %v1632
        %1692 = vmatmul.mubr.bf16.gmra.mrb[0].mxu0 %v1631
        %v1693 = vpop.f32.mrb[0].mxu0
        %v1694 = vadd.f32 0.0, %v1693
        %v1695 = vpop.f32.mrb[0].mxu0
        %v1696 = vpop.f32.mrb[0].mxu0
        %v1697 = vadd.f32 0.0, %v1696
        %v1698 = vpop.f32.mrb[0].mxu0
        %1699 = vmatprep.mubr.bf16.mxu0 %v1634
        %1700 = vmatmul.mubr.bf16.gmra.mrb[0].mxu0 %v1633
        %v1701 = vpop.f32.mrb[0].mxu0
        %v1702 = vadd.f32 0.0, %v1701
        %v1703 = vpop.f32.mrb[0].mxu0
        %v1704 = vpop.f32.mrb[0].mxu0
        %v1705 = vadd.f32 0.0, %v1704
        %v1706 = vpop.f32.mrb[0].mxu0
        %1707 = vdwg.mxu0
        %v1708 = vpack.c.bf16 %v1681, %v1678
        %v1709 = vpack.c.bf16 %v1689, %v1686
        %v1710 = vpack.c.bf16 %v1697, %v1694
        %v1711 = vpack.c.bf16 %v1705, %v1702
        %s1712 = scalar_lea.vmem %s2, 10
        %v1713 = vld [vmem:[%s1712] sm:$0x3]
        %v1715 = vsel %vm808, %v1708, 0
        %v1718 = vsel %vm808, %v1709, 0
        %v1721 = vsel %vm808, %v1710, 0
        %v1724 = vsel %vm808, %v1711, 0
        %v1727 = vsel %vm821, %v1713, 0
        %1729 = vmatprep.subr.bf16.mxu0 0
        %1730 = vmatpush1.bf16.msra.mxu0 %v1727
        %1731 = vmatprep.subr.bf16.mxu0 0
        %1732 = vmatpush1.bf16.msra.mxu0 0
        %1733 = vmatprep.subr.bf16.mxu0 0
        %1734 = vmatpush1.bf16.msra.mxu0 0
        %1735 = vmatprep.subr.bf16.mxu0 0
        %1736 = vmatpush1.bf16.msra.mxu0 0
        %1737 = vmatprep.subr.bf16.mxu0 0
        %1738 = vmatpush1.bf16.msra.mxu0 0
        %1739 = vmatprep.subr.bf16.mxu0 0
        %1740 = vmatpush1.bf16.msra.mxu0 0
        %1741 = vmatprep.subr.bf16.mxu0 0
        %1742 = vmatpush1.bf16.msra.mxu0 0
        %1743 = vmatprep.subr.bf16.mxu0 0
        %1744 = vmatpush1.bf16.msra.mxu0 0
        %1745 = vmatprep.subr.bf16.mxu0 0
        %1746 = vmatpush1.bf16.msra.mxu0 0
        %1747 = vmatprep.subr.bf16.mxu0 0
        %1748 = vmatpush1.bf16.msra.mxu0 0
        %1749 = vmatprep.subr.bf16.mxu0 0
        %1750 = vmatpush1.bf16.msra.mxu0 0
        %1751 = vmatprep.subr.bf16.mxu0 0
        %1752 = vmatpush1.bf16.msra.mxu0 0
        %1753 = vmatprep.subr.bf16.mxu0 0
        %1754 = vmatpush1.bf16.msra.mxu0 0
        %1755 = vmatprep.subr.bf16.mxu0 0
        %1756 = vmatpush1.bf16.msra.mxu0 0
        %1757 = vmatprep.subr.bf16.mxu0 0
        %1758 = vmatpush1.bf16.msra.mxu0 0
        %1759 = vmatprep.subr.bf16.mxu0 0
        %1760 = vmatpush1.bf16.msra.mxu0 0
        %1761 = vmatprep.mubr.bf16.mxu0 0
        %1762 = vmatmul.mubr.bf16.gmra.mrb[0].mxu0 %v1715
        %v1763 = vpop.f32.mrb[0].mxu0
        %v1764 = vadd.f32 0.0, %v1763
        %v1765 = vpop.f32.mrb[0].mxu0
        %v1766 = vpop.f32.mrb[0].mxu0
        %v1767 = vadd.f32 0.0, %v1766
        %v1768 = vpop.f32.mrb[0].mxu0
        %1769 = vmatprep.mubr.bf16.mxu0 0
        %1770 = vmatmul.mubr.bf16.gmra.mrb[0].mxu0 %v1718
        %v1771 = vpop.f32.mrb[0].mxu0
        %v1772 = vadd.f32 0.0, %v1771
        %v1773 = vpop.f32.mrb[0].mxu0
        %v1774 = vpop.f32.mrb[0].mxu0
        %v1775 = vadd.f32 0.0, %v1774
        %v1776 = vpop.f32.mrb[0].mxu0
        %1777 = vmatprep.mubr.bf16.mxu0 0
        %1778 = vmatmul.mubr.bf16.gmra.mrb[0].mxu0 %v1721
        %v1779 = vpop.f32.mrb[0].mxu0
        %v1780 = vadd.f32 0.0, %v1779
        %v1781 = vpop.f32.mrb[0].mxu0
        %v1782 = vpop.f32.mrb[0].mxu0
        %v1783 = vadd.f32 0.0, %v1782
        %v1784 = vpop.f32.mrb[0].mxu0
        %1785 = vmatprep.mubr.bf16.mxu0 0
        %1786 = vmatmul.mubr.bf16.gmra.mrb[0].mxu0 %v1724
        %v1787 = vpop.f32.mrb[0].mxu0
        %v1788 = vadd.f32 0.0, %v1787
        %v1789 = vpop.f32.mrb[0].mxu0
        %v1790 = vpop.f32.mrb[0].mxu0
        %v1791 = vadd.f32 0.0, %v1790
        %v1792 = vpop.f32.mrb[0].mxu0
        %1793 = vdwg.mxu0
        %v1794 = vadd.f32 %v1586, %v1764
        %v1795 = vadd.f32 %v1587, %v1767
        %v1796 = vadd.f32 %v1588, %v1772
        %v1797 = vadd.f32 %v1589, %v1775
        %v1798 = vadd.f32 %v1590, %v1780
        %v1799 = vadd.f32 %v1591, %v1783
        %v1800 = vadd.f32 %v1592, %v1788
        %v1801 = vadd.f32 %v1593, %v1791
        %s1802 = scalar_lea.vmem [#allocation2], 384
        %v1803 = vld [vmem:[%s1802] sm:$0xff]
        %v1804 = vld [vmem:[%s1802 + $0x8] sm:$0xff]
        %v1805 = vld [vmem:[%s1802 + $0x10] sm:$0xff]
        %v1806 = vld [vmem:[%s1802 + $0x18] sm:$0xff]
        %v1807 = vld [vmem:[%s1802 + $0x20] sm:$0xff]
        %v1808 = vld [vmem:[%s1802 + $0x28] sm:$0xff]
        %v1809 = vld [vmem:[%s1802 + $0x30] sm:$0xff]
        %v1810 = vld [vmem:[%s1802 + $0x38] sm:$0xff]
        %v1819 = vunpack.c.l.b16 %v1803
        %v1820 = vunpack.c.h.b16 %v1803
        %v1821 = vunpack.c.l.b16 %v1804
        %v1822 = vunpack.c.h.b16 %v1804
        %v1823 = vunpack.c.l.b16 %v1805
        %v1824 = vunpack.c.h.b16 %v1805
        %v1825 = vunpack.c.l.b16 %v1806
        %v1826 = vunpack.c.h.b16 %v1806
        %v1827 = vunpack.c.l.b16 %v1807
        %v1828 = vunpack.c.h.b16 %v1807
        %v1829 = vunpack.c.l.b16 %v1808
        %v1830 = vunpack.c.h.b16 %v1808
        %v1831 = vunpack.c.l.b16 %v1809
        %v1832 = vunpack.c.h.b16 %v1809
        %v1833 = vunpack.c.l.b16 %v1810
        %v1834 = vunpack.c.h.b16 %v1810
        %v1835 = vpack.c.b16 %v1821, %v1819
        %v1836 = vpack.c.b16 %v1822, %v1820
        %v1837 = vpack.c.b16 %v1825, %v1823
        %v1838 = vpack.c.b16 %v1826, %v1824
        %v1839 = vpack.c.b16 %v1829, %v1827
        %v1840 = vpack.c.b16 %v1830, %v1828
        %v1841 = vpack.c.b16 %v1833, %v1831
        %v1842 = vpack.c.b16 %v1834, %v1832
        %1851 = vmatprep.subr.bf16.mxu0 0
        %1852 = vmatpush1.bf16.msra.mxu0 %v586
        %1853 = vmatprep.subr.bf16.mxu0 0
        %1854 = vmatpush1.bf16.msra.mxu0 %v587
        %1855 = vmatprep.subr.bf16.mxu0 0
        %1856 = vmatpush1.bf16.msra.mxu0 %v588
        %1857 = vmatprep.subr.bf16.mxu0 0
        %1858 = vmatpush1.bf16.msra.mxu0 %v589
        %1859 = vmatprep.subr.bf16.mxu0 0
        %1860 = vmatpush1.bf16.msra.mxu0 %v590
        %1861 = vmatprep.subr.bf16.mxu0 0
        %1862 = vmatpush1.bf16.msra.mxu0 %v591
        %1863 = vmatprep.subr.bf16.mxu0 0
        %1864 = vmatpush1.bf16.msra.mxu0 %v592
        %1865 = vmatprep.subr.bf16.mxu0 0
        %1866 = vmatpush1.bf16.msra.mxu0 %v593
        %1867 = vmatprep.subr.bf16.mxu0 0
        %1868 = vmatpush1.bf16.msra.mxu0 %v594
        %1869 = vmatprep.subr.bf16.mxu0 0
        %1870 = vmatpush1.bf16.msra.mxu0 %v595
        %1871 = vmatprep.subr.bf16.mxu0 0
        %1872 = vmatpush1.bf16.msra.mxu0 %v596
        %1873 = vmatprep.subr.bf16.mxu0 0
        %1874 = vmatpush1.bf16.msra.mxu0 %v597
        %1875 = vmatprep.subr.bf16.mxu0 0
        %1876 = vmatpush1.bf16.msra.mxu0 %v598
        %1877 = vmatprep.subr.bf16.mxu0 0
        %1878 = vmatpush1.bf16.msra.mxu0 %v599
        %1879 = vmatprep.subr.bf16.mxu0 0
        %1880 = vmatpush1.bf16.msra.mxu0 %v600
        %1881 = vmatprep.subr.bf16.mxu0 0
        %1882 = vmatpush1.bf16.msra.mxu0 %v601
        %1883 = vmatprep.mubr.bf16.mxu0 %v1836
        %1884 = vmatmul.mubr.bf16.gmra.mrb[0].mxu0 %v1835
        %v1885 = vpop.f32.mrb[0].mxu0
        %v1886 = vadd.f32 0.0, %v1885
        %v1887 = vpop.f32.mrb[0].mxu0
        %v1888 = vpop.f32.mrb[0].mxu0
        %v1889 = vadd.f32 0.0, %v1888
        %v1890 = vpop.f32.mrb[0].mxu0
        %1891 = vmatprep.mubr.bf16.mxu0 %v1838
        %1892 = vmatmul.mubr.bf16.gmra.mrb[0].mxu0 %v1837
        %v1893 = vpop.f32.mrb[0].mxu0
        %v1894 = vadd.f32 0.0, %v1893
        %v1895 = vpop.f32.mrb[0].mxu0
        %v1896 = vpop.f32.mrb[0].mxu0
        %v1897 = vadd.f32 0.0, %v1896
        %v1898 = vpop.f32.mrb[0].mxu0
        %1899 = vmatprep.mubr.bf16.mxu0 %v1840
        %1900 = vmatmul.mubr.bf16.gmra.mrb[0].mxu0 %v1839
        %v1901 = vpop.f32.mrb[0].mxu0
        %v1902 = vadd.f32 0.0, %v1901
        %v1903 = vpop.f32.mrb[0].mxu0
        %v1904 = vpop.f32.mrb[0].mxu0
        %v1905 = vadd.f32 0.0, %v1904
        %v1906 = vpop.f32.mrb[0].mxu0
        %1907 = vmatprep.mubr.bf16.mxu0 %v1842
        %1908 = vmatmul.mubr.bf16.gmra.mrb[0].mxu0 %v1841
        %v1909 = vpop.f32.mrb[0].mxu0
        %v1910 = vadd.f32 0.0, %v1909
        %v1911 = vpop.f32.mrb[0].mxu0
        %v1912 = vpop.f32.mrb[0].mxu0
        %v1913 = vadd.f32 0.0, %v1912
        %v1914 = vpop.f32.mrb[0].mxu0
        %1915 = vdwg.mxu0
        %v1916 = vpack.c.bf16 %v1889, %v1886
        %v1917 = vpack.c.bf16 %v1897, %v1894
        %v1918 = vpack.c.bf16 %v1905, %v1902
        %v1919 = vpack.c.bf16 %v1913, %v1910
        %s1920 = scalar_lea.vmem %s2, 12
        %v1921 = vld [vmem:[%s1920] sm:$0x3]
        %v1923 = vsel %vm808, %v1916, 0
        %v1926 = vsel %vm808, %v1917, 0
        %v1929 = vsel %vm808, %v1918, 0
        %v1932 = vsel %vm808, %v1919, 0
        %v1935 = vsel %vm821, %v1921, 0
        %1937 = vmatprep.subr.bf16.mxu0 0
        %1938 = vmatpush1.bf16.msra.mxu0 %v1935
        %1939 = vmatprep.subr.bf16.mxu0 0
        %1940 = vmatpush1.bf16.msra.mxu0 0
        %1941 = vmatprep.subr.bf16.mxu0 0
        %1942 = vmatpush1.bf16.msra.mxu0 0
        %1943 = vmatprep.subr.bf16.mxu0 0
        %1944 = vmatpush1.bf16.msra.mxu0 0
        %1945 = vmatprep.subr.bf16.mxu0 0
        %1946 = vmatpush1.bf16.msra.mxu0 0
        %1947 = vmatprep.subr.bf16.mxu0 0
        %1948 = vmatpush1.bf16.msra.mxu0 0
        %1949 = vmatprep.subr.bf16.mxu0 0
        %1950 = vmatpush1.bf16.msra.mxu0 0
        %1951 = vmatprep.subr.bf16.mxu0 0
        %1952 = vmatpush1.bf16.msra.mxu0 0
        %1953 = vmatprep.subr.bf16.mxu0 0
        %1954 = vmatpush1.bf16.msra.mxu0 0
        %1955 = vmatprep.subr.bf16.mxu0 0
        %1956 = vmatpush1.bf16.msra.mxu0 0
        %1957 = vmatprep.subr.bf16.mxu0 0
        %1958 = vmatpush1.bf16.msra.mxu0 0
        %1959 = vmatprep.subr.bf16.mxu0 0
        %1960 = vmatpush1.bf16.msra.mxu0 0
        %1961 = vmatprep.subr.bf16.mxu0 0
        %1962 = vmatpush1.bf16.msra.mxu0 0
        %1963 = vmatprep.subr.bf16.mxu0 0
        %1964 = vmatpush1.bf16.msra.mxu0 0
        %1965 = vmatprep.subr.bf16.mxu0 0
        %1966 = vmatpush1.bf16.msra.mxu0 0
        %1967 = vmatprep.subr.bf16.mxu0 0
        %1968 = vmatpush1.bf16.msra.mxu0 0
        %1969 = vmatprep.mubr.bf16.mxu0 0
        %1970 = vmatmul.mubr.bf16.gmra.mrb[0].mxu0 %v1923
        %v1971 = vpop.f32.mrb[0].mxu0
        %v1972 = vadd.f32 0.0, %v1971
        %v1973 = vpop.f32.mrb[0].mxu0
        %v1974 = vpop.f32.mrb[0].mxu0
        %v1975 = vadd.f32 0.0, %v1974
        %v1976 = vpop.f32.mrb[0].mxu0
        %1977 = vmatprep.mubr.bf16.mxu0 0
        %1978 = vmatmul.mubr.bf16.gmra.mrb[0].mxu0 %v1926
        %v1979 = vpop.f32.mrb[0].mxu0
        %v1980 = vadd.f32 0.0, %v1979
        %v1981 = vpop.f32.mrb[0].mxu0
        %v1982 = vpop.f32.mrb[0].mxu0
        %v1983 = vadd.f32 0.0, %v1982
        %v1984 = vpop.f32.mrb[0].mxu0
        %1985 = vmatprep.mubr.bf16.mxu0 0
        %1986 = vmatmul.mubr.bf16.gmra.mrb[0].mxu0 %v1929
        %v1987 = vpop.f32.mrb[0].mxu0
        %v1988 = vadd.f32 0.0, %v1987
        %v1989 = vpop.f32.mrb[0].mxu0
        %v1990 = vpop.f32.mrb[0].mxu0
        %v1991 = vadd.f32 0.0, %v1990
        %v1992 = vpop.f32.mrb[0].mxu0
        %1993 = vmatprep.mubr.bf16.mxu0 0
        %1994 = vmatmul.mubr.bf16.gmra.mrb[0].mxu0 %v1932
        %v1995 = vpop.f32.mrb[0].mxu0
        %v1996 = vadd.f32 0.0, %v1995
        %v1997 = vpop.f32.mrb[0].mxu0
        %v1998 = vpop.f32.mrb[0].mxu0
        %v1999 = vadd.f32 0.0, %v1998
        %v2000 = vpop.f32.mrb[0].mxu0
        %2001 = vdwg.mxu0
        %v2002 = vadd.f32 %v1794, %v1972
        %v2003 = vadd.f32 %v1795, %v1975
        %v2004 = vadd.f32 %v1796, %v1980
        %v2005 = vadd.f32 %v1797, %v1983
        %v2006 = vadd.f32 %v1798, %v1988
        %v2007 = vadd.f32 %v1799, %v1991
        %v2008 = vadd.f32 %v1800, %v1996
        %v2009 = vadd.f32 %v1801, %v1999
        %s2010 = scalar_lea.vmem [#allocation2], 448
        %v2011 = vld [vmem:[%s2010] sm:$0xff]
        %v2012 = vld [vmem:[%s2010 + $0x8] sm:$0xff]
        %v2013 = vld [vmem:[%s2010 + $0x10] sm:$0xff]
        %v2014 = vld [vmem:[%s2010 + $0x18] sm:$0xff]
        %v2015 = vld [vmem:[%s2010 + $0x20] sm:$0xff]
        %v2016 = vld [vmem:[%s2010 + $0x28] sm:$0xff]
        %v2017 = vld [vmem:[%s2010 + $0x30] sm:$0xff]
        %v2018 = vld [vmem:[%s2010 + $0x38] sm:$0xff]
        %v2027 = vunpack.c.l.b16 %v2011
        %v2028 = vunpack.c.h.b16 %v2011
        %v2029 = vunpack.c.l.b16 %v2012
        %v2030 = vunpack.c.h.b16 %v2012
        %v2031 = vunpack.c.l.b16 %v2013
        %v2032 = vunpack.c.h.b16 %v2013
        %v2033 = vunpack.c.l.b16 %v2014
        %v2034 = vunpack.c.h.b16 %v2014
        %v2035 = vunpack.c.l.b16 %v2015
        %v2036 = vunpack.c.h.b16 %v2015
        %v2037 = vunpack.c.l.b16 %v2016
        %v2038 = vunpack.c.h.b16 %v2016
        %v2039 = vunpack.c.l.b16 %v2017
        %v2040 = vunpack.c.h.b16 %v2017
        %v2041 = vunpack.c.l.b16 %v2018
        %v2042 = vunpack.c.h.b16 %v2018
        %v2043 = vpack.c.b16 %v2029, %v2027
        %v2044 = vpack.c.b16 %v2030, %v2028
        %v2045 = vpack.c.b16 %v2033, %v2031
        %v2046 = vpack.c.b16 %v2034, %v2032
        %v2047 = vpack.c.b16 %v2037, %v2035
        %v2048 = vpack.c.b16 %v2038, %v2036
        %v2049 = vpack.c.b16 %v2041, %v2039
        %v2050 = vpack.c.b16 %v2042, %v2040
        %2059 = vmatprep.subr.bf16.mxu0 0
        %2060 = vmatpush1.bf16.msra.mxu0 %v586
        %2061 = vmatprep.subr.bf16.mxu0 0
        %2062 = vmatpush1.bf16.msra.mxu0 %v587
        %2063 = vmatprep.subr.bf16.mxu0 0
        %2064 = vmatpush1.bf16.msra.mxu0 %v588
        %2065 = vmatprep.subr.bf16.mxu0 0
        %2066 = vmatpush1.bf16.msra.mxu0 %v589
        %2067 = vmatprep.subr.bf16.mxu0 0
        %2068 = vmatpush1.bf16.msra.mxu0 %v590
        %2069 = vmatprep.subr.bf16.mxu0 0
        %2070 = vmatpush1.bf16.msra.mxu0 %v591
        %2071 = vmatprep.subr.bf16.mxu0 0
        %2072 = vmatpush1.bf16.msra.mxu0 %v592
        %2073 = vmatprep.subr.bf16.mxu0 0
        %2074 = vmatpush1.bf16.msra.mxu0 %v593
        %2075 = vmatprep.subr.bf16.mxu0 0
        %2076 = vmatpush1.bf16.msra.mxu0 %v594
        %2077 = vmatprep.subr.bf16.mxu0 0
        %2078 = vmatpush1.bf16.msra.mxu0 %v595
        %2079 = vmatprep.subr.bf16.mxu0 0
        %2080 = vmatpush1.bf16.msra.mxu0 %v596
        %2081 = vmatprep.subr.bf16.mxu0 0
        %2082 = vmatpush1.bf16.msra.mxu0 %v597
        %2083 = vmatprep.subr.bf16.mxu0 0
        %2084 = vmatpush1.bf16.msra.mxu0 %v598
        %2085 = vmatprep.subr.bf16.mxu0 0
        %2086 = vmatpush1.bf16.msra.mxu0 %v599
        %2087 = vmatprep.subr.bf16.mxu0 0
        %2088 = vmatpush1.bf16.msra.mxu0 %v600
        %2089 = vmatprep.subr.bf16.mxu0 0
        %2090 = vmatpush1.bf16.msra.mxu0 %v601
        %2091 = vmatprep.mubr.bf16.mxu0 %v2044
        %2092 = vmatmul.mubr.bf16.gmra.mrb[0].mxu0 %v2043
        %v2093 = vpop.f32.mrb[0].mxu0
        %v2094 = vadd.f32 0.0, %v2093
        %v2095 = vpop.f32.mrb[0].mxu0
        %v2096 = vpop.f32.mrb[0].mxu0
        %v2097 = vadd.f32 0.0, %v2096
        %v2098 = vpop.f32.mrb[0].mxu0
        %2099 = vmatprep.mubr.bf16.mxu0 %v2046
        %2100 = vmatmul.mubr.bf16.gmra.mrb[0].mxu0 %v2045
        %v2101 = vpop.f32.mrb[0].mxu0
        %v2102 = vadd.f32 0.0, %v2101
        %v2103 = vpop.f32.mrb[0].mxu0
        %v2104 = vpop.f32.mrb[0].mxu0
        %v2105 = vadd.f32 0.0, %v2104
        %v2106 = vpop.f32.mrb[0].mxu0
        %2107 = vmatprep.mubr.bf16.mxu0 %v2048
        %2108 = vmatmul.mubr.bf16.gmra.mrb[0].mxu0 %v2047
        %v2109 = vpop.f32.mrb[0].mxu0
        %v2110 = vadd.f32 0.0, %v2109
        %v2111 = vpop.f32.mrb[0].mxu0
        %v2112 = vpop.f32.mrb[0].mxu0
        %v2113 = vadd.f32 0.0, %v2112
        %v2114 = vpop.f32.mrb[0].mxu0
        %2115 = vmatprep.mubr.bf16.mxu0 %v2050
        %2116 = vmatmul.mubr.bf16.gmra.mrb[0].mxu0 %v2049
        %v2117 = vpop.f32.mrb[0].mxu0
        %v2118 = vadd.f32 0.0, %v2117
        %v2119 = vpop.f32.mrb[0].mxu0
        %v2120 = vpop.f32.mrb[0].mxu0
        %v2121 = vadd.f32 0.0, %v2120
        %v2122 = vpop.f32.mrb[0].mxu0
        %2123 = vdwg.mxu0
        %v2124 = vpack.c.bf16 %v2097, %v2094
        %v2125 = vpack.c.bf16 %v2105, %v2102
        %v2126 = vpack.c.bf16 %v2113, %v2110
        %v2127 = vpack.c.bf16 %v2121, %v2118
        %s2128 = scalar_lea.vmem %s2, 14
        %v2129 = vld [vmem:[%s2128] sm:$0x3]
        %v2131 = vsel %vm808, %v2124, 0
        %v2134 = vsel %vm808, %v2125, 0
        %v2137 = vsel %vm808, %v2126, 0
        %v2140 = vsel %vm808, %v2127, 0
        %v2143 = vsel %vm821, %v2129, 0
        %2145 = vmatprep.subr.bf16.mxu0 0
        %2146 = vmatpush1.bf16.msra.mxu0 %v2143
        %2147 = vmatprep.subr.bf16.mxu0 0
        %2148 = vmatpush1.bf16.msra.mxu0 0
        %2149 = vmatprep.subr.bf16.mxu0 0
        %2150 = vmatpush1.bf16.msra.mxu0 0
        %2151 = vmatprep.subr.bf16.mxu0 0
        %2152 = vmatpush1.bf16.msra.mxu0 0
        %2153 = vmatprep.subr.bf16.mxu0 0
        %2154 = vmatpush1.bf16.msra.mxu0 0
        %2155 = vmatprep.subr.bf16.mxu0 0
        %2156 = vmatpush1.bf16.msra.mxu0 0
        %2157 = vmatprep.subr.bf16.mxu0 0
        %2158 = vmatpush1.bf16.msra.mxu0 0
        %2159 = vmatprep.subr.bf16.mxu0 0
        %2160 = vmatpush1.bf16.msra.mxu0 0
        %2161 = vmatprep.subr.bf16.mxu0 0
        %2162 = vmatpush1.bf16.msra.mxu0 0
        %2163 = vmatprep.subr.bf16.mxu0 0
        %2164 = vmatpush1.bf16.msra.mxu0 0
        %2165 = vmatprep.subr.bf16.mxu0 0
        %2166 = vmatpush1.bf16.msra.mxu0 0
        %2167 = vmatprep.subr.bf16.mxu0 0
        %2168 = vmatpush1.bf16.msra.mxu0 0
        %2169 = vmatprep.subr.bf16.mxu0 0
        %2170 = vmatpush1.bf16.msra.mxu0 0
        %2171 = vmatprep.subr.bf16.mxu0 0
        %2172 = vmatpush1.bf16.msra.mxu0 0
        %2173 = vmatprep.subr.bf16.mxu0 0
        %2174 = vmatpush1.bf16.msra.mxu0 0
        %2175 = vmatprep.subr.bf16.mxu0 0
        %2176 = vmatpush1.bf16.msra.mxu0 0
        %2177 = vmatprep.mubr.bf16.mxu0 0
        %2178 = vmatmul.mubr.bf16.gmra.mrb[0].mxu0 %v2131
        %v2179 = vpop.f32.mrb[0].mxu0
        %v2180 = vadd.f32 0.0, %v2179
        %v2181 = vpop.f32.mrb[0].mxu0
        %v2182 = vpop.f32.mrb[0].mxu0
        %v2183 = vadd.f32 0.0, %v2182
        %v2184 = vpop.f32.mrb[0].mxu0
        %2185 = vmatprep.mubr.bf16.mxu0 0
        %2186 = vmatmul.mubr.bf16.gmra.mrb[0].mxu0 %v2134
        %v2187 = vpop.f32.mrb[0].mxu0
        %v2188 = vadd.f32 0.0, %v2187
        %v2189 = vpop.f32.mrb[0].mxu0
        %v2190 = vpop.f32.mrb[0].mxu0
        %v2191 = vadd.f32 0.0, %v2190
        %v2192 = vpop.f32.mrb[0].mxu0
        %2193 = vmatprep.mubr.bf16.mxu0 0
        %2194 = vmatmul.mubr.bf16.gmra.mrb[0].mxu0 %v2137
        %v2195 = vpop.f32.mrb[0].mxu0
        %v2196 = vadd.f32 0.0, %v2195
        %v2197 = vpop.f32.mrb[0].mxu0
        %v2198 = vpop.f32.mrb[0].mxu0
        %v2199 = vadd.f32 0.0, %v2198
        %v2200 = vpop.f32.mrb[0].mxu0
        %2201 = vmatprep.mubr.bf16.mxu0 0
        %2202 = vmatmul.mubr.bf16.gmra.mrb[0].mxu0 %v2140
        %v2203 = vpop.f32.mrb[0].mxu0
        %v2204 = vadd.f32 0.0, %v2203
        %v2205 = vpop.f32.mrb[0].mxu0
        %v2206 = vpop.f32.mrb[0].mxu0
        %v2207 = vadd.f32 0.0, %v2206
        %v2208 = vpop.f32.mrb[0].mxu0
        %2209 = vdwg.mxu0
        %v2210 = vadd.f32 %v2002, %v2180
        %v2211 = vadd.f32 %v2003, %v2183
        %v2212 = vadd.f32 %v2004, %v2188
        %v2213 = vadd.f32 %v2005, %v2191
        %v2214 = vadd.f32 %v2006, %v2196
        %v2215 = vadd.f32 %v2007, %v2199
        %v2216 = vadd.f32 %v2008, %v2204
        %v2217 = vadd.f32 %v2009, %v2207
        %s2218 = scalar_lea.vmem [#allocation2], 512
        %v2219 = vld [vmem:[%s2218] sm:$0xff]
        %v2220 = vld [vmem:[%s2218 + $0x8] sm:$0xff]
        %v2221 = vld [vmem:[%s2218 + $0x10] sm:$0xff]
        %v2222 = vld [vmem:[%s2218 + $0x18] sm:$0xff]
        %v2223 = vld [vmem:[%s2218 + $0x20] sm:$0xff]
        %v2224 = vld [vmem:[%s2218 + $0x28] sm:$0xff]
        %v2225 = vld [vmem:[%s2218 + $0x30] sm:$0xff]
        %v2226 = vld [vmem:[%s2218 + $0x38] sm:$0xff]
        %v2235 = vunpack.c.l.b16 %v2219
        %v2236 = vunpack.c.h.b16 %v2219
        %v2237 = vunpack.c.l.b16 %v2220
        %v2238 = vunpack.c.h.b16 %v2220
        %v2239 = vunpack.c.l.b16 %v2221
        %v2240 = vunpack.c.h.b16 %v2221
        %v2241 = vunpack.c.l.b16 %v2222
        %v2242 = vunpack.c.h.b16 %v2222
        %v2243 = vunpack.c.l.b16 %v2223
        %v2244 = vunpack.c.h.b16 %v2223
        %v2245 = vunpack.c.l.b16 %v2224
        %v2246 = vunpack.c.h.b16 %v2224
        %v2247 = vunpack.c.l.b16 %v2225
        %v2248 = vunpack.c.h.b16 %v2225
        %v2249 = vunpack.c.l.b16 %v2226
        %v2250 = vunpack.c.h.b16 %v2226
        %v2251 = vpack.c.b16 %v2237, %v2235
        %v2252 = vpack.c.b16 %v2238, %v2236
        %v2253 = vpack.c.b16 %v2241, %v2239
        %v2254 = vpack.c.b16 %v2242, %v2240
        %v2255 = vpack.c.b16 %v2245, %v2243
        %v2256 = vpack.c.b16 %v2246, %v2244
        %v2257 = vpack.c.b16 %v2249, %v2247
        %v2258 = vpack.c.b16 %v2250, %v2248
        %2267 = vmatprep.subr.bf16.mxu0 0
        %2268 = vmatpush1.bf16.msra.mxu0 %v586
        %2269 = vmatprep.subr.bf16.mxu0 0
        %2270 = vmatpush1.bf16.msra.mxu0 %v587
        %2271 = vmatprep.subr.bf16.mxu0 0
        %2272 = vmatpush1.bf16.msra.mxu0 %v588
        %2273 = vmatprep.subr.bf16.mxu0 0
        %2274 = vmatpush1.bf16.msra.mxu0 %v589
        %2275 = vmatprep.subr.bf16.mxu0 0
        %2276 = vmatpush1.bf16.msra.mxu0 %v590
        %2277 = vmatprep.subr.bf16.mxu0 0
        %2278 = vmatpush1.bf16.msra.mxu0 %v591
        %2279 = vmatprep.subr.bf16.mxu0 0
        %2280 = vmatpush1.bf16.msra.mxu0 %v592
        %2281 = vmatprep.subr.bf16.mxu0 0
        %2282 = vmatpush1.bf16.msra.mxu0 %v593
        %2283 = vmatprep.subr.bf16.mxu0 0
        %2284 = vmatpush1.bf16.msra.mxu0 %v594
        %2285 = vmatprep.subr.bf16.mxu0 0
        %2286 = vmatpush1.bf16.msra.mxu0 %v595
        %2287 = vmatprep.subr.bf16.mxu0 0
        %2288 = vmatpush1.bf16.msra.mxu0 %v596
        %2289 = vmatprep.subr.bf16.mxu0 0
        %2290 = vmatpush1.bf16.msra.mxu0 %v597
        %2291 = vmatprep.subr.bf16.mxu0 0
        %2292 = vmatpush1.bf16.msra.mxu0 %v598
        %2293 = vmatprep.subr.bf16.mxu0 0
        %2294 = vmatpush1.bf16.msra.mxu0 %v599
        %2295 = vmatprep.subr.bf16.mxu0 0
        %2296 = vmatpush1.bf16.msra.mxu0 %v600
        %2297 = vmatprep.subr.bf16.mxu0 0
        %2298 = vmatpush1.bf16.msra.mxu0 %v601
        %2299 = vmatprep.mubr.bf16.mxu0 %v2252
        %2300 = vmatmul.mubr.bf16.gmra.mrb[0].mxu0 %v2251
        %v2301 = vpop.f32.mrb[0].mxu0
        %v2302 = vadd.f32 0.0, %v2301
        %v2303 = vpop.f32.mrb[0].mxu0
        %v2304 = vpop.f32.mrb[0].mxu0
        %v2305 = vadd.f32 0.0, %v2304
        %v2306 = vpop.f32.mrb[0].mxu0
        %2307 = vmatprep.mubr.bf16.mxu0 %v2254
        %2308 = vmatmul.mubr.bf16.gmra.mrb[0].mxu0 %v2253
        %v2309 = vpop.f32.mrb[0].mxu0
        %v2310 = vadd.f32 0.0, %v2309
        %v2311 = vpop.f32.mrb[0].mxu0
        %v2312 = vpop.f32.mrb[0].mxu0
        %v2313 = vadd.f32 0.0, %v2312
        %v2314 = vpop.f32.mrb[0].mxu0
        %2315 = vmatprep.mubr.bf16.mxu0 %v2256
        %2316 = vmatmul.mubr.bf16.gmra.mrb[0].mxu0 %v2255
        %v2317 = vpop.f32.mrb[0].mxu0
        %v2318 = vadd.f32 0.0, %v2317
        %v2319 = vpop.f32.mrb[0].mxu0
        %v2320 = vpop.f32.mrb[0].mxu0
        %v2321 = vadd.f32 0.0, %v2320
        %v2322 = vpop.f32.mrb[0].mxu0
        %2323 = vmatprep.mubr.bf16.mxu0 %v2258
        %2324 = vmatmul.mubr.bf16.gmra.mrb[0].mxu0 %v2257
        %v2325 = vpop.f32.mrb[0].mxu0
        %v2326 = vadd.f32 0.0, %v2325
        %v2327 = vpop.f32.mrb[0].mxu0
        %v2328 = vpop.f32.mrb[0].mxu0
        %v2329 = vadd.f32 0.0, %v2328
        %v2330 = vpop.f32.mrb[0].mxu0
        %2331 = vdwg.mxu0
        %v2332 = vpack.c.bf16 %v2305, %v2302
        %v2333 = vpack.c.bf16 %v2313, %v2310
        %v2334 = vpack.c.bf16 %v2321, %v2318
        %v2335 = vpack.c.bf16 %v2329, %v2326
        %s2336 = scalar_lea.vmem %s2, 16
        %v2337 = vld [vmem:[%s2336] sm:$0x3]
        %v2339 = vsel %vm808, %v2332, 0
        %v2342 = vsel %vm808, %v2333, 0
        %v2345 = vsel %vm808, %v2334, 0
        %v2348 = vsel %vm808, %v2335, 0
        %v2351 = vsel %vm821, %v2337, 0
        %2353 = vmatprep.subr.bf16.mxu0 0
        %2354 = vmatpush1.bf16.msra.mxu0 %v2351
        %2355 = vmatprep.subr.bf16.mxu0 0
        %2356 = vmatpush1.bf16.msra.mxu0 0
        %2357 = vmatprep.subr.bf16.mxu0 0
        %2358 = vmatpush1.bf16.msra.mxu0 0
        %2359 = vmatprep.subr.bf16.mxu0 0
        %2360 = vmatpush1.bf16.msra.mxu0 0
        %2361 = vmatprep.subr.bf16.mxu0 0
        %2362 = vmatpush1.bf16.msra.mxu0 0
        %2363 = vmatprep.subr.bf16.mxu0 0
        %2364 = vmatpush1.bf16.msra.mxu0 0
        %2365 = vmatprep.subr.bf16.mxu0 0
        %2366 = vmatpush1.bf16.msra.mxu0 0
        %2367 = vmatprep.subr.bf16.mxu0 0
        %2368 = vmatpush1.bf16.msra.mxu0 0
        %2369 = vmatprep.subr.bf16.mxu0 0
        %2370 = vmatpush1.bf16.msra.mxu0 0
        %2371 = vmatprep.subr.bf16.mxu0 0
        %2372 = vmatpush1.bf16.msra.mxu0 0
        %2373 = vmatprep.subr.bf16.mxu0 0
        %2374 = vmatpush1.bf16.msra.mxu0 0
        %2375 = vmatprep.subr.bf16.mxu0 0
        %2376 = vmatpush1.bf16.msra.mxu0 0
        %2377 = vmatprep.subr.bf16.mxu0 0
        %2378 = vmatpush1.bf16.msra.mxu0 0
        %2379 = vmatprep.subr.bf16.mxu0 0
        %2380 = vmatpush1.bf16.msra.mxu0 0
        %2381 = vmatprep.subr.bf16.mxu0 0
        %2382 = vmatpush1.bf16.msra.mxu0 0
        %2383 = vmatprep.subr.bf16.mxu0 0
        %2384 = vmatpush1.bf16.msra.mxu0 0
        %2385 = vmatprep.mubr.bf16.mxu0 0
        %2386 = vmatmul.mubr.bf16.gmra.mrb[0].mxu0 %v2339
        %v2387 = vpop.f32.mrb[0].mxu0
        %v2388 = vadd.f32 0.0, %v2387
        %v2389 = vpop.f32.mrb[0].mxu0
        %v2390 = vpop.f32.mrb[0].mxu0
        %v2391 = vadd.f32 0.0, %v2390
        %v2392 = vpop.f32.mrb[0].mxu0
        %2393 = vmatprep.mubr.bf16.mxu0 0
        %2394 = vmatmul.mubr.bf16.gmra.mrb[0].mxu0 %v2342
        %v2395 = vpop.f32.mrb[0].mxu0
        %v2396 = vadd.f32 0.0, %v2395
        %v2397 = vpop.f32.mrb[0].mxu0
        %v2398 = vpop.f32.mrb[0].mxu0
        %v2399 = vadd.f32 0.0, %v2398
        %v2400 = vpop.f32.mrb[0].mxu0
        %2401 = vmatprep.mubr.bf16.mxu0 0
        %2402 = vmatmul.mubr.bf16.gmra.mrb[0].mxu0 %v2345
        %v2403 = vpop.f32.mrb[0].mxu0
        %v2404 = vadd.f32 0.0, %v2403
        %v2405 = vpop.f32.mrb[0].mxu0
        %v2406 = vpop.f32.mrb[0].mxu0
        %v2407 = vadd.f32 0.0, %v2406
        %v2408 = vpop.f32.mrb[0].mxu0
        %2409 = vmatprep.mubr.bf16.mxu0 0
        %2410 = vmatmul.mubr.bf16.gmra.mrb[0].mxu0 %v2348
        %v2411 = vpop.f32.mrb[0].mxu0
        %v2412 = vadd.f32 0.0, %v2411
        %v2413 = vpop.f32.mrb[0].mxu0
        %v2414 = vpop.f32.mrb[0].mxu0
        %v2415 = vadd.f32 0.0, %v2414
        %v2416 = vpop.f32.mrb[0].mxu0
        %2417 = vdwg.mxu0
        %v2418 = vadd.f32 %v2210, %v2388
        %v2419 = vadd.f32 %v2211, %v2391
        %v2420 = vadd.f32 %v2212, %v2396
        %v2421 = vadd.f32 %v2213, %v2399
        %v2422 = vadd.f32 %v2214, %v2404
        %v2423 = vadd.f32 %v2215, %v2407
        %v2424 = vadd.f32 %v2216, %v2412
        %v2425 = vadd.f32 %v2217, %v2415
        %v2426 = vld [vmem:[%s3] sm:$0x1]
        %v2428 = vlaneseq
        %v2429 = vshrl.u32 %v2428, 7
        %v2430 = vsub.s32 0, %v2429
        %v2431 = vrot.slane %v2426, %v2430
        %v2433 = vadd.f32 %v2418, %v2431
        %v2434 = vadd.f32 %v2419, %v2431
        %v2435 = vadd.f32 %v2420, %v2431
        %v2436 = vadd.f32 %v2421, %v2431
        %v2437 = vadd.f32 %v2422, %v2431
        %v2438 = vadd.f32 %v2423, %v2431
        %v2439 = vadd.f32 %v2424, %v2431
        %v2440 = vadd.f32 %v2425, %v2431
        %v2441 = vmax.f32 %v2433, 0.0
        %v2442 = vmax.f32 %v2434, 0.0
        %v2443 = vmax.f32 %v2435, 0.0
        %v2444 = vmax.f32 %v2436, 0.0
        %v2445 = vmax.f32 %v2437, 0.0
        %v2446 = vmax.f32 %v2438, 0.0
        %v2447 = vmax.f32 %v2439, 0.0
        %v2448 = vmax.f32 %v2440, 0.0
        %v2449 = vpack.c.bf16 %v2442, %v2441
        %v2450 = vpack.c.bf16 %v2444, %v2443
        %v2451 = vpack.c.bf16 %v2446, %v2445
        %v2452 = vpack.c.bf16 %v2448, %v2447
        %v2453 = vld [vmem:[%s4] sm:$0xf]
        %v2454 = vld [vmem:[%s4 + $0x4] sm:$0xf]
        %v2457 = vunpack.c.l.b16 %v2453
        %v2458 = vunpack.c.l.b16 %v2454
        %v2459 = vpack.c.b16 %v2458, %v2457
        %vm2460 = vcmask 523264
        %v2462 = vsel %vm2460, %v2459, 0
        %2464 = vmatprep.subr.bf16.mxu0 0
        %2465 = vmatpush1.bf16.msra.mxu0 %v2449
        %2466 = vmatprep.subr.bf16.mxu0 0
        %2467 = vmatpush1.bf16.msra.mxu0 %v2450
        %2468 = vmatprep.subr.bf16.mxu0 0
        %2469 = vmatpush1.bf16.msra.mxu0 %v2451
        %2470 = vmatprep.subr.bf16.mxu0 0
        %2471 = vmatpush1.bf16.msra.mxu0 %v2452
        %2472 = vmatprep.subr.bf16.mxu0 0
        %2473 = vmatpush1.bf16.msra.mxu0 0
        %2474 = vmatprep.subr.bf16.mxu0 0
        %2475 = vmatpush1.bf16.msra.mxu0 0
        %2476 = vmatprep.subr.bf16.mxu0 0
        %2477 = vmatpush1.bf16.msra.mxu0 0
        %2478 = vmatprep.subr.bf16.mxu0 0
        %2479 = vmatpush1.bf16.msra.mxu0 0
        %2480 = vmatprep.subr.bf16.mxu0 0
        %2481 = vmatpush1.bf16.msra.mxu0 0
        %2482 = vmatprep.subr.bf16.mxu0 0
        %2483 = vmatpush1.bf16.msra.mxu0 0
        %2484 = vmatprep.subr.bf16.mxu0 0
        %2485 = vmatpush1.bf16.msra.mxu0 0
        %2486 = vmatprep.subr.bf16.mxu0 0
        %2487 = vmatpush1.bf16.msra.mxu0 0
        %2488 = vmatprep.subr.bf16.mxu0 0
        %2489 = vmatpush1.bf16.msra.mxu0 0
        %2490 = vmatprep.subr.bf16.mxu0 0
        %2491 = vmatpush1.bf16.msra.mxu0 0
        %2492 = vmatprep.subr.bf16.mxu0 0
        %2493 = vmatpush1.bf16.msra.mxu0 0
        %2494 = vmatprep.subr.bf16.mxu0 0
        %2495 = vmatpush1.bf16.msra.mxu0 0
        %2496 = vmatprep.mubr.bf16.mxu0 0
        %2497 = vmatmul.mubr.bf16.gmra.mrb[0].mxu0 %v2462
        %v2498 = vpop.f32.mrb[0].mxu0
        %v2499 = vadd.f32 0.0, %v2498
        %v2500 = vpop.f32.mrb[0].mxu0
        %v2501 = vpop.f32.mrb[0].mxu0
        %v2502 = vadd.f32 0.0, %v2501
        %v2503 = vpop.f32.mrb[0].mxu0
        %2504 = vdwg.mxu0
        %v2505 = vpack.c.bf16 %v2502, %v2499
        %v2506 = vld [vmem:[%s5] sm:$0xf]
        %v2507 = vld [vmem:[%s5 + $0x4] sm:$0xf]
        %v2508 = vld [vmem:[%s5 + $0x8] sm:$0xf]
        %v2509 = vld [vmem:[%s5 + $0xc] sm:$0xf]
        %s2510 = scalar_lea.vmem %s4, 8
        %v2511 = vld [vmem:[%s2510] sm:$0xf]
        %v2512 = vld [vmem:[%s2510 + $0x4] sm:$0xf]
        %v2515 = vunpack.c.l.b16 %v2511
        %v2516 = vunpack.c.l.b16 %v2512
        %v2517 = vpack.c.b16 %v2516, %v2515
        %v2519 = vsel %vm2460, %v2517, 0
        %2521 = vmatprep.subr.bf16.mxu0 0
        %2522 = vmatpush1.bf16.msra.mxu0 %v2449
        %2523 = vmatprep.subr.bf16.mxu0 0
        %2524 = vmatpush1.bf16.msra.mxu0 %v2450
        %2525 = vmatprep.subr.bf16.mxu0 0
        %2526 = vmatpush1.bf16.msra.mxu0 %v2451
        %2527 = vmatprep.subr.bf16.mxu0 0
        %2528 = vmatpush1.bf16.msra.mxu0 %v2452
        %2529 = vmatprep.subr.bf16.mxu0 0
        %2530 = vmatpush1.bf16.msra.mxu0 0
        %2531 = vmatprep.subr.bf16.mxu0 0
        %2532 = vmatpush1.bf16.msra.mxu0 0
        %2533 = vmatprep.subr.bf16.mxu0 0
        %2534 = vmatpush1.bf16.msra.mxu0 0
        %2535 = vmatprep.subr.bf16.mxu0 0
        %2536 = vmatpush1.bf16.msra.mxu0 0
        %2537 = vmatprep.subr.bf16.mxu0 0
        %2538 = vmatpush1.bf16.msra.mxu0 0
        %2539 = vmatprep.subr.bf16.mxu0 0
        %2540 = vmatpush1.bf16.msra.mxu0 0
        %2541 = vmatprep.subr.bf16.mxu0 0
        %2542 = vmatpush1.bf16.msra.mxu0 0
        %2543 = vmatprep.subr.bf16.mxu0 0
        %2544 = vmatpush1.bf16.msra.mxu0 0
        %2545 = vmatprep.subr.bf16.mxu0 0
        %2546 = vmatpush1.bf16.msra.mxu0 0
        %2547 = vmatprep.subr.bf16.mxu0 0
        %2548 = vmatpush1.bf16.msra.mxu0 0
        %2549 = vmatprep.subr.bf16.mxu0 0
        %2550 = vmatpush1.bf16.msra.mxu0 0
        %2551 = vmatprep.subr.bf16.mxu0 0
        %2552 = vmatpush1.bf16.msra.mxu0 0
        %2553 = vmatprep.mubr.bf16.mxu0 0
        %2554 = vmatmul.mubr.bf16.gmra.mrb[0].mxu0 %v2519
        %v2555 = vpop.f32.mrb[0].mxu0
        %v2556 = vadd.f32 0.0, %v2555
        %v2557 = vpop.f32.mrb[0].mxu0
        %v2558 = vpop.f32.mrb[0].mxu0
        %v2559 = vadd.f32 0.0, %v2558
        %v2560 = vpop.f32.mrb[0].mxu0
        %2561 = vdwg.mxu0
        %v2562 = vpack.c.bf16 %v2559, %v2556
        %s2563 = scalar_lea.vmem %s5, 16
        %v2564 = vld [vmem:[%s2563] sm:$0xf]
        %v2565 = vld [vmem:[%s2563 + $0x4] sm:$0xf]
        %v2566 = vld [vmem:[%s2563 + $0x8] sm:$0xf]
        %v2567 = vld [vmem:[%s2563 + $0xc] sm:$0xf]
        %v2572 = vunpack.c.l.b16 %v2564
        %v2573 = vunpack.c.l.b16 %v2565
        %v2574 = vunpack.c.l.b16 %v2566
        %v2575 = vunpack.c.l.b16 %v2567
        %v2576 = vpack.c.b16 %v2573, %v2572
        %v2577 = vpack.c.b16 %v2575, %v2574
        %vm2580 = vcmask 261120
        %v2582 = vsel %vm2580, %v2562, 0
        %2584 = vmatprep.subr.bf16.mxu0 0
        %2585 = vmatpush1.bf16.msra.mxu0 %v2576
        %2586 = vmatprep.subr.bf16.mxu0 0
        %2587 = vmatpush1.bf16.msra.mxu0 %v2577
        %2588 = vmatprep.subr.bf16.mxu0 0
        %2589 = vmatpush1.bf16.msra.mxu0 0
        %2590 = vmatprep.subr.bf16.mxu0 0
        %2591 = vmatpush1.bf16.msra.mxu0 0
        %2592 = vmatprep.subr.bf16.mxu0 0
        %2593 = vmatpush1.bf16.msra.mxu0 0
        %2594 = vmatprep.subr.bf16.mxu0 0
        %2595 = vmatpush1.bf16.msra.mxu0 0
        %2596 = vmatprep.subr.bf16.mxu0 0
        %2597 = vmatpush1.bf16.msra.mxu0 0
        %2598 = vmatprep.subr.bf16.mxu0 0
        %2599 = vmatpush1.bf16.msra.mxu0 0
        %2600 = vmatprep.subr.bf16.mxu0 0
        %2601 = vmatpush1.bf16.msra.mxu0 0
        %2602 = vmatprep.subr.bf16.mxu0 0
        %2603 = vmatpush1.bf16.msra.mxu0 0
        %2604 = vmatprep.subr.bf16.mxu0 0
        %2605 = vmatpush1.bf16.msra.mxu0 0
        %2606 = vmatprep.subr.bf16.mxu0 0
        %2607 = vmatpush1.bf16.msra.mxu0 0
        %2608 = vmatprep.subr.bf16.mxu0 0
        %2609 = vmatpush1.bf16.msra.mxu0 0
        %2610 = vmatprep.subr.bf16.mxu0 0
        %2611 = vmatpush1.bf16.msra.mxu0 0
        %2612 = vmatprep.subr.bf16.mxu0 0
        %2613 = vmatpush1.bf16.msra.mxu0 0
        %2614 = vmatprep.subr.bf16.mxu0 0
        %2615 = vmatpush1.bf16.msra.mxu0 0
        %2616 = vmatprep.mubr.bf16.mxu0 0
        %2617 = vmatmul.mubr.bf16.gmra.mrb[0].mxu0 %v2582
        %v2618 = vpop.f32.mrb[0].mxu0
        %v2619 = vadd.f32 0.0, %v2618
        %v2620 = vpop.f32.mrb[0].mxu0
        %v2621 = vpop.f32.mrb[0].mxu0
        %v2622 = vadd.f32 0.0, %v2621
        %v2623 = vpop.f32.mrb[0].mxu0
        %2624 = vdwg.mxu0
        %v2629 = vunpack.c.l.b16 %v2506
        %v2630 = vunpack.c.l.b16 %v2507
        %v2631 = vunpack.c.l.b16 %v2508
        %v2632 = vunpack.c.l.b16 %v2509
        %v2633 = vpack.c.b16 %v2630, %v2629
        %v2634 = vpack.c.b16 %v2632, %v2631
        %v2638 = vsel %vm2580, %v2505, 0
        %2640 = vmatprep.subr.bf16.mxu0 0
        %2641 = vmatpush1.bf16.msra.mxu0 %v2633
        %2642 = vmatprep.subr.bf16.mxu0 0
        %2643 = vmatpush1.bf16.msra.mxu0 %v2634
        %2644 = vmatprep.subr.bf16.mxu0 0
        %2645 = vmatpush1.bf16.msra.mxu0 0
        %2646 = vmatprep.subr.bf16.mxu0 0
        %2647 = vmatpush1.bf16.msra.mxu0 0
        %2648 = vmatprep.subr.bf16.mxu0 0
        %2649 = vmatpush1.bf16.msra.mxu0 0
        %2650 = vmatprep.subr.bf16.mxu0 0
        %2651 = vmatpush1.bf16.msra.mxu0 0
        %2652 = vmatprep.subr.bf16.mxu0 0
        %2653 = vmatpush1.bf16.msra.mxu0 0
        %2654 = vmatprep.subr.bf16.mxu0 0
        %2655 = vmatpush1.bf16.msra.mxu0 0
        %2656 = vmatprep.subr.bf16.mxu0 0
        %2657 = vmatpush1.bf16.msra.mxu0 0
        %2658 = vmatprep.subr.bf16.mxu0 0
        %2659 = vmatpush1.bf16.msra.mxu0 0
        %2660 = vmatprep.subr.bf16.mxu0 0
        %2661 = vmatpush1.bf16.msra.mxu0 0
        %2662 = vmatprep.subr.bf16.mxu0 0
        %2663 = vmatpush1.bf16.msra.mxu0 0
        %2664 = vmatprep.subr.bf16.mxu0 0
        %2665 = vmatpush1.bf16.msra.mxu0 0
        %2666 = vmatprep.subr.bf16.mxu0 0
        %2667 = vmatpush1.bf16.msra.mxu0 0
        %2668 = vmatprep.subr.bf16.mxu0 0
        %2669 = vmatpush1.bf16.msra.mxu0 0
        %2670 = vmatprep.subr.bf16.mxu0 0
        %2671 = vmatpush1.bf16.msra.mxu0 0
        %2672 = vmatprep.mubr.bf16.mxu0 0
        %2673 = vmatmul.mubr.bf16.gmra.mrb[0].mxu0 %v2638
        %v2674 = vpop.f32.mrb[0].mxu0
        %v2675 = vadd.f32 %v2619, %v2674
        %v2676 = vpop.f32.mrb[0].mxu0
        %v2677 = vpop.f32.mrb[0].mxu0
        %v2678 = vadd.f32 %v2622, %v2677
        %v2679 = vpop.f32.mrb[0].mxu0
        %2680 = vdwg.mxu0
        %s2681 = scalar_lea.vmem %s4, 16
        %v2682 = vld [vmem:[%s2681] sm:$0xf]
        %v2683 = vld [vmem:[%s2681 + $0x4] sm:$0xf]
        %v2686 = vunpack.c.l.b16 %v2682
        %v2687 = vunpack.c.l.b16 %v2683
        %v2688 = vpack.c.b16 %v2687, %v2686
        %v2690 = vsel %vm2460, %v2688, 0
        %2692 = vmatprep.subr.bf16.mxu0 0
        %2693 = vmatpush1.bf16.msra.mxu0 %v2449
        %2694 = vmatprep.subr.bf16.mxu0 0
        %2695 = vmatpush1.bf16.msra.mxu0 %v2450
        %2696 = vmatprep.subr.bf16.mxu0 0
        %2697 = vmatpush1.bf16.msra.mxu0 %v2451
        %2698 = vmatprep.subr.bf16.mxu0 0
        %2699 = vmatpush1.bf16.msra.mxu0 %v2452
        %2700 = vmatprep.subr.bf16.mxu0 0
        %2701 = vmatpush1.bf16.msra.mxu0 0
        %2702 = vmatprep.subr.bf16.mxu0 0
        %2703 = vmatpush1.bf16.msra.mxu0 0
        %2704 = vmatprep.subr.bf16.mxu0 0
        %2705 = vmatpush1.bf16.msra.mxu0 0
        %2706 = vmatprep.subr.bf16.mxu0 0
        %2707 = vmatpush1.bf16.msra.mxu0 0
        %2708 = vmatprep.subr.bf16.mxu0 0
        %2709 = vmatpush1.bf16.msra.mxu0 0
        %2710 = vmatprep.subr.bf16.mxu0 0
        %2711 = vmatpush1.bf16.msra.mxu0 0
        %2712 = vmatprep.subr.bf16.mxu0 0
        %2713 = vmatpush1.bf16.msra.mxu0 0
        %2714 = vmatprep.subr.bf16.mxu0 0
        %2715 = vmatpush1.bf16.msra.mxu0 0
        %2716 = vmatprep.subr.bf16.mxu0 0
        %2717 = vmatpush1.bf16.msra.mxu0 0
        %2718 = vmatprep.subr.bf16.mxu0 0
        %2719 = vmatpush1.bf16.msra.mxu0 0
        %2720 = vmatprep.subr.bf16.mxu0 0
        %2721 = vmatpush1.bf16.msra.mxu0 0
        %2722 = vmatprep.subr.bf16.mxu0 0
        %2723 = vmatpush1.bf16.msra.mxu0 0
        %2724 = vmatprep.mubr.bf16.mxu0 0
        %2725 = vmatmul.mubr.bf16.gmra.mrb[0].mxu0 %v2690
        %v2726 = vpop.f32.mrb[0].mxu0
        %v2727 = vadd.f32 0.0, %v2726
        %v2728 = vpop.f32.mrb[0].mxu0
        %v2729 = vpop.f32.mrb[0].mxu0
        %v2730 = vadd.f32 0.0, %v2729
        %v2731 = vpop.f32.mrb[0].mxu0
        %2732 = vdwg.mxu0
        %v2733 = vpack.c.bf16 %v2730, %v2727
        %s2734 = scalar_lea.vmem %s5, 32
        %v2735 = vld [vmem:[%s2734] sm:$0xf]
        %v2736 = vld [vmem:[%s2734 + $0x4] sm:$0xf]
        %v2737 = vld [vmem:[%s2734 + $0x8] sm:$0xf]
        %v2738 = vld [vmem:[%s2734 + $0xc] sm:$0xf]
        %v2743 = vunpack.c.l.b16 %v2735
        %v2744 = vunpack.c.l.b16 %v2736
        %v2745 = vunpack.c.l.b16 %v2737
        %v2746 = vunpack.c.l.b16 %v2738
        %v2747 = vpack.c.b16 %v2744, %v2743
        %v2748 = vpack.c.b16 %v2746, %v2745
        %v2752 = vsel %vm2580, %v2733, 0
        %2754 = vmatprep.subr.bf16.mxu0 0
        %2755 = vmatpush1.bf16.msra.mxu0 %v2747
        %2756 = vmatprep.subr.bf16.mxu0 0
        %2757 = vmatpush1.bf16.msra.mxu0 %v2748
        %2758 = vmatprep.subr.bf16.mxu0 0
        %2759 = vmatpush1.bf16.msra.mxu0 0
        %2760 = vmatprep.subr.bf16.mxu0 0
        %2761 = vmatpush1.bf16.msra.mxu0 0
        %2762 = vmatprep.subr.bf16.mxu0 0
        %2763 = vmatpush1.bf16.msra.mxu0 0
        %2764 = vmatprep.subr.bf16.mxu0 0
        %2765 = vmatpush1.bf16.msra.mxu0 0
        %2766 = vmatprep.subr.bf16.mxu0 0
        %2767 = vmatpush1.bf16.msra.mxu0 0
        %2768 = vmatprep.subr.bf16.mxu0 0
        %2769 = vmatpush1.bf16.msra.mxu0 0
        %2770 = vmatprep.subr.bf16.mxu0 0
        %2771 = vmatpush1.bf16.msra.mxu0 0
        %2772 = vmatprep.subr.bf16.mxu0 0
        %2773 = vmatpush1.bf16.msra.mxu0 0
        %2774 = vmatprep.subr.bf16.mxu0 0
        %2775 = vmatpush1.bf16.msra.mxu0 0
        %2776 = vmatprep.subr.bf16.mxu0 0
        %2777 = vmatpush1.bf16.msra.mxu0 0
        %2778 = vmatprep.subr.bf16.mxu0 0
        %2779 = vmatpush1.bf16.msra.mxu0 0
        %2780 = vmatprep.subr.bf16.mxu0 0
        %2781 = vmatpush1.bf16.msra.mxu0 0
        %2782 = vmatprep.subr.bf16.mxu0 0
        %2783 = vmatpush1.bf16.msra.mxu0 0
        %2784 = vmatprep.subr.bf16.mxu0 0
        %2785 = vmatpush1.bf16.msra.mxu0 0
        %2786 = vmatprep.mubr.bf16.mxu0 0
        %2787 = vmatmul.mubr.bf16.gmra.mrb[0].mxu0 %v2752
        %v2788 = vpop.f32.mrb[0].mxu0
        %v2789 = vadd.f32 0.0, %v2788
        %v2790 = vpop.f32.mrb[0].mxu0
        %v2791 = vpop.f32.mrb[0].mxu0
        %v2792 = vadd.f32 0.0, %v2791
        %v2793 = vpop.f32.mrb[0].mxu0
        %2794 = vdwg.mxu0
        %v2795 = vadd.f32 %v2675, %v2789
        %v2796 = vadd.f32 %v2678, %v2792
        %s2797 = scalar_lea.vmem %s4, 24
        %v2798 = vld [vmem:[%s2797] sm:$0xf]
        %v2799 = vld [vmem:[%s2797 + $0x4] sm:$0xf]
        %v2802 = vunpack.c.l.b16 %v2798
        %v2803 = vunpack.c.l.b16 %v2799
        %v2804 = vpack.c.b16 %v2803, %v2802
        %v2806 = vsel %vm2460, %v2804, 0
        %2808 = vmatprep.subr.bf16.mxu0 0
        %2809 = vmatpush1.bf16.msra.mxu0 %v2449
        %2810 = vmatprep.subr.bf16.mxu0 0
        %2811 = vmatpush1.bf16.msra.mxu0 %v2450
        %2812 = vmatprep.subr.bf16.mxu0 0
        %2813 = vmatpush1.bf16.msra.mxu0 %v2451
        %2814 = vmatprep.subr.bf16.mxu0 0
        %2815 = vmatpush1.bf16.msra.mxu0 %v2452
        %2816 = vmatprep.subr.bf16.mxu0 0
        %2817 = vmatpush1.bf16.msra.mxu0 0
        %2818 = vmatprep.subr.bf16.mxu0 0
        %2819 = vmatpush1.bf16.msra.mxu0 0
        %2820 = vmatprep.subr.bf16.mxu0 0
        %2821 = vmatpush1.bf16.msra.mxu0 0
        %2822 = vmatprep.subr.bf16.mxu0 0
        %2823 = vmatpush1.bf16.msra.mxu0 0
        %2824 = vmatprep.subr.bf16.mxu0 0
        %2825 = vmatpush1.bf16.msra.mxu0 0
        %2826 = vmatprep.subr.bf16.mxu0 0
        %2827 = vmatpush1.bf16.msra.mxu0 0
        %2828 = vmatprep.subr.bf16.mxu0 0
        %2829 = vmatpush1.bf16.msra.mxu0 0
        %2830 = vmatprep.subr.bf16.mxu0 0
        %2831 = vmatpush1.bf16.msra.mxu0 0
        %2832 = vmatprep.subr.bf16.mxu0 0
        %2833 = vmatpush1.bf16.msra.mxu0 0
        %2834 = vmatprep.subr.bf16.mxu0 0
        %2835 = vmatpush1.bf16.msra.mxu0 0
        %2836 = vmatprep.subr.bf16.mxu0 0
        %2837 = vmatpush1.bf16.msra.mxu0 0
        %2838 = vmatprep.subr.bf16.mxu0 0
        %2839 = vmatpush1.bf16.msra.mxu0 0
        %2840 = vmatprep.mubr.bf16.mxu0 0
        %2841 = vmatmul.mubr.bf16.gmra.mrb[0].mxu0 %v2806
        %v2842 = vpop.f32.mrb[0].mxu0
        %v2843 = vadd.f32 0.0, %v2842
        %v2844 = vpop.f32.mrb[0].mxu0
        %v2845 = vpop.f32.mrb[0].mxu0
        %v2846 = vadd.f32 0.0, %v2845
        %v2847 = vpop.f32.mrb[0].mxu0
        %2848 = vdwg.mxu0
        %v2849 = vpack.c.bf16 %v2846, %v2843
        %s2850 = scalar_lea.vmem %s5, 48
        %v2851 = vld [vmem:[%s2850] sm:$0xf]
        %v2852 = vld [vmem:[%s2850 + $0x4] sm:$0xf]
        %v2853 = vld [vmem:[%s2850 + $0x8] sm:$0xf]
        %v2854 = vld [vmem:[%s2850 + $0xc] sm:$0xf]
        %v2859 = vunpack.c.l.b16 %v2851
        %v2860 = vunpack.c.l.b16 %v2852
        %v2861 = vunpack.c.l.b16 %v2853
        %v2862 = vunpack.c.l.b16 %v2854
        %v2863 = vpack.c.b16 %v2860, %v2859
        %v2864 = vpack.c.b16 %v2862, %v2861
        %v2868 = vsel %vm2580, %v2849, 0
        %2870 = vmatprep.subr.bf16.mxu0 0
        %2871 = vmatpush1.bf16.msra.mxu0 %v2863
        %2872 = vmatprep.subr.bf16.mxu0 0
        %2873 = vmatpush1.bf16.msra.mxu0 %v2864
        %2874 = vmatprep.subr.bf16.mxu0 0
        %2875 = vmatpush1.bf16.msra.mxu0 0
        %2876 = vmatprep.subr.bf16.mxu0 0
        %2877 = vmatpush1.bf16.msra.mxu0 0
        %2878 = vmatprep.subr.bf16.mxu0 0
        %2879 = vmatpush1.bf16.msra.mxu0 0
        %2880 = vmatprep.subr.bf16.mxu0 0
        %2881 = vmatpush1.bf16.msra.mxu0 0
        %2882 = vmatprep.subr.bf16.mxu0 0
        %2883 = vmatpush1.bf16.msra.mxu0 0
        %2884 = vmatprep.subr.bf16.mxu0 0
        %2885 = vmatpush1.bf16.msra.mxu0 0
        %2886 = vmatprep.subr.bf16.mxu0 0
        %2887 = vmatpush1.bf16.msra.mxu0 0
        %2888 = vmatprep.subr.bf16.mxu0 0
        %2889 = vmatpush1.bf16.msra.mxu0 0
        %2890 = vmatprep.subr.bf16.mxu0 0
        %2891 = vmatpush1.bf16.msra.mxu0 0
        %2892 = vmatprep.subr.bf16.mxu0 0
        %2893 = vmatpush1.bf16.msra.mxu0 0
        %2894 = vmatprep.subr.bf16.mxu0 0
        %2895 = vmatpush1.bf16.msra.mxu0 0
        %2896 = vmatprep.subr.bf16.mxu0 0
        %2897 = vmatpush1.bf16.msra.mxu0 0
        %2898 = vmatprep.subr.bf16.mxu0 0
        %2899 = vmatpush1.bf16.msra.mxu0 0
        %2900 = vmatprep.subr.bf16.mxu0 0
        %2901 = vmatpush1.bf16.msra.mxu0 0
        %2902 = vmatprep.mubr.bf16.mxu0 0
        %2903 = vmatmul.mubr.bf16.gmra.mrb[0].mxu0 %v2868
        %v2904 = vpop.f32.mrb[0].mxu0
        %v2905 = vadd.f32 0.0, %v2904
        %v2906 = vpop.f32.mrb[0].mxu0
        %v2907 = vpop.f32.mrb[0].mxu0
        %v2908 = vadd.f32 0.0, %v2907
        %v2909 = vpop.f32.mrb[0].mxu0
        %2910 = vdwg.mxu0
        %v2911 = vadd.f32 %v2795, %v2905
        %v2912 = vadd.f32 %v2796, %v2908
        %s2913 = scalar_lea.vmem %s4, 32
        %v2914 = vld [vmem:[%s2913] sm:$0xf]
        %v2915 = vld [vmem:[%s2913 + $0x4] sm:$0xf]
        %v2918 = vunpack.c.l.b16 %v2914
        %v2919 = vunpack.c.l.b16 %v2915
        %v2920 = vpack.c.b16 %v2919, %v2918
        %v2922 = vsel %vm2460, %v2920, 0
        %2924 = vmatprep.subr.bf16.mxu0 0
        %2925 = vmatpush1.bf16.msra.mxu0 %v2449
        %2926 = vmatprep.subr.bf16.mxu0 0
        %2927 = vmatpush1.bf16.msra.mxu0 %v2450
        %2928 = vmatprep.subr.bf16.mxu0 0
        %2929 = vmatpush1.bf16.msra.mxu0 %v2451
        %2930 = vmatprep.subr.bf16.mxu0 0
        %2931 = vmatpush1.bf16.msra.mxu0 %v2452
        %2932 = vmatprep.subr.bf16.mxu0 0
        %2933 = vmatpush1.bf16.msra.mxu0 0
        %2934 = vmatprep.subr.bf16.mxu0 0
        %2935 = vmatpush1.bf16.msra.mxu0 0
        %2936 = vmatprep.subr.bf16.mxu0 0
        %2937 = vmatpush1.bf16.msra.mxu0 0
        %2938 = vmatprep.subr.bf16.mxu0 0
        %2939 = vmatpush1.bf16.msra.mxu0 0
        %2940 = vmatprep.subr.bf16.mxu0 0
        %2941 = vmatpush1.bf16.msra.mxu0 0
        %2942 = vmatprep.subr.bf16.mxu0 0
        %2943 = vmatpush1.bf16.msra.mxu0 0
        %2944 = vmatprep.subr.bf16.mxu0 0
        %2945 = vmatpush1.bf16.msra.mxu0 0
        %2946 = vmatprep.subr.bf16.mxu0 0
        %2947 = vmatpush1.bf16.msra.mxu0 0
        %2948 = vmatprep.subr.bf16.mxu0 0
        %2949 = vmatpush1.bf16.msra.mxu0 0
        %2950 = vmatprep.subr.bf16.mxu0 0
        %2951 = vmatpush1.bf16.msra.mxu0 0
        %2952 = vmatprep.subr.bf16.mxu0 0
        %2953 = vmatpush1.bf16.msra.mxu0 0
        %2954 = vmatprep.subr.bf16.mxu0 0
        %2955 = vmatpush1.bf16.msra.mxu0 0
        %2956 = vmatprep.mubr.bf16.mxu0 0
        %2957 = vmatmul.mubr.bf16.gmra.mrb[0].mxu0 %v2922
        %v2958 = vpop.f32.mrb[0].mxu0
        %v2959 = vadd.f32 0.0, %v2958
        %v2960 = vpop.f32.mrb[0].mxu0
        %v2961 = vpop.f32.mrb[0].mxu0
        %v2962 = vadd.f32 0.0, %v2961
        %v2963 = vpop.f32.mrb[0].mxu0
        %2964 = vdwg.mxu0
        %v2965 = vpack.c.bf16 %v2962, %v2959
        %s2966 = scalar_lea.vmem %s5, 64
        %v2967 = vld [vmem:[%s2966] sm:$0xf]
        %v2968 = vld [vmem:[%s2966 + $0x4] sm:$0xf]
        %v2969 = vld [vmem:[%s2966 + $0x8] sm:$0xf]
        %v2970 = vld [vmem:[%s2966 + $0xc] sm:$0xf]
        %v2975 = vunpack.c.l.b16 %v2967
        %v2976 = vunpack.c.l.b16 %v2968
        %v2977 = vunpack.c.l.b16 %v2969
        %v2978 = vunpack.c.l.b16 %v2970
        %v2979 = vpack.c.b16 %v2976, %v2975
        %v2980 = vpack.c.b16 %v2978, %v2977
        %v2984 = vsel %vm2580, %v2965, 0
        %2986 = vmatprep.subr.bf16.mxu0 0
        %2987 = vmatpush1.bf16.msra.mxu0 %v2979
        %2988 = vmatprep.subr.bf16.mxu0 0
        %2989 = vmatpush1.bf16.msra.mxu0 %v2980
        %2990 = vmatprep.subr.bf16.mxu0 0
        %2991 = vmatpush1.bf16.msra.mxu0 0
        %2992 = vmatprep.subr.bf16.mxu0 0
        %2993 = vmatpush1.bf16.msra.mxu0 0
        %2994 = vmatprep.subr.bf16.mxu0 0
        %2995 = vmatpush1.bf16.msra.mxu0 0
        %2996 = vmatprep.subr.bf16.mxu0 0
        %2997 = vmatpush1.bf16.msra.mxu0 0
        %2998 = vmatprep.subr.bf16.mxu0 0
        %2999 = vmatpush1.bf16.msra.mxu0 0
        %3000 = vmatprep.subr.bf16.mxu0 0
        %3001 = vmatpush1.bf16.msra.mxu0 0
        %3002 = vmatprep.subr.bf16.mxu0 0
        %3003 = vmatpush1.bf16.msra.mxu0 0
        %3004 = vmatprep.subr.bf16.mxu0 0
        %3005 = vmatpush1.bf16.msra.mxu0 0
        %3006 = vmatprep.subr.bf16.mxu0 0
        %3007 = vmatpush1.bf16.msra.mxu0 0
        %3008 = vmatprep.subr.bf16.mxu0 0
        %3009 = vmatpush1.bf16.msra.mxu0 0
        %3010 = vmatprep.subr.bf16.mxu0 0
        %3011 = vmatpush1.bf16.msra.mxu0 0
        %3012 = vmatprep.subr.bf16.mxu0 0
        %3013 = vmatpush1.bf16.msra.mxu0 0
        %3014 = vmatprep.subr.bf16.mxu0 0
        %3015 = vmatpush1.bf16.msra.mxu0 0
        %3016 = vmatprep.subr.bf16.mxu0 0
        %3017 = vmatpush1.bf16.msra.mxu0 0
        %3018 = vmatprep.mubr.bf16.mxu0 0
        %3019 = vmatmul.mubr.bf16.gmra.mrb[0].mxu0 %v2984
        %v3020 = vpop.f32.mrb[0].mxu0
        %v3021 = vadd.f32 0.0, %v3020
        %v3022 = vpop.f32.mrb[0].mxu0
        %v3023 = vpop.f32.mrb[0].mxu0
        %v3024 = vadd.f32 0.0, %v3023
        %v3025 = vpop.f32.mrb[0].mxu0
        %3026 = vdwg.mxu0
        %v3027 = vadd.f32 %v2911, %v3021
        %v3028 = vadd.f32 %v2912, %v3024
        %s3029 = scalar_lea.vmem %s4, 40
        %v3030 = vld [vmem:[%s3029] sm:$0xf]
        %v3031 = vld [vmem:[%s3029 + $0x4] sm:$0xf]
        %v3034 = vunpack.c.l.b16 %v3030
        %v3035 = vunpack.c.l.b16 %v3031
        %v3036 = vpack.c.b16 %v3035, %v3034
        %v3038 = vsel %vm2460, %v3036, 0
        %3040 = vmatprep.subr.bf16.mxu0 0
        %3041 = vmatpush1.bf16.msra.mxu0 %v2449
        %3042 = vmatprep.subr.bf16.mxu0 0
        %3043 = vmatpush1.bf16.msra.mxu0 %v2450
        %3044 = vmatprep.subr.bf16.mxu0 0
        %3045 = vmatpush1.bf16.msra.mxu0 %v2451
        %3046 = vmatprep.subr.bf16.mxu0 0
        %3047 = vmatpush1.bf16.msra.mxu0 %v2452
        %3048 = vmatprep.subr.bf16.mxu0 0
        %3049 = vmatpush1.bf16.msra.mxu0 0
        %3050 = vmatprep.subr.bf16.mxu0 0
        %3051 = vmatpush1.bf16.msra.mxu0 0
        %3052 = vmatprep.subr.bf16.mxu0 0
        %3053 = vmatpush1.bf16.msra.mxu0 0
        %3054 = vmatprep.subr.bf16.mxu0 0
        %3055 = vmatpush1.bf16.msra.mxu0 0
        %3056 = vmatprep.subr.bf16.mxu0 0
        %3057 = vmatpush1.bf16.msra.mxu0 0
        %3058 = vmatprep.subr.bf16.mxu0 0
        %3059 = vmatpush1.bf16.msra.mxu0 0
        %3060 = vmatprep.subr.bf16.mxu0 0
        %3061 = vmatpush1.bf16.msra.mxu0 0
        %3062 = vmatprep.subr.bf16.mxu0 0
        %3063 = vmatpush1.bf16.msra.mxu0 0
        %3064 = vmatprep.subr.bf16.mxu0 0
        %3065 = vmatpush1.bf16.msra.mxu0 0
        %3066 = vmatprep.subr.bf16.mxu0 0
        %3067 = vmatpush1.bf16.msra.mxu0 0
        %3068 = vmatprep.subr.bf16.mxu0 0
        %3069 = vmatpush1.bf16.msra.mxu0 0
        %3070 = vmatprep.subr.bf16.mxu0 0
        %3071 = vmatpush1.bf16.msra.mxu0 0
        %3072 = vmatprep.mubr.bf16.mxu0 0
        %3073 = vmatmul.mubr.bf16.gmra.mrb[0].mxu0 %v3038
        %v3074 = vpop.f32.mrb[0].mxu0
        %v3075 = vadd.f32 0.0, %v3074
        %v3076 = vpop.f32.mrb[0].mxu0
        %v3077 = vpop.f32.mrb[0].mxu0
        %v3078 = vadd.f32 0.0, %v3077
        %v3079 = vpop.f32.mrb[0].mxu0
        %3080 = vdwg.mxu0
        %v3081 = vpack.c.bf16 %v3078, %v3075
        %s3082 = scalar_lea.vmem %s5, 80
        %v3083 = vld [vmem:[%s3082] sm:$0xf]
        %v3084 = vld [vmem:[%s3082 + $0x4] sm:$0xf]
        %v3085 = vld [vmem:[%s3082 + $0x8] sm:$0xf]
        %v3086 = vld [vmem:[%s3082 + $0xc] sm:$0xf]
        %v3091 = vunpack.c.l.b16 %v3083
        %v3092 = vunpack.c.l.b16 %v3084
        %v3093 = vunpack.c.l.b16 %v3085
        %v3094 = vunpack.c.l.b16 %v3086
        %v3095 = vpack.c.b16 %v3092, %v3091
        %v3096 = vpack.c.b16 %v3094, %v3093
        %v3100 = vsel %vm2580, %v3081, 0
        %3102 = vmatprep.subr.bf16.mxu0 0
        %3103 = vmatpush1.bf16.msra.mxu0 %v3095
        %3104 = vmatprep.subr.bf16.mxu0 0
        %3105 = vmatpush1.bf16.msra.mxu0 %v3096
        %3106 = vmatprep.subr.bf16.mxu0 0
        %3107 = vmatpush1.bf16.msra.mxu0 0
        %3108 = vmatprep.subr.bf16.mxu0 0
        %3109 = vmatpush1.bf16.msra.mxu0 0
        %3110 = vmatprep.subr.bf16.mxu0 0
        %3111 = vmatpush1.bf16.msra.mxu0 0
        %3112 = vmatprep.subr.bf16.mxu0 0
        %3113 = vmatpush1.bf16.msra.mxu0 0
        %3114 = vmatprep.subr.bf16.mxu0 0
        %3115 = vmatpush1.bf16.msra.mxu0 0
        %3116 = vmatprep.subr.bf16.mxu0 0
        %3117 = vmatpush1.bf16.msra.mxu0 0
        %3118 = vmatprep.subr.bf16.mxu0 0
        %3119 = vmatpush1.bf16.msra.mxu0 0
        %3120 = vmatprep.subr.bf16.mxu0 0
        %3121 = vmatpush1.bf16.msra.mxu0 0
        %3122 = vmatprep.subr.bf16.mxu0 0
        %3123 = vmatpush1.bf16.msra.mxu0 0
        %3124 = vmatprep.subr.bf16.mxu0 0
        %3125 = vmatpush1.bf16.msra.mxu0 0
        %3126 = vmatprep.subr.bf16.mxu0 0
        %3127 = vmatpush1.bf16.msra.mxu0 0
        %3128 = vmatprep.subr.bf16.mxu0 0
        %3129 = vmatpush1.bf16.msra.mxu0 0
        %3130 = vmatprep.subr.bf16.mxu0 0
        %3131 = vmatpush1.bf16.msra.mxu0 0
        %3132 = vmatprep.subr.bf16.mxu0 0
        %3133 = vmatpush1.bf16.msra.mxu0 0
        %3134 = vmatprep.mubr.bf16.mxu0 0
        %3135 = vmatmul.mubr.bf16.gmra.mrb[0].mxu0 %v3100
        %v3136 = vpop.f32.mrb[0].mxu0
        %v3137 = vadd.f32 0.0, %v3136
        %v3138 = vpop.f32.mrb[0].mxu0
        %v3139 = vpop.f32.mrb[0].mxu0
        %v3140 = vadd.f32 0.0, %v3139
        %v3141 = vpop.f32.mrb[0].mxu0
        %3142 = vdwg.mxu0
        %v3143 = vadd.f32 %v3027, %v3137
        %v3144 = vadd.f32 %v3028, %v3140
        %s3145 = scalar_lea.vmem %s4, 48
        %v3146 = vld [vmem:[%s3145] sm:$0xf]
        %v3147 = vld [vmem:[%s3145 + $0x4] sm:$0xf]
        %v3150 = vunpack.c.l.b16 %v3146
        %v3151 = vunpack.c.l.b16 %v3147
        %v3152 = vpack.c.b16 %v3151, %v3150
        %v3154 = vsel %vm2460, %v3152, 0
        %3156 = vmatprep.subr.bf16.mxu0 0
        %3157 = vmatpush1.bf16.msra.mxu0 %v2449
        %3158 = vmatprep.subr.bf16.mxu0 0
        %3159 = vmatpush1.bf16.msra.mxu0 %v2450
        %3160 = vmatprep.subr.bf16.mxu0 0
        %3161 = vmatpush1.bf16.msra.mxu0 %v2451
        %3162 = vmatprep.subr.bf16.mxu0 0
        %3163 = vmatpush1.bf16.msra.mxu0 %v2452
        %3164 = vmatprep.subr.bf16.mxu0 0
        %3165 = vmatpush1.bf16.msra.mxu0 0
        %3166 = vmatprep.subr.bf16.mxu0 0
        %3167 = vmatpush1.bf16.msra.mxu0 0
        %3168 = vmatprep.subr.bf16.mxu0 0
        %3169 = vmatpush1.bf16.msra.mxu0 0
        %3170 = vmatprep.subr.bf16.mxu0 0
        %3171 = vmatpush1.bf16.msra.mxu0 0
        %3172 = vmatprep.subr.bf16.mxu0 0
        %3173 = vmatpush1.bf16.msra.mxu0 0
        %3174 = vmatprep.subr.bf16.mxu0 0
        %3175 = vmatpush1.bf16.msra.mxu0 0
        %3176 = vmatprep.subr.bf16.mxu0 0
        %3177 = vmatpush1.bf16.msra.mxu0 0
        %3178 = vmatprep.subr.bf16.mxu0 0
        %3179 = vmatpush1.bf16.msra.mxu0 0
        %3180 = vmatprep.subr.bf16.mxu0 0
        %3181 = vmatpush1.bf16.msra.mxu0 0
        %3182 = vmatprep.subr.bf16.mxu0 0
        %3183 = vmatpush1.bf16.msra.mxu0 0
        %3184 = vmatprep.subr.bf16.mxu0 0
        %3185 = vmatpush1.bf16.msra.mxu0 0
        %3186 = vmatprep.subr.bf16.mxu0 0
        %3187 = vmatpush1.bf16.msra.mxu0 0
        %3188 = vmatprep.mubr.bf16.mxu0 0
        %3189 = vmatmul.mubr.bf16.gmra.mrb[0].mxu0 %v3154
        %v3190 = vpop.f32.mrb[0].mxu0
        %v3191 = vadd.f32 0.0, %v3190
        %v3192 = vpop.f32.mrb[0].mxu0
        %v3193 = vpop.f32.mrb[0].mxu0
        %v3194 = vadd.f32 0.0, %v3193
        %v3195 = vpop.f32.mrb[0].mxu0
        %3196 = vdwg.mxu0
        %v3197 = vpack.c.bf16 %v3194, %v3191
        %s3198 = scalar_lea.vmem %s5, 96
        %v3199 = vld [vmem:[%s3198] sm:$0xf]
        %v3200 = vld [vmem:[%s3198 + $0x4] sm:$0xf]
        %v3201 = vld [vmem:[%s3198 + $0x8] sm:$0xf]
        %v3202 = vld [vmem:[%s3198 + $0xc] sm:$0xf]
        %v3207 = vunpack.c.l.b16 %v3199
        %v3208 = vunpack.c.l.b16 %v3200
        %v3209 = vunpack.c.l.b16 %v3201
        %v3210 = vunpack.c.l.b16 %v3202
        %v3211 = vpack.c.b16 %v3208, %v3207
        %v3212 = vpack.c.b16 %v3210, %v3209
        %v3216 = vsel %vm2580, %v3197, 0
        %3218 = vmatprep.subr.bf16.mxu0 0
        %3219 = vmatpush1.bf16.msra.mxu0 %v3211
        %3220 = vmatprep.subr.bf16.mxu0 0
        %3221 = vmatpush1.bf16.msra.mxu0 %v3212
        %3222 = vmatprep.subr.bf16.mxu0 0
        %3223 = vmatpush1.bf16.msra.mxu0 0
        %3224 = vmatprep.subr.bf16.mxu0 0
        %3225 = vmatpush1.bf16.msra.mxu0 0
        %3226 = vmatprep.subr.bf16.mxu0 0
        %3227 = vmatpush1.bf16.msra.mxu0 0
        %3228 = vmatprep.subr.bf16.mxu0 0
        %3229 = vmatpush1.bf16.msra.mxu0 0
        %3230 = vmatprep.subr.bf16.mxu0 0
        %3231 = vmatpush1.bf16.msra.mxu0 0
        %3232 = vmatprep.subr.bf16.mxu0 0
        %3233 = vmatpush1.bf16.msra.mxu0 0
        %3234 = vmatprep.subr.bf16.mxu0 0
        %3235 = vmatpush1.bf16.msra.mxu0 0
        %3236 = vmatprep.subr.bf16.mxu0 0
        %3237 = vmatpush1.bf16.msra.mxu0 0
        %3238 = vmatprep.subr.bf16.mxu0 0
        %3239 = vmatpush1.bf16.msra.mxu0 0
        %3240 = vmatprep.subr.bf16.mxu0 0
        %3241 = vmatpush1.bf16.msra.mxu0 0
        %3242 = vmatprep.subr.bf16.mxu0 0
        %3243 = vmatpush1.bf16.msra.mxu0 0
        %3244 = vmatprep.subr.bf16.mxu0 0
        %3245 = vmatpush1.bf16.msra.mxu0 0
        %3246 = vmatprep.subr.bf16.mxu0 0
        %3247 = vmatpush1.bf16.msra.mxu0 0
        %3248 = vmatprep.subr.bf16.mxu0 0
        %3249 = vmatpush1.bf16.msra.mxu0 0
        %3250 = vmatprep.mubr.bf16.mxu0 0
        %3251 = vmatmul.mubr.bf16.gmra.mrb[0].mxu0 %v3216
        %v3252 = vpop.f32.mrb[0].mxu0
        %v3253 = vadd.f32 0.0, %v3252
        %v3254 = vpop.f32.mrb[0].mxu0
        %v3255 = vpop.f32.mrb[0].mxu0
        %v3256 = vadd.f32 0.0, %v3255
        %v3257 = vpop.f32.mrb[0].mxu0
        %3258 = vdwg.mxu0
        %v3259 = vadd.f32 %v3143, %v3253
        %v3260 = vadd.f32 %v3144, %v3256
        %s3261 = scalar_lea.vmem %s4, 56
        %v3262 = vld [vmem:[%s3261] sm:$0xf]
        %v3263 = vld [vmem:[%s3261 + $0x4] sm:$0xf]
        %v3266 = vunpack.c.l.b16 %v3262
        %v3267 = vunpack.c.l.b16 %v3263
        %v3268 = vpack.c.b16 %v3267, %v3266
        %v3270 = vsel %vm2460, %v3268, 0
        %3272 = vmatprep.subr.bf16.mxu0 0
        %3273 = vmatpush1.bf16.msra.mxu0 %v2449
        %3274 = vmatprep.subr.bf16.mxu0 0
        %3275 = vmatpush1.bf16.msra.mxu0 %v2450
        %3276 = vmatprep.subr.bf16.mxu0 0
        %3277 = vmatpush1.bf16.msra.mxu0 %v2451
        %3278 = vmatprep.subr.bf16.mxu0 0
        %3279 = vmatpush1.bf16.msra.mxu0 %v2452
        %3280 = vmatprep.subr.bf16.mxu0 0
        %3281 = vmatpush1.bf16.msra.mxu0 0
        %3282 = vmatprep.subr.bf16.mxu0 0
        %3283 = vmatpush1.bf16.msra.mxu0 0
        %3284 = vmatprep.subr.bf16.mxu0 0
        %3285 = vmatpush1.bf16.msra.mxu0 0
        %3286 = vmatprep.subr.bf16.mxu0 0
        %3287 = vmatpush1.bf16.msra.mxu0 0
        %3288 = vmatprep.subr.bf16.mxu0 0
        %3289 = vmatpush1.bf16.msra.mxu0 0
        %3290 = vmatprep.subr.bf16.mxu0 0
        %3291 = vmatpush1.bf16.msra.mxu0 0
        %3292 = vmatprep.subr.bf16.mxu0 0
        %3293 = vmatpush1.bf16.msra.mxu0 0
        %3294 = vmatprep.subr.bf16.mxu0 0
        %3295 = vmatpush1.bf16.msra.mxu0 0
        %3296 = vmatprep.subr.bf16.mxu0 0
        %3297 = vmatpush1.bf16.msra.mxu0 0
        %3298 = vmatprep.subr.bf16.mxu0 0
        %3299 = vmatpush1.bf16.msra.mxu0 0
        %3300 = vmatprep.subr.bf16.mxu0 0
        %3301 = vmatpush1.bf16.msra.mxu0 0
        %3302 = vmatprep.subr.bf16.mxu0 0
        %3303 = vmatpush1.bf16.msra.mxu0 0
        %3304 = vmatprep.mubr.bf16.mxu0 0
        %3305 = vmatmul.mubr.bf16.gmra.mrb[0].mxu0 %v3270
        %v3306 = vpop.f32.mrb[0].mxu0
        %v3307 = vadd.f32 0.0, %v3306
        %v3308 = vpop.f32.mrb[0].mxu0
        %v3309 = vpop.f32.mrb[0].mxu0
        %v3310 = vadd.f32 0.0, %v3309
        %v3311 = vpop.f32.mrb[0].mxu0
        %3312 = vdwg.mxu0
        %v3313 = vpack.c.bf16 %v3310, %v3307
        %s3314 = scalar_lea.vmem %s5, 112
        %v3315 = vld [vmem:[%s3314] sm:$0xf]
        %v3316 = vld [vmem:[%s3314 + $0x4] sm:$0xf]
        %v3317 = vld [vmem:[%s3314 + $0x8] sm:$0xf]
        %v3318 = vld [vmem:[%s3314 + $0xc] sm:$0xf]
        %v3323 = vunpack.c.l.b16 %v3315
        %v3324 = vunpack.c.l.b16 %v3316
        %v3325 = vunpack.c.l.b16 %v3317
        %v3326 = vunpack.c.l.b16 %v3318
        %v3327 = vpack.c.b16 %v3324, %v3323
        %v3328 = vpack.c.b16 %v3326, %v3325
        %v3332 = vsel %vm2580, %v3313, 0
        %3334 = vmatprep.subr.bf16.mxu0 0
        %3335 = vmatpush1.bf16.msra.mxu0 %v3327
        %3336 = vmatprep.subr.bf16.mxu0 0
        %3337 = vmatpush1.bf16.msra.mxu0 %v3328
        %3338 = vmatprep.subr.bf16.mxu0 0
        %3339 = vmatpush1.bf16.msra.mxu0 0
        %3340 = vmatprep.subr.bf16.mxu0 0
        %3341 = vmatpush1.bf16.msra.mxu0 0
        %3342 = vmatprep.subr.bf16.mxu0 0
        %3343 = vmatpush1.bf16.msra.mxu0 0
        %3344 = vmatprep.subr.bf16.mxu0 0
        %3345 = vmatpush1.bf16.msra.mxu0 0
        %3346 = vmatprep.subr.bf16.mxu0 0
        %3347 = vmatpush1.bf16.msra.mxu0 0
        %3348 = vmatprep.subr.bf16.mxu0 0
        %3349 = vmatpush1.bf16.msra.mxu0 0
        %3350 = vmatprep.subr.bf16.mxu0 0
        %3351 = vmatpush1.bf16.msra.mxu0 0
        %3352 = vmatprep.subr.bf16.mxu0 0
        %3353 = vmatpush1.bf16.msra.mxu0 0
        %3354 = vmatprep.subr.bf16.mxu0 0
        %3355 = vmatpush1.bf16.msra.mxu0 0
        %3356 = vmatprep.subr.bf16.mxu0 0
        %3357 = vmatpush1.bf16.msra.mxu0 0
        %3358 = vmatprep.subr.bf16.mxu0 0
        %3359 = vmatpush1.bf16.msra.mxu0 0
        %3360 = vmatprep.subr.bf16.mxu0 0
        %3361 = vmatpush1.bf16.msra.mxu0 0
        %3362 = vmatprep.subr.bf16.mxu0 0
        %3363 = vmatpush1.bf16.msra.mxu0 0
        %3364 = vmatprep.subr.bf16.mxu0 0
        %3365 = vmatpush1.bf16.msra.mxu0 0
        %3366 = vmatprep.mubr.bf16.mxu0 0
        %3367 = vmatmul.mubr.bf16.gmra.mrb[0].mxu0 %v3332
        %v3368 = vpop.f32.mrb[0].mxu0
        %v3369 = vadd.f32 0.0, %v3368
        %v3370 = vpop.f32.mrb[0].mxu0
        %v3371 = vpop.f32.mrb[0].mxu0
        %v3372 = vadd.f32 0.0, %v3371
        %v3373 = vpop.f32.mrb[0].mxu0
        %3374 = vdwg.mxu0
        %v3375 = vadd.f32 %v3259, %v3369
        %v3376 = vadd.f32 %v3260, %v3372
        %s3377 = scalar_lea.vmem %s4, 64
        %v3378 = vld [vmem:[%s3377] sm:$0xf]
        %v3379 = vld [vmem:[%s3377 + $0x4] sm:$0xf]
        %v3382 = vunpack.c.l.b16 %v3378
        %v3383 = vunpack.c.l.b16 %v3379
        %v3384 = vpack.c.b16 %v3383, %v3382
        %v3386 = vsel %vm2460, %v3384, 0
        %3388 = vmatprep.subr.bf16.mxu0 0
        %3389 = vmatpush1.bf16.msra.mxu0 %v2449
        %3390 = vmatprep.subr.bf16.mxu0 0
        %3391 = vmatpush1.bf16.msra.mxu0 %v2450
        %3392 = vmatprep.subr.bf16.mxu0 0
        %3393 = vmatpush1.bf16.msra.mxu0 %v2451
        %3394 = vmatprep.subr.bf16.mxu0 0
        %3395 = vmatpush1.bf16.msra.mxu0 %v2452
        %3396 = vmatprep.subr.bf16.mxu0 0
        %3397 = vmatpush1.bf16.msra.mxu0 0
        %3398 = vmatprep.subr.bf16.mxu0 0
        %3399 = vmatpush1.bf16.msra.mxu0 0
        %3400 = vmatprep.subr.bf16.mxu0 0
        %3401 = vmatpush1.bf16.msra.mxu0 0
        %3402 = vmatprep.subr.bf16.mxu0 0
        %3403 = vmatpush1.bf16.msra.mxu0 0
        %3404 = vmatprep.subr.bf16.mxu0 0
        %3405 = vmatpush1.bf16.msra.mxu0 0
        %3406 = vmatprep.subr.bf16.mxu0 0
        %3407 = vmatpush1.bf16.msra.mxu0 0
        %3408 = vmatprep.subr.bf16.mxu0 0
        %3409 = vmatpush1.bf16.msra.mxu0 0
        %3410 = vmatprep.subr.bf16.mxu0 0
        %3411 = vmatpush1.bf16.msra.mxu0 0
        %3412 = vmatprep.subr.bf16.mxu0 0
        %3413 = vmatpush1.bf16.msra.mxu0 0
        %3414 = vmatprep.subr.bf16.mxu0 0
        %3415 = vmatpush1.bf16.msra.mxu0 0
        %3416 = vmatprep.subr.bf16.mxu0 0
        %3417 = vmatpush1.bf16.msra.mxu0 0
        %3418 = vmatprep.subr.bf16.mxu0 0
        %3419 = vmatpush1.bf16.msra.mxu0 0
        %3420 = vmatprep.mubr.bf16.mxu0 0
        %3421 = vmatmul.mubr.bf16.gmra.mrb[0].mxu0 %v3386
        %v3422 = vpop.f32.mrb[0].mxu0
        %v3423 = vadd.f32 0.0, %v3422
        %v3424 = vpop.f32.mrb[0].mxu0
        %v3425 = vpop.f32.mrb[0].mxu0
        %v3426 = vadd.f32 0.0, %v3425
        %v3427 = vpop.f32.mrb[0].mxu0
        %3428 = vdwg.mxu0
        %v3429 = vpack.c.bf16 %v3426, %v3423
        %s3430 = scalar_lea.vmem %s5, 128
        %v3431 = vld [vmem:[%s3430] sm:$0xf]
        %v3432 = vld [vmem:[%s3430 + $0x4] sm:$0xf]
        %v3433 = vld [vmem:[%s3430 + $0x8] sm:$0xf]
        %v3434 = vld [vmem:[%s3430 + $0xc] sm:$0xf]
        %v3439 = vunpack.c.l.b16 %v3431
        %v3440 = vunpack.c.l.b16 %v3432
        %v3441 = vunpack.c.l.b16 %v3433
        %v3442 = vunpack.c.l.b16 %v3434
        %v3443 = vpack.c.b16 %v3440, %v3439
        %v3444 = vpack.c.b16 %v3442, %v3441
        %v3448 = vsel %vm2580, %v3429, 0
        %3450 = vmatprep.subr.bf16.mxu0 0
        %3451 = vmatpush1.bf16.msra.mxu0 %v3443
        %3452 = vmatprep.subr.bf16.mxu0 0
        %3453 = vmatpush1.bf16.msra.mxu0 %v3444
        %3454 = vmatprep.subr.bf16.mxu0 0
        %3455 = vmatpush1.bf16.msra.mxu0 0
        %3456 = vmatprep.subr.bf16.mxu0 0
        %3457 = vmatpush1.bf16.msra.mxu0 0
        %3458 = vmatprep.subr.bf16.mxu0 0
        %3459 = vmatpush1.bf16.msra.mxu0 0
        %3460 = vmatprep.subr.bf16.mxu0 0
        %3461 = vmatpush1.bf16.msra.mxu0 0
        %3462 = vmatprep.subr.bf16.mxu0 0
        %3463 = vmatpush1.bf16.msra.mxu0 0
        %3464 = vmatprep.subr.bf16.mxu0 0
        %3465 = vmatpush1.bf16.msra.mxu0 0
        %3466 = vmatprep.subr.bf16.mxu0 0
        %3467 = vmatpush1.bf16.msra.mxu0 0
        %3468 = vmatprep.subr.bf16.mxu0 0
        %3469 = vmatpush1.bf16.msra.mxu0 0
        %3470 = vmatprep.subr.bf16.mxu0 0
        %3471 = vmatpush1.bf16.msra.mxu0 0
        %3472 = vmatprep.subr.bf16.mxu0 0
        %3473 = vmatpush1.bf16.msra.mxu0 0
        %3474 = vmatprep.subr.bf16.mxu0 0
        %3475 = vmatpush1.bf16.msra.mxu0 0
        %3476 = vmatprep.subr.bf16.mxu0 0
        %3477 = vmatpush1.bf16.msra.mxu0 0
        %3478 = vmatprep.subr.bf16.mxu0 0
        %3479 = vmatpush1.bf16.msra.mxu0 0
        %3480 = vmatprep.subr.bf16.mxu0 0
        %3481 = vmatpush1.bf16.msra.mxu0 0
        %3482 = vmatprep.mubr.bf16.mxu0 0
        %3483 = vmatmul.mubr.bf16.gmra.mrb[0].mxu0 %v3448
        %v3484 = vpop.f32.mrb[0].mxu0
        %v3485 = vadd.f32 0.0, %v3484
        %v3486 = vpop.f32.mrb[0].mxu0
        %v3487 = vpop.f32.mrb[0].mxu0
        %v3488 = vadd.f32 0.0, %v3487
        %v3489 = vpop.f32.mrb[0].mxu0
        %3490 = vdwg.mxu0
        %v3491 = vadd.f32 %v3375, %v3485
        %v3492 = vadd.f32 %v3376, %v3488
        %v3493 = vld [vmem:[%s6] sm:$0x1]
        %v3495 = vlaneseq
        %v3496 = vshrl.u32 %v3495, 7
        %v3497 = vsub.s32 0, %v3496
        %v3498 = vrot.slane %v3493, %v3497
        %v3500 = vadd.f32 %v3491, %v3498
        %v3501 = vadd.f32 %v3492, %v3498
        %v3502 = vmax.f32 %v3500, 0.0
        %v3503 = vmax.f32 %v3501, 0.0
        %v3504 = vpack.c.bf16 %v3503, %v3502
        %v3505 = vld [vmem:[%s7] sm:$0x3]
        %vm3506 = vcmask 130048
        %v3508 = vsel %vm3506, %v3505, 0
        %3510 = vmatprep.subr.bf16.mxu0 0
        %3511 = vmatpush1.bf16.msra.mxu0 %v3504
        %3512 = vmatprep.subr.bf16.mxu0 0
        %3513 = vmatpush1.bf16.msra.mxu0 0
        %3514 = vmatprep.subr.bf16.mxu0 0
        %3515 = vmatpush1.bf16.msra.mxu0 0
        %3516 = vmatprep.subr.bf16.mxu0 0
        %3517 = vmatpush1.bf16.msra.mxu0 0
        %3518 = vmatprep.subr.bf16.mxu0 0
        %3519 = vmatpush1.bf16.msra.mxu0 0
        %3520 = vmatprep.subr.bf16.mxu0 0
        %3521 = vmatpush1.bf16.msra.mxu0 0
        %3522 = vmatprep.subr.bf16.mxu0 0
        %3523 = vmatpush1.bf16.msra.mxu0 0
        %3524 = vmatprep.subr.bf16.mxu0 0
        %3525 = vmatpush1.bf16.msra.mxu0 0
        %3526 = vmatprep.subr.bf16.mxu0 0
        %3527 = vmatpush1.bf16.msra.mxu0 0
        %3528 = vmatprep.subr.bf16.mxu0 0
        %3529 = vmatpush1.bf16.msra.mxu0 0
        %3530 = vmatprep.subr.bf16.mxu0 0
        %3531 = vmatpush1.bf16.msra.mxu0 0
        %3532 = vmatprep.subr.bf16.mxu0 0
        %3533 = vmatpush1.bf16.msra.mxu0 0
        %3534 = vmatprep.subr.bf16.mxu0 0
        %3535 = vmatpush1.bf16.msra.mxu0 0
        %3536 = vmatprep.subr.bf16.mxu0 0
        %3537 = vmatpush1.bf16.msra.mxu0 0
        %3538 = vmatprep.subr.bf16.mxu0 0
        %3539 = vmatpush1.bf16.msra.mxu0 0
        %3540 = vmatprep.subr.bf16.mxu0 0
        %3541 = vmatpush1.bf16.msra.mxu0 0
        %3542 = vmatprep.mubr.bf16.mxu0 0
        %3543 = vmatmul.mubr.bf16.gmra.mrb[0].mxu0 %v3508
        %v3544 = vpop.f32.mrb[0].mxu0
        %v3545 = vadd.f32 0.0, %v3544
        %v3546 = vpop.f32.mrb[0].mxu0
        %v3547 = vpop.f32.mrb[0].mxu0
        %v3548 = vpop.f32.mrb[0].mxu0
        %3549 = vdwg.mxu0
        %v3550 = vpack.c.bf16 %v3545, %v3545
        %v3551 = vld [vmem:[%s8] sm:$0xf]
        %v3552 = vld [vmem:[%s8 + $0x4] sm:$0xf]
        %v3553 = vld [vmem:[%s8 + $0x8] sm:$0xf]
        %v3554 = vld [vmem:[%s8 + $0xc] sm:$0xf]
        %v3555 = vld [vmem:[%s8 + $0x10] sm:$0xf]
        %v3556 = vld [vmem:[%s8 + $0x14] sm:$0xf]
        %v3557 = vld [vmem:[%s8 + $0x18] sm:$0xf]
        %v3558 = vld [vmem:[%s8 + $0x1c] sm:$0xf]
        %s3559 = scalar_lea.vmem %s7, 2
        %v3560 = vld [vmem:[%s3559] sm:$0x3]
        %v3562 = vsel %vm3506, %v3560, 0
        %3564 = vmatprep.subr.bf16.mxu0 0
        %3565 = vmatpush1.bf16.msra.mxu0 %v3504
        %3566 = vmatprep.subr.bf16.mxu0 0
        %3567 = vmatpush1.bf16.msra.mxu0 0
        %3568 = vmatprep.subr.bf16.mxu0 0
        %3569 = vmatpush1.bf16.msra.mxu0 0
        %3570 = vmatprep.subr.bf16.mxu0 0
        %3571 = vmatpush1.bf16.msra.mxu0 0
        %3572 = vmatprep.subr.bf16.mxu0 0
        %3573 = vmatpush1.bf16.msra.mxu0 0
        %3574 = vmatprep.subr.bf16.mxu0 0
        %3575 = vmatpush1.bf16.msra.mxu0 0
        %3576 = vmatprep.subr.bf16.mxu0 0
        %3577 = vmatpush1.bf16.msra.mxu0 0
        %3578 = vmatprep.subr.bf16.mxu0 0
        %3579 = vmatpush1.bf16.msra.mxu0 0
        %3580 = vmatprep.subr.bf16.mxu0 0
        %3581 = vmatpush1.bf16.msra.mxu0 0
        %3582 = vmatprep.subr.bf16.mxu0 0
        %3583 = vmatpush1.bf16.msra.mxu0 0
        %3584 = vmatprep.subr.bf16.mxu0 0
        %3585 = vmatpush1.bf16.msra.mxu0 0
        %3586 = vmatprep.subr.bf16.mxu0 0
        %3587 = vmatpush1.bf16.msra.mxu0 0
        %3588 = vmatprep.subr.bf16.mxu0 0
        %3589 = vmatpush1.bf16.msra.mxu0 0
        %3590 = vmatprep.subr.bf16.mxu0 0
        %3591 = vmatpush1.bf16.msra.mxu0 0
        %3592 = vmatprep.subr.bf16.mxu0 0
        %3593 = vmatpush1.bf16.msra.mxu0 0
        %3594 = vmatprep.subr.bf16.mxu0 0
        %3595 = vmatpush1.bf16.msra.mxu0 0
        %3596 = vmatprep.mubr.bf16.mxu0 0
        %3597 = vmatmul.mubr.bf16.gmra.mrb[0].mxu0 %v3562
        %v3598 = vpop.f32.mrb[0].mxu0
        %v3599 = vadd.f32 0.0, %v3598
        %v3600 = vpop.f32.mrb[0].mxu0
        %v3601 = vpop.f32.mrb[0].mxu0
        %v3602 = vpop.f32.mrb[0].mxu0
        %3603 = vdwg.mxu0
        %v3604 = vpack.c.bf16 %v3599, %v3599
        %s3605 = scalar_lea.vmem %s8, 32
        %v3606 = vld [vmem:[%s3605] sm:$0xf]
        %v3607 = vld [vmem:[%s3605 + $0x4] sm:$0xf]
        %v3608 = vld [vmem:[%s3605 + $0x8] sm:$0xf]
        %v3609 = vld [vmem:[%s3605 + $0xc] sm:$0xf]
        %v3610 = vld [vmem:[%s3605 + $0x10] sm:$0xf]
        %v3611 = vld [vmem:[%s3605 + $0x14] sm:$0xf]
        %v3612 = vld [vmem:[%s3605 + $0x18] sm:$0xf]
        %v3613 = vld [vmem:[%s3605 + $0x1c] sm:$0xf]
        %v3622 = vunpack.c.l.b16 %v3606
        %v3623 = vunpack.c.l.b16 %v3607
        %v3624 = vunpack.c.l.b16 %v3608
        %v3625 = vunpack.c.l.b16 %v3609
        %v3626 = vunpack.c.l.b16 %v3610
        %v3627 = vunpack.c.l.b16 %v3611
        %v3628 = vunpack.c.l.b16 %v3612
        %v3629 = vunpack.c.l.b16 %v3613
        %v3630 = vpack.c.b16 %v3623, %v3622
        %v3631 = vpack.c.b16 %v3625, %v3624
        %v3632 = vpack.c.b16 %v3627, %v3626
        %v3633 = vpack.c.b16 %v3629, %v3628
        %v3639 = vsel %vm2460, %v3604, 0
        %3641 = vmatprep.subr.bf16.mxu0 0
        %3642 = vmatpush1.bf16.msra.mxu0 %v3630
        %3643 = vmatprep.subr.bf16.mxu0 0
        %3644 = vmatpush1.bf16.msra.mxu0 %v3631
        %3645 = vmatprep.subr.bf16.mxu0 0
        %3646 = vmatpush1.bf16.msra.mxu0 %v3632
        %3647 = vmatprep.subr.bf16.mxu0 0
        %3648 = vmatpush1.bf16.msra.mxu0 %v3633
        %3649 = vmatprep.subr.bf16.mxu0 0
        %3650 = vmatpush1.bf16.msra.mxu0 0
        %3651 = vmatprep.subr.bf16.mxu0 0
        %3652 = vmatpush1.bf16.msra.mxu0 0
        %3653 = vmatprep.subr.bf16.mxu0 0
        %3654 = vmatpush1.bf16.msra.mxu0 0
        %3655 = vmatprep.subr.bf16.mxu0 0
        %3656 = vmatpush1.bf16.msra.mxu0 0
        %3657 = vmatprep.subr.bf16.mxu0 0
        %3658 = vmatpush1.bf16.msra.mxu0 0
        %3659 = vmatprep.subr.bf16.mxu0 0
        %3660 = vmatpush1.bf16.msra.mxu0 0
        %3661 = vmatprep.subr.bf16.mxu0 0
        %3662 = vmatpush1.bf16.msra.mxu0 0
        %3663 = vmatprep.subr.bf16.mxu0 0
        %3664 = vmatpush1.bf16.msra.mxu0 0
        %3665 = vmatprep.subr.bf16.mxu0 0
        %3666 = vmatpush1.bf16.msra.mxu0 0
        %3667 = vmatprep.subr.bf16.mxu0 0
        %3668 = vmatpush1.bf16.msra.mxu0 0
        %3669 = vmatprep.subr.bf16.mxu0 0
        %3670 = vmatpush1.bf16.msra.mxu0 0
        %3671 = vmatprep.subr.bf16.mxu0 0
        %3672 = vmatpush1.bf16.msra.mxu0 0
        %3673 = vmatprep.mubr.bf16.mxu0 0
        %3674 = vmatmul.mubr.bf16.gmra.mrb[0].mxu0 %v3639
        %v3675 = vpop.f32.mrb[0].mxu0
        %v3676 = vadd.f32 0.0, %v3675
        %v3677 = vpop.f32.mrb[0].mxu0
        %v3678 = vpop.f32.mrb[0].mxu0
        %v3679 = vpop.f32.mrb[0].mxu0
        %3680 = vdwg.mxu0
        %v3689 = vunpack.c.l.b16 %v3551
        %v3690 = vunpack.c.l.b16 %v3552
        %v3691 = vunpack.c.l.b16 %v3553
        %v3692 = vunpack.c.l.b16 %v3554
        %v3693 = vunpack.c.l.b16 %v3555
        %v3694 = vunpack.c.l.b16 %v3556
        %v3695 = vunpack.c.l.b16 %v3557
        %v3696 = vunpack.c.l.b16 %v3558
        %v3697 = vpack.c.b16 %v3690, %v3689
        %v3698 = vpack.c.b16 %v3692, %v3691
        %v3699 = vpack.c.b16 %v3694, %v3693
        %v3700 = vpack.c.b16 %v3696, %v3695
        %v3706 = vsel %vm2460, %v3550, 0
        %3708 = vmatprep.subr.bf16.mxu0 0
        %3709 = vmatpush1.bf16.msra.mxu0 %v3697
        %3710 = vmatprep.subr.bf16.mxu0 0
        %3711 = vmatpush1.bf16.msra.mxu0 %v3698
        %3712 = vmatprep.subr.bf16.mxu0 0
        %3713 = vmatpush1.bf16.msra.mxu0 %v3699
        %3714 = vmatprep.subr.bf16.mxu0 0
        %3715 = vmatpush1.bf16.msra.mxu0 %v3700
        %3716 = vmatprep.subr.bf16.mxu0 0
        %3717 = vmatpush1.bf16.msra.mxu0 0
        %3718 = vmatprep.subr.bf16.mxu0 0
        %3719 = vmatpush1.bf16.msra.mxu0 0
        %3720 = vmatprep.subr.bf16.mxu0 0
        %3721 = vmatpush1.bf16.msra.mxu0 0
        %3722 = vmatprep.subr.bf16.mxu0 0
        %3723 = vmatpush1.bf16.msra.mxu0 0
        %3724 = vmatprep.subr.bf16.mxu0 0
        %3725 = vmatpush1.bf16.msra.mxu0 0
        %3726 = vmatprep.subr.bf16.mxu0 0
        %3727 = vmatpush1.bf16.msra.mxu0 0
        %3728 = vmatprep.subr.bf16.mxu0 0
        %3729 = vmatpush1.bf16.msra.mxu0 0
        %3730 = vmatprep.subr.bf16.mxu0 0
        %3731 = vmatpush1.bf16.msra.mxu0 0
        %3732 = vmatprep.subr.bf16.mxu0 0
        %3733 = vmatpush1.bf16.msra.mxu0 0
        %3734 = vmatprep.subr.bf16.mxu0 0
        %3735 = vmatpush1.bf16.msra.mxu0 0
        %3736 = vmatprep.subr.bf16.mxu0 0
        %3737 = vmatpush1.bf16.msra.mxu0 0
        %3738 = vmatprep.subr.bf16.mxu0 0
        %3739 = vmatpush1.bf16.msra.mxu0 0
        %3740 = vmatprep.mubr.bf16.mxu0 0
        %3741 = vmatmul.mubr.bf16.gmra.mrb[0].mxu0 %v3706
        %v3742 = vpop.f32.mrb[0].mxu0
        %v3743 = vadd.f32 %v3676, %v3742
        %v3744 = vpop.f32.mrb[0].mxu0
        %v3745 = vpop.f32.mrb[0].mxu0
        %v3746 = vpop.f32.mrb[0].mxu0
        %3747 = vdwg.mxu0
        %s3748 = scalar_lea.vmem %s7, 4
        %v3749 = vld [vmem:[%s3748] sm:$0x3]
        %v3751 = vsel %vm3506, %v3749, 0
        %3753 = vmatprep.subr.bf16.mxu0 0
        %3754 = vmatpush1.bf16.msra.mxu0 %v3504
        %3755 = vmatprep.subr.bf16.mxu0 0
        %3756 = vmatpush1.bf16.msra.mxu0 0
        %3757 = vmatprep.subr.bf16.mxu0 0
        %3758 = vmatpush1.bf16.msra.mxu0 0
        %3759 = vmatprep.subr.bf16.mxu0 0
        %3760 = vmatpush1.bf16.msra.mxu0 0
        %3761 = vmatprep.subr.bf16.mxu0 0
        %3762 = vmatpush1.bf16.msra.mxu0 0
        %3763 = vmatprep.subr.bf16.mxu0 0
        %3764 = vmatpush1.bf16.msra.mxu0 0
        %3765 = vmatprep.subr.bf16.mxu0 0
        %3766 = vmatpush1.bf16.msra.mxu0 0
        %3767 = vmatprep.subr.bf16.mxu0 0
        %3768 = vmatpush1.bf16.msra.mxu0 0
        %3769 = vmatprep.subr.bf16.mxu0 0
        %3770 = vmatpush1.bf16.msra.mxu0 0
        %3771 = vmatprep.subr.bf16.mxu0 0
        %3772 = vmatpush1.bf16.msra.mxu0 0
        %3773 = vmatprep.subr.bf16.mxu0 0
        %3774 = vmatpush1.bf16.msra.mxu0 0
        %3775 = vmatprep.subr.bf16.mxu0 0
        %3776 = vmatpush1.bf16.msra.mxu0 0
        %3777 = vmatprep.subr.bf16.mxu0 0
        %3778 = vmatpush1.bf16.msra.mxu0 0
        %3779 = vmatprep.subr.bf16.mxu0 0
        %3780 = vmatpush1.bf16.msra.mxu0 0
        %3781 = vmatprep.subr.bf16.mxu0 0
        %3782 = vmatpush1.bf16.msra.mxu0 0
        %3783 = vmatprep.subr.bf16.mxu0 0
        %3784 = vmatpush1.bf16.msra.mxu0 0
        %3785 = vmatprep.mubr.bf16.mxu0 0
        %3786 = vmatmul.mubr.bf16.gmra.mrb[0].mxu0 %v3751
        %v3787 = vpop.f32.mrb[0].mxu0
        %v3788 = vadd.f32 0.0, %v3787
        %v3789 = vpop.f32.mrb[0].mxu0
        %v3790 = vpop.f32.mrb[0].mxu0
        %v3791 = vpop.f32.mrb[0].mxu0
        %3792 = vdwg.mxu0
        %v3793 = vpack.c.bf16 %v3788, %v3788
        %s3794 = scalar_lea.vmem %s8, 64
        %v3795 = vld [vmem:[%s3794] sm:$0xf]
        %v3796 = vld [vmem:[%s3794 + $0x4] sm:$0xf]
        %v3797 = vld [vmem:[%s3794 + $0x8] sm:$0xf]
        %v3798 = vld [vmem:[%s3794 + $0xc] sm:$0xf]
        %v3799 = vld [vmem:[%s3794 + $0x10] sm:$0xf]
        %v3800 = vld [vmem:[%s3794 + $0x14] sm:$0xf]
        %v3801 = vld [vmem:[%s3794 + $0x18] sm:$0xf]
        %v3802 = vld [vmem:[%s3794 + $0x1c] sm:$0xf]
        %v3811 = vunpack.c.l.b16 %v3795
        %v3812 = vunpack.c.l.b16 %v3796
        %v3813 = vunpack.c.l.b16 %v3797
        %v3814 = vunpack.c.l.b16 %v3798
        %v3815 = vunpack.c.l.b16 %v3799
        %v3816 = vunpack.c.l.b16 %v3800
        %v3817 = vunpack.c.l.b16 %v3801
        %v3818 = vunpack.c.l.b16 %v3802
        %v3819 = vpack.c.b16 %v3812, %v3811
        %v3820 = vpack.c.b16 %v3814, %v3813
        %v3821 = vpack.c.b16 %v3816, %v3815
        %v3822 = vpack.c.b16 %v3818, %v3817
        %v3828 = vsel %vm2460, %v3793, 0
        %3830 = vmatprep.subr.bf16.mxu0 0
        %3831 = vmatpush1.bf16.msra.mxu0 %v3819
        %3832 = vmatprep.subr.bf16.mxu0 0
        %3833 = vmatpush1.bf16.msra.mxu0 %v3820
        %3834 = vmatprep.subr.bf16.mxu0 0
        %3835 = vmatpush1.bf16.msra.mxu0 %v3821
        %3836 = vmatprep.subr.bf16.mxu0 0
        %3837 = vmatpush1.bf16.msra.mxu0 %v3822
        %3838 = vmatprep.subr.bf16.mxu0 0
        %3839 = vmatpush1.bf16.msra.mxu0 0
        %3840 = vmatprep.subr.bf16.mxu0 0
        %3841 = vmatpush1.bf16.msra.mxu0 0
        %3842 = vmatprep.subr.bf16.mxu0 0
        %3843 = vmatpush1.bf16.msra.mxu0 0
        %3844 = vmatprep.subr.bf16.mxu0 0
        %3845 = vmatpush1.bf16.msra.mxu0 0
        %3846 = vmatprep.subr.bf16.mxu0 0
        %3847 = vmatpush1.bf16.msra.mxu0 0
        %3848 = vmatprep.subr.bf16.mxu0 0
        %3849 = vmatpush1.bf16.msra.mxu0 0
        %3850 = vmatprep.subr.bf16.mxu0 0
        %3851 = vmatpush1.bf16.msra.mxu0 0
        %3852 = vmatprep.subr.bf16.mxu0 0
        %3853 = vmatpush1.bf16.msra.mxu0 0
        %3854 = vmatprep.subr.bf16.mxu0 0
        %3855 = vmatpush1.bf16.msra.mxu0 0
        %3856 = vmatprep.subr.bf16.mxu0 0
        %3857 = vmatpush1.bf16.msra.mxu0 0
        %3858 = vmatprep.subr.bf16.mxu0 0
        %3859 = vmatpush1.bf16.msra.mxu0 0
        %3860 = vmatprep.subr.bf16.mxu0 0
        %3861 = vmatpush1.bf16.msra.mxu0 0
        %3862 = vmatprep.mubr.bf16.mxu0 0
        %3863 = vmatmul.mubr.bf16.gmra.mrb[0].mxu0 %v3828
        %v3864 = vpop.f32.mrb[0].mxu0
        %v3865 = vadd.f32 0.0, %v3864
        %v3866 = vpop.f32.mrb[0].mxu0
        %v3867 = vpop.f32.mrb[0].mxu0
        %v3868 = vpop.f32.mrb[0].mxu0
        %3869 = vdwg.mxu0
        %v3870 = vadd.f32 %v3743, %v3865
        %s3871 = scalar_lea.vmem %s7, 6
        %v3872 = vld [vmem:[%s3871] sm:$0x3]
        %v3874 = vsel %vm3506, %v3872, 0
        %3876 = vmatprep.subr.bf16.mxu0 0
        %3877 = vmatpush1.bf16.msra.mxu0 %v3504
        %3878 = vmatprep.subr.bf16.mxu0 0
        %3879 = vmatpush1.bf16.msra.mxu0 0
        %3880 = vmatprep.subr.bf16.mxu0 0
        %3881 = vmatpush1.bf16.msra.mxu0 0
        %3882 = vmatprep.subr.bf16.mxu0 0
        %3883 = vmatpush1.bf16.msra.mxu0 0
        %3884 = vmatprep.subr.bf16.mxu0 0
        %3885 = vmatpush1.bf16.msra.mxu0 0
        %3886 = vmatprep.subr.bf16.mxu0 0
        %3887 = vmatpush1.bf16.msra.mxu0 0
        %3888 = vmatprep.subr.bf16.mxu0 0
        %3889 = vmatpush1.bf16.msra.mxu0 0
        %3890 = vmatprep.subr.bf16.mxu0 0
        %3891 = vmatpush1.bf16.msra.mxu0 0
        %3892 = vmatprep.subr.bf16.mxu0 0
        %3893 = vmatpush1.bf16.msra.mxu0 0
        %3894 = vmatprep.subr.bf16.mxu0 0
        %3895 = vmatpush1.bf16.msra.mxu0 0
        %3896 = vmatprep.subr.bf16.mxu0 0
        %3897 = vmatpush1.bf16.msra.mxu0 0
        %3898 = vmatprep.subr.bf16.mxu0 0
        %3899 = vmatpush1.bf16.msra.mxu0 0
        %3900 = vmatprep.subr.bf16.mxu0 0
        %3901 = vmatpush1.bf16.msra.mxu0 0
        %3902 = vmatprep.subr.bf16.mxu0 0
        %3903 = vmatpush1.bf16.msra.mxu0 0
        %3904 = vmatprep.subr.bf16.mxu0 0
        %3905 = vmatpush1.bf16.msra.mxu0 0
        %3906 = vmatprep.subr.bf16.mxu0 0
        %3907 = vmatpush1.bf16.msra.mxu0 0
        %3908 = vmatprep.mubr.bf16.mxu0 0
        %3909 = vmatmul.mubr.bf16.gmra.mrb[0].mxu0 %v3874
        %v3910 = vpop.f32.mrb[0].mxu0
        %v3911 = vadd.f32 0.0, %v3910
        %v3912 = vpop.f32.mrb[0].mxu0
        %v3913 = vpop.f32.mrb[0].mxu0
        %v3914 = vpop.f32.mrb[0].mxu0
        %3915 = vdwg.mxu0
        %v3916 = vpack.c.bf16 %v3911, %v3911
        %s3917 = scalar_lea.vmem %s8, 96
        %v3918 = vld [vmem:[%s3917] sm:$0xf]
        %v3919 = vld [vmem:[%s3917 + $0x4] sm:$0xf]
        %v3920 = vld [vmem:[%s3917 + $0x8] sm:$0xf]
        %v3921 = vld [vmem:[%s3917 + $0xc] sm:$0xf]
        %v3922 = vld [vmem:[%s3917 + $0x10] sm:$0xf]
        %v3923 = vld [vmem:[%s3917 + $0x14] sm:$0xf]
        %v3924 = vld [vmem:[%s3917 + $0x18] sm:$0xf]
        %v3925 = vld [vmem:[%s3917 + $0x1c] sm:$0xf]
        %v3934 = vunpack.c.l.b16 %v3918
        %v3935 = vunpack.c.l.b16 %v3919
        %v3936 = vunpack.c.l.b16 %v3920
        %v3937 = vunpack.c.l.b16 %v3921
        %v3938 = vunpack.c.l.b16 %v3922
        %v3939 = vunpack.c.l.b16 %v3923
        %v3940 = vunpack.c.l.b16 %v3924
        %v3941 = vunpack.c.l.b16 %v3925
        %v3942 = vpack.c.b16 %v3935, %v3934
        %v3943 = vpack.c.b16 %v3937, %v3936
        %v3944 = vpack.c.b16 %v3939, %v3938
        %v3945 = vpack.c.b16 %v3941, %v3940
        %v3951 = vsel %vm2460, %v3916, 0
        %3953 = vmatprep.subr.bf16.mxu0 0
        %3954 = vmatpush1.bf16.msra.mxu0 %v3942
        %3955 = vmatprep.subr.bf16.mxu0 0
        %3956 = vmatpush1.bf16.msra.mxu0 %v3943
        %3957 = vmatprep.subr.bf16.mxu0 0
        %3958 = vmatpush1.bf16.msra.mxu0 %v3944
        %3959 = vmatprep.subr.bf16.mxu0 0
        %3960 = vmatpush1.bf16.msra.mxu0 %v3945
        %3961 = vmatprep.subr.bf16.mxu0 0
        %3962 = vmatpush1.bf16.msra.mxu0 0
        %3963 = vmatprep.subr.bf16.mxu0 0
        %3964 = vmatpush1.bf16.msra.mxu0 0
        %3965 = vmatprep.subr.bf16.mxu0 0
        %3966 = vmatpush1.bf16.msra.mxu0 0
        %3967 = vmatprep.subr.bf16.mxu0 0
        %3968 = vmatpush1.bf16.msra.mxu0 0
        %3969 = vmatprep.subr.bf16.mxu0 0
        %3970 = vmatpush1.bf16.msra.mxu0 0
        %3971 = vmatprep.subr.bf16.mxu0 0
        %3972 = vmatpush1.bf16.msra.mxu0 0
        %3973 = vmatprep.subr.bf16.mxu0 0
        %3974 = vmatpush1.bf16.msra.mxu0 0
        %3975 = vmatprep.subr.bf16.mxu0 0
        %3976 = vmatpush1.bf16.msra.mxu0 0
        %3977 = vmatprep.subr.bf16.mxu0 0
        %3978 = vmatpush1.bf16.msra.mxu0 0
        %3979 = vmatprep.subr.bf16.mxu0 0
        %3980 = vmatpush1.bf16.msra.mxu0 0
        %3981 = vmatprep.subr.bf16.mxu0 0
        %3982 = vmatpush1.bf16.msra.mxu0 0
        %3983 = vmatprep.subr.bf16.mxu0 0
        %3984 = vmatpush1.bf16.msra.mxu0 0
        %3985 = vmatprep.mubr.bf16.mxu0 0
        %3986 = vmatmul.mubr.bf16.gmra.mrb[0].mxu0 %v3951
        %v3987 = vpop.f32.mrb[0].mxu0
        %v3988 = vadd.f32 0.0, %v3987
        %v3989 = vpop.f32.mrb[0].mxu0
        %v3990 = vpop.f32.mrb[0].mxu0
        %v3991 = vpop.f32.mrb[0].mxu0
        %3992 = vdwg.mxu0
        %v3993 = vadd.f32 %v3870, %v3988
        %s3994 = scalar_lea.vmem %s7, 8
        %v3995 = vld [vmem:[%s3994] sm:$0x3]
        %v3997 = vsel %vm3506, %v3995, 0
        %3999 = vmatprep.subr.bf16.mxu0 0
        %4000 = vmatpush1.bf16.msra.mxu0 %v3504
        %4001 = vmatprep.subr.bf16.mxu0 0
        %4002 = vmatpush1.bf16.msra.mxu0 0
        %4003 = vmatprep.subr.bf16.mxu0 0
        %4004 = vmatpush1.bf16.msra.mxu0 0
        %4005 = vmatprep.subr.bf16.mxu0 0
        %4006 = vmatpush1.bf16.msra.mxu0 0
        %4007 = vmatprep.subr.bf16.mxu0 0
        %4008 = vmatpush1.bf16.msra.mxu0 0
        %4009 = vmatprep.subr.bf16.mxu0 0
        %4010 = vmatpush1.bf16.msra.mxu0 0
        %4011 = vmatprep.subr.bf16.mxu0 0
        %4012 = vmatpush1.bf16.msra.mxu0 0
        %4013 = vmatprep.subr.bf16.mxu0 0
        %4014 = vmatpush1.bf16.msra.mxu0 0
        %4015 = vmatprep.subr.bf16.mxu0 0
        %4016 = vmatpush1.bf16.msra.mxu0 0
        %4017 = vmatprep.subr.bf16.mxu0 0
        %4018 = vmatpush1.bf16.msra.mxu0 0
        %4019 = vmatprep.subr.bf16.mxu0 0
        %4020 = vmatpush1.bf16.msra.mxu0 0
        %4021 = vmatprep.subr.bf16.mxu0 0
        %4022 = vmatpush1.bf16.msra.mxu0 0
        %4023 = vmatprep.subr.bf16.mxu0 0
        %4024 = vmatpush1.bf16.msra.mxu0 0
        %4025 = vmatprep.subr.bf16.mxu0 0
        %4026 = vmatpush1.bf16.msra.mxu0 0
        %4027 = vmatprep.subr.bf16.mxu0 0
        %4028 = vmatpush1.bf16.msra.mxu0 0
        %4029 = vmatprep.subr.bf16.mxu0 0
        %4030 = vmatpush1.bf16.msra.mxu0 0
        %4031 = vmatprep.mubr.bf16.mxu0 0
        %4032 = vmatmul.mubr.bf16.gmra.mrb[0].mxu0 %v3997
        %v4033 = vpop.f32.mrb[0].mxu0
        %v4034 = vadd.f32 0.0, %v4033
        %v4035 = vpop.f32.mrb[0].mxu0
        %v4036 = vpop.f32.mrb[0].mxu0
        %v4037 = vpop.f32.mrb[0].mxu0
        %4038 = vdwg.mxu0
        %v4039 = vpack.c.bf16 %v4034, %v4034
        %s4040 = scalar_lea.vmem %s8, 128
        %v4041 = vld [vmem:[%s4040] sm:$0xf]
        %v4042 = vld [vmem:[%s4040 + $0x4] sm:$0xf]
        %v4043 = vld [vmem:[%s4040 + $0x8] sm:$0xf]
        %v4044 = vld [vmem:[%s4040 + $0xc] sm:$0xf]
        %v4045 = vld [vmem:[%s4040 + $0x10] sm:$0xf]
        %v4046 = vld [vmem:[%s4040 + $0x14] sm:$0xf]
        %v4047 = vld [vmem:[%s4040 + $0x18] sm:$0xf]
        %v4048 = vld [vmem:[%s4040 + $0x1c] sm:$0xf]
        %v4057 = vunpack.c.l.b16 %v4041
        %v4058 = vunpack.c.l.b16 %v4042
        %v4059 = vunpack.c.l.b16 %v4043
        %v4060 = vunpack.c.l.b16 %v4044
        %v4061 = vunpack.c.l.b16 %v4045
        %v4062 = vunpack.c.l.b16 %v4046
        %v4063 = vunpack.c.l.b16 %v4047
        %v4064 = vunpack.c.l.b16 %v4048
        %v4065 = vpack.c.b16 %v4058, %v4057
        %v4066 = vpack.c.b16 %v4060, %v4059
        %v4067 = vpack.c.b16 %v4062, %v4061
        %v4068 = vpack.c.b16 %v4064, %v4063
        %v4074 = vsel %vm2460, %v4039, 0
        %4076 = vmatprep.subr.bf16.mxu0 0
        %4077 = vmatpush1.bf16.msra.mxu0 %v4065
        %4078 = vmatprep.subr.bf16.mxu0 0
        %4079 = vmatpush1.bf16.msra.mxu0 %v4066
        %4080 = vmatprep.subr.bf16.mxu0 0
        %4081 = vmatpush1.bf16.msra.mxu0 %v4067
        %4082 = vmatprep.subr.bf16.mxu0 0
        %4083 = vmatpush1.bf16.msra.mxu0 %v4068
        %4084 = vmatprep.subr.bf16.mxu0 0
        %4085 = vmatpush1.bf16.msra.mxu0 0
        %4086 = vmatprep.subr.bf16.mxu0 0
        %4087 = vmatpush1.bf16.msra.mxu0 0
        %4088 = vmatprep.subr.bf16.mxu0 0
        %4089 = vmatpush1.bf16.msra.mxu0 0
        %4090 = vmatprep.subr.bf16.mxu0 0
        %4091 = vmatpush1.bf16.msra.mxu0 0
        %4092 = vmatprep.subr.bf16.mxu0 0
        %4093 = vmatpush1.bf16.msra.mxu0 0
        %4094 = vmatprep.subr.bf16.mxu0 0
        %4095 = vmatpush1.bf16.msra.mxu0 0
        %4096 = vmatprep.subr.bf16.mxu0 0
        %4097 = vmatpush1.bf16.msra.mxu0 0
        %4098 = vmatprep.subr.bf16.mxu0 0
        %4099 = vmatpush1.bf16.msra.mxu0 0
        %4100 = vmatprep.subr.bf16.mxu0 0
        %4101 = vmatpush1.bf16.msra.mxu0 0
        %4102 = vmatprep.subr.bf16.mxu0 0
        %4103 = vmatpush1.bf16.msra.mxu0 0
        %4104 = vmatprep.subr.bf16.mxu0 0
        %4105 = vmatpush1.bf16.msra.mxu0 0
        %4106 = vmatprep.subr.bf16.mxu0 0
        %4107 = vmatpush1.bf16.msra.mxu0 0
        %4108 = vmatprep.mubr.bf16.mxu0 0
        %4109 = vmatmul.mubr.bf16.gmra.mrb[0].mxu0 %v4074
        %v4110 = vpop.f32.mrb[0].mxu0
        %v4111 = vadd.f32 0.0, %v4110
        %v4112 = vpop.f32.mrb[0].mxu0
        %v4113 = vpop.f32.mrb[0].mxu0
        %v4114 = vpop.f32.mrb[0].mxu0
        %4115 = vdwg.mxu0
        %v4116 = vadd.f32 %v3993, %v4111
        %s4117 = scalar_lea.vmem %s7, 10
        %v4118 = vld [vmem:[%s4117] sm:$0x3]
        %v4120 = vsel %vm3506, %v4118, 0
        %4122 = vmatprep.subr.bf16.mxu0 0
        %4123 = vmatpush1.bf16.msra.mxu0 %v3504
        %4124 = vmatprep.subr.bf16.mxu0 0
        %4125 = vmatpush1.bf16.msra.mxu0 0
        %4126 = vmatprep.subr.bf16.mxu0 0
        %4127 = vmatpush1.bf16.msra.mxu0 0
        %4128 = vmatprep.subr.bf16.mxu0 0
        %4129 = vmatpush1.bf16.msra.mxu0 0
        %4130 = vmatprep.subr.bf16.mxu0 0
        %4131 = vmatpush1.bf16.msra.mxu0 0
        %4132 = vmatprep.subr.bf16.mxu0 0
        %4133 = vmatpush1.bf16.msra.mxu0 0
        %4134 = vmatprep.subr.bf16.mxu0 0
        %4135 = vmatpush1.bf16.msra.mxu0 0
        %4136 = vmatprep.subr.bf16.mxu0 0
        %4137 = vmatpush1.bf16.msra.mxu0 0
        %4138 = vmatprep.subr.bf16.mxu0 0
        %4139 = vmatpush1.bf16.msra.mxu0 0
        %4140 = vmatprep.subr.bf16.mxu0 0
        %4141 = vmatpush1.bf16.msra.mxu0 0
        %4142 = vmatprep.subr.bf16.mxu0 0
        %4143 = vmatpush1.bf16.msra.mxu0 0
        %4144 = vmatprep.subr.bf16.mxu0 0
        %4145 = vmatpush1.bf16.msra.mxu0 0
        %4146 = vmatprep.subr.bf16.mxu0 0
        %4147 = vmatpush1.bf16.msra.mxu0 0
        %4148 = vmatprep.subr.bf16.mxu0 0
        %4149 = vmatpush1.bf16.msra.mxu0 0
        %4150 = vmatprep.subr.bf16.mxu0 0
        %4151 = vmatpush1.bf16.msra.mxu0 0
        %4152 = vmatprep.subr.bf16.mxu0 0
        %4153 = vmatpush1.bf16.msra.mxu0 0
        %4154 = vmatprep.mubr.bf16.mxu0 0
        %4155 = vmatmul.mubr.bf16.gmra.mrb[0].mxu0 %v4120
        %v4156 = vpop.f32.mrb[0].mxu0
        %v4157 = vadd.f32 0.0, %v4156
        %v4158 = vpop.f32.mrb[0].mxu0
        %v4159 = vpop.f32.mrb[0].mxu0
        %v4160 = vpop.f32.mrb[0].mxu0
        %4161 = vdwg.mxu0
        %v4162 = vpack.c.bf16 %v4157, %v4157
        %s4163 = scalar_lea.vmem %s8, 160
        %v4164 = vld [vmem:[%s4163] sm:$0xf]
        %v4165 = vld [vmem:[%s4163 + $0x4] sm:$0xf]
        %v4166 = vld [vmem:[%s4163 + $0x8] sm:$0xf]
        %v4167 = vld [vmem:[%s4163 + $0xc] sm:$0xf]
        %v4168 = vld [vmem:[%s4163 + $0x10] sm:$0xf]
        %v4169 = vld [vmem:[%s4163 + $0x14] sm:$0xf]
        %v4170 = vld [vmem:[%s4163 + $0x18] sm:$0xf]
        %v4171 = vld [vmem:[%s4163 + $0x1c] sm:$0xf]
        %v4180 = vunpack.c.l.b16 %v4164
        %v4181 = vunpack.c.l.b16 %v4165
        %v4182 = vunpack.c.l.b16 %v4166
        %v4183 = vunpack.c.l.b16 %v4167
        %v4184 = vunpack.c.l.b16 %v4168
        %v4185 = vunpack.c.l.b16 %v4169
        %v4186 = vunpack.c.l.b16 %v4170
        %v4187 = vunpack.c.l.b16 %v4171
        %v4188 = vpack.c.b16 %v4181, %v4180
        %v4189 = vpack.c.b16 %v4183, %v4182
        %v4190 = vpack.c.b16 %v4185, %v4184
        %v4191 = vpack.c.b16 %v4187, %v4186
        %v4197 = vsel %vm2460, %v4162, 0
        %4199 = vmatprep.subr.bf16.mxu0 0
        %4200 = vmatpush1.bf16.msra.mxu0 %v4188
        %4201 = vmatprep.subr.bf16.mxu0 0
        %4202 = vmatpush1.bf16.msra.mxu0 %v4189
        %4203 = vmatprep.subr.bf16.mxu0 0
        %4204 = vmatpush1.bf16.msra.mxu0 %v4190
        %4205 = vmatprep.subr.bf16.mxu0 0
        %4206 = vmatpush1.bf16.msra.mxu0 %v4191
        %4207 = vmatprep.subr.bf16.mxu0 0
        %4208 = vmatpush1.bf16.msra.mxu0 0
        %4209 = vmatprep.subr.bf16.mxu0 0
        %4210 = vmatpush1.bf16.msra.mxu0 0
        %4211 = vmatprep.subr.bf16.mxu0 0
        %4212 = vmatpush1.bf16.msra.mxu0 0
        %4213 = vmatprep.subr.bf16.mxu0 0
        %4214 = vmatpush1.bf16.msra.mxu0 0
        %4215 = vmatprep.subr.bf16.mxu0 0
        %4216 = vmatpush1.bf16.msra.mxu0 0
        %4217 = vmatprep.subr.bf16.mxu0 0
        %4218 = vmatpush1.bf16.msra.mxu0 0
        %4219 = vmatprep.subr.bf16.mxu0 0
        %4220 = vmatpush1.bf16.msra.mxu0 0
        %4221 = vmatprep.subr.bf16.mxu0 0
        %4222 = vmatpush1.bf16.msra.mxu0 0
        %4223 = vmatprep.subr.bf16.mxu0 0
        %4224 = vmatpush1.bf16.msra.mxu0 0
        %4225 = vmatprep.subr.bf16.mxu0 0
        %4226 = vmatpush1.bf16.msra.mxu0 0
        %4227 = vmatprep.subr.bf16.mxu0 0
        %4228 = vmatpush1.bf16.msra.mxu0 0
        %4229 = vmatprep.subr.bf16.mxu0 0
        %4230 = vmatpush1.bf16.msra.mxu0 0
        %4231 = vmatprep.mubr.bf16.mxu0 0
        %4232 = vmatmul.mubr.bf16.gmra.mrb[0].mxu0 %v4197
        %v4233 = vpop.f32.mrb[0].mxu0
        %v4234 = vadd.f32 0.0, %v4233
        %v4235 = vpop.f32.mrb[0].mxu0
        %v4236 = vpop.f32.mrb[0].mxu0
        %v4237 = vpop.f32.mrb[0].mxu0
        %4238 = vdwg.mxu0
        %v4239 = vadd.f32 %v4116, %v4234
        %s4240 = scalar_lea.vmem %s7, 12
        %v4241 = vld [vmem:[%s4240] sm:$0x3]
        %v4243 = vsel %vm3506, %v4241, 0
        %4245 = vmatprep.subr.bf16.mxu0 0
        %4246 = vmatpush1.bf16.msra.mxu0 %v3504
        %4247 = vmatprep.subr.bf16.mxu0 0
        %4248 = vmatpush1.bf16.msra.mxu0 0
        %4249 = vmatprep.subr.bf16.mxu0 0
        %4250 = vmatpush1.bf16.msra.mxu0 0
        %4251 = vmatprep.subr.bf16.mxu0 0
        %4252 = vmatpush1.bf16.msra.mxu0 0
        %4253 = vmatprep.subr.bf16.mxu0 0
        %4254 = vmatpush1.bf16.msra.mxu0 0
        %4255 = vmatprep.subr.bf16.mxu0 0
        %4256 = vmatpush1.bf16.msra.mxu0 0
        %4257 = vmatprep.subr.bf16.mxu0 0
        %4258 = vmatpush1.bf16.msra.mxu0 0
        %4259 = vmatprep.subr.bf16.mxu0 0
        %4260 = vmatpush1.bf16.msra.mxu0 0
        %4261 = vmatprep.subr.bf16.mxu0 0
        %4262 = vmatpush1.bf16.msra.mxu0 0
        %4263 = vmatprep.subr.bf16.mxu0 0
        %4264 = vmatpush1.bf16.msra.mxu0 0
        %4265 = vmatprep.subr.bf16.mxu0 0
        %4266 = vmatpush1.bf16.msra.mxu0 0
        %4267 = vmatprep.subr.bf16.mxu0 0
        %4268 = vmatpush1.bf16.msra.mxu0 0
        %4269 = vmatprep.subr.bf16.mxu0 0
        %4270 = vmatpush1.bf16.msra.mxu0 0
        %4271 = vmatprep.subr.bf16.mxu0 0
        %4272 = vmatpush1.bf16.msra.mxu0 0
        %4273 = vmatprep.subr.bf16.mxu0 0
        %4274 = vmatpush1.bf16.msra.mxu0 0
        %4275 = vmatprep.subr.bf16.mxu0 0
        %4276 = vmatpush1.bf16.msra.mxu0 0
        %4277 = vmatprep.mubr.bf16.mxu0 0
        %4278 = vmatmul.mubr.bf16.gmra.mrb[0].mxu0 %v4243
        %v4279 = vpop.f32.mrb[0].mxu0
        %v4280 = vadd.f32 0.0, %v4279
        %v4281 = vpop.f32.mrb[0].mxu0
        %v4282 = vpop.f32.mrb[0].mxu0
        %v4283 = vpop.f32.mrb[0].mxu0
        %4284 = vdwg.mxu0
        %v4285 = vpack.c.bf16 %v4280, %v4280
        %s4286 = scalar_lea.vmem %s8, 192
        %v4287 = vld [vmem:[%s4286] sm:$0xf]
        %v4288 = vld [vmem:[%s4286 + $0x4] sm:$0xf]
        %v4289 = vld [vmem:[%s4286 + $0x8] sm:$0xf]
        %v4290 = vld [vmem:[%s4286 + $0xc] sm:$0xf]
        %v4291 = vld [vmem:[%s4286 + $0x10] sm:$0xf]
        %v4292 = vld [vmem:[%s4286 + $0x14] sm:$0xf]
        %v4293 = vld [vmem:[%s4286 + $0x18] sm:$0xf]
        %v4294 = vld [vmem:[%s4286 + $0x1c] sm:$0xf]
        %v4303 = vunpack.c.l.b16 %v4287
        %v4304 = vunpack.c.l.b16 %v4288
        %v4305 = vunpack.c.l.b16 %v4289
        %v4306 = vunpack.c.l.b16 %v4290
        %v4307 = vunpack.c.l.b16 %v4291
        %v4308 = vunpack.c.l.b16 %v4292
        %v4309 = vunpack.c.l.b16 %v4293
        %v4310 = vunpack.c.l.b16 %v4294
        %v4311 = vpack.c.b16 %v4304, %v4303
        %v4312 = vpack.c.b16 %v4306, %v4305
        %v4313 = vpack.c.b16 %v4308, %v4307
        %v4314 = vpack.c.b16 %v4310, %v4309
        %v4320 = vsel %vm2460, %v4285, 0
        %4322 = vmatprep.subr.bf16.mxu0 0
        %4323 = vmatpush1.bf16.msra.mxu0 %v4311
        %4324 = vmatprep.subr.bf16.mxu0 0
        %4325 = vmatpush1.bf16.msra.mxu0 %v4312
        %4326 = vmatprep.subr.bf16.mxu0 0
        %4327 = vmatpush1.bf16.msra.mxu0 %v4313
        %4328 = vmatprep.subr.bf16.mxu0 0
        %4329 = vmatpush1.bf16.msra.mxu0 %v4314
        %4330 = vmatprep.subr.bf16.mxu0 0
        %4331 = vmatpush1.bf16.msra.mxu0 0
        %4332 = vmatprep.subr.bf16.mxu0 0
        %4333 = vmatpush1.bf16.msra.mxu0 0
        %4334 = vmatprep.subr.bf16.mxu0 0
        %4335 = vmatpush1.bf16.msra.mxu0 0
        %4336 = vmatprep.subr.bf16.mxu0 0
        %4337 = vmatpush1.bf16.msra.mxu0 0
        %4338 = vmatprep.subr.bf16.mxu0 0
        %4339 = vmatpush1.bf16.msra.mxu0 0
        %4340 = vmatprep.subr.bf16.mxu0 0
        %4341 = vmatpush1.bf16.msra.mxu0 0
        %4342 = vmatprep.subr.bf16.mxu0 0
        %4343 = vmatpush1.bf16.msra.mxu0 0
        %4344 = vmatprep.subr.bf16.mxu0 0
        %4345 = vmatpush1.bf16.msra.mxu0 0
        %4346 = vmatprep.subr.bf16.mxu0 0
        %4347 = vmatpush1.bf16.msra.mxu0 0
        %4348 = vmatprep.subr.bf16.mxu0 0
        %4349 = vmatpush1.bf16.msra.mxu0 0
        %4350 = vmatprep.subr.bf16.mxu0 0
        %4351 = vmatpush1.bf16.msra.mxu0 0
        %4352 = vmatprep.subr.bf16.mxu0 0
        %4353 = vmatpush1.bf16.msra.mxu0 0
        %4354 = vmatprep.mubr.bf16.mxu0 0
        %4355 = vmatmul.mubr.bf16.gmra.mrb[0].mxu0 %v4320
        %v4356 = vpop.f32.mrb[0].mxu0
        %v4357 = vadd.f32 0.0, %v4356
        %v4358 = vpop.f32.mrb[0].mxu0
        %v4359 = vpop.f32.mrb[0].mxu0
        %v4360 = vpop.f32.mrb[0].mxu0
        %4361 = vdwg.mxu0
        %v4362 = vadd.f32 %v4239, %v4357
        %s4363 = scalar_lea.vmem %s7, 14
        %v4364 = vld [vmem:[%s4363] sm:$0x3]
        %v4366 = vsel %vm3506, %v4364, 0
        %4368 = vmatprep.subr.bf16.mxu0 0
        %4369 = vmatpush1.bf16.msra.mxu0 %v3504
        %4370 = vmatprep.subr.bf16.mxu0 0
        %4371 = vmatpush1.bf16.msra.mxu0 0
        %4372 = vmatprep.subr.bf16.mxu0 0
        %4373 = vmatpush1.bf16.msra.mxu0 0
        %4374 = vmatprep.subr.bf16.mxu0 0
        %4375 = vmatpush1.bf16.msra.mxu0 0
        %4376 = vmatprep.subr.bf16.mxu0 0
        %4377 = vmatpush1.bf16.msra.mxu0 0
        %4378 = vmatprep.subr.bf16.mxu0 0
        %4379 = vmatpush1.bf16.msra.mxu0 0
        %4380 = vmatprep.subr.bf16.mxu0 0
        %4381 = vmatpush1.bf16.msra.mxu0 0
        %4382 = vmatprep.subr.bf16.mxu0 0
        %4383 = vmatpush1.bf16.msra.mxu0 0
        %4384 = vmatprep.subr.bf16.mxu0 0
        %4385 = vmatpush1.bf16.msra.mxu0 0
        %4386 = vmatprep.subr.bf16.mxu0 0
        %4387 = vmatpush1.bf16.msra.mxu0 0
        %4388 = vmatprep.subr.bf16.mxu0 0
        %4389 = vmatpush1.bf16.msra.mxu0 0
        %4390 = vmatprep.subr.bf16.mxu0 0
        %4391 = vmatpush1.bf16.msra.mxu0 0
        %4392 = vmatprep.subr.bf16.mxu0 0
        %4393 = vmatpush1.bf16.msra.mxu0 0
        %4394 = vmatprep.subr.bf16.mxu0 0
        %4395 = vmatpush1.bf16.msra.mxu0 0
        %4396 = vmatprep.subr.bf16.mxu0 0
        %4397 = vmatpush1.bf16.msra.mxu0 0
        %4398 = vmatprep.subr.bf16.mxu0 0
        %4399 = vmatpush1.bf16.msra.mxu0 0
        %4400 = vmatprep.mubr.bf16.mxu0 0
        %4401 = vmatmul.mubr.bf16.gmra.mrb[0].mxu0 %v4366
        %v4402 = vpop.f32.mrb[0].mxu0
        %v4403 = vadd.f32 0.0, %v4402
        %v4404 = vpop.f32.mrb[0].mxu0
        %v4405 = vpop.f32.mrb[0].mxu0
        %v4406 = vpop.f32.mrb[0].mxu0
        %4407 = vdwg.mxu0
        %v4408 = vpack.c.bf16 %v4403, %v4403
        %s4409 = scalar_lea.vmem %s8, 224
        %v4410 = vld [vmem:[%s4409] sm:$0xf]
        %v4411 = vld [vmem:[%s4409 + $0x4] sm:$0xf]
        %v4412 = vld [vmem:[%s4409 + $0x8] sm:$0xf]
        %v4413 = vld [vmem:[%s4409 + $0xc] sm:$0xf]
        %v4414 = vld [vmem:[%s4409 + $0x10] sm:$0xf]
        %v4415 = vld [vmem:[%s4409 + $0x14] sm:$0xf]
        %v4416 = vld [vmem:[%s4409 + $0x18] sm:$0xf]
        %v4417 = vld [vmem:[%s4409 + $0x1c] sm:$0xf]
        %v4426 = vunpack.c.l.b16 %v4410
        %v4427 = vunpack.c.l.b16 %v4411
        %v4428 = vunpack.c.l.b16 %v4412
        %v4429 = vunpack.c.l.b16 %v4413
        %v4430 = vunpack.c.l.b16 %v4414
        %v4431 = vunpack.c.l.b16 %v4415
        %v4432 = vunpack.c.l.b16 %v4416
        %v4433 = vunpack.c.l.b16 %v4417
        %v4434 = vpack.c.b16 %v4427, %v4426
        %v4435 = vpack.c.b16 %v4429, %v4428
        %v4436 = vpack.c.b16 %v4431, %v4430
        %v4437 = vpack.c.b16 %v4433, %v4432
        %v4443 = vsel %vm2460, %v4408, 0
        %4445 = vmatprep.subr.bf16.mxu0 0
        %4446 = vmatpush1.bf16.msra.mxu0 %v4434
        %4447 = vmatprep.subr.bf16.mxu0 0
        %4448 = vmatpush1.bf16.msra.mxu0 %v4435
        %4449 = vmatprep.subr.bf16.mxu0 0
        %4450 = vmatpush1.bf16.msra.mxu0 %v4436
        %4451 = vmatprep.subr.bf16.mxu0 0
        %4452 = vmatpush1.bf16.msra.mxu0 %v4437
        %4453 = vmatprep.subr.bf16.mxu0 0
        %4454 = vmatpush1.bf16.msra.mxu0 0
        %4455 = vmatprep.subr.bf16.mxu0 0
        %4456 = vmatpush1.bf16.msra.mxu0 0
        %4457 = vmatprep.subr.bf16.mxu0 0
        %4458 = vmatpush1.bf16.msra.mxu0 0
        %4459 = vmatprep.subr.bf16.mxu0 0
        %4460 = vmatpush1.bf16.msra.mxu0 0
        %4461 = vmatprep.subr.bf16.mxu0 0
        %4462 = vmatpush1.bf16.msra.mxu0 0
        %4463 = vmatprep.subr.bf16.mxu0 0
        %4464 = vmatpush1.bf16.msra.mxu0 0
        %4465 = vmatprep.subr.bf16.mxu0 0
        %4466 = vmatpush1.bf16.msra.mxu0 0
        %4467 = vmatprep.subr.bf16.mxu0 0
        %4468 = vmatpush1.bf16.msra.mxu0 0
        %4469 = vmatprep.subr.bf16.mxu0 0
        %4470 = vmatpush1.bf16.msra.mxu0 0
        %4471 = vmatprep.subr.bf16.mxu0 0
        %4472 = vmatpush1.bf16.msra.mxu0 0
        %4473 = vmatprep.subr.bf16.mxu0 0
        %4474 = vmatpush1.bf16.msra.mxu0 0
        %4475 = vmatprep.subr.bf16.mxu0 0
        %4476 = vmatpush1.bf16.msra.mxu0 0
        %4477 = vmatprep.mubr.bf16.mxu0 0
        %4478 = vmatmul.mubr.bf16.gmra.mrb[0].mxu0 %v4443
        %v4479 = vpop.f32.mrb[0].mxu0
        %v4480 = vadd.f32 0.0, %v4479
        %v4481 = vpop.f32.mrb[0].mxu0
        %v4482 = vpop.f32.mrb[0].mxu0
        %v4483 = vpop.f32.mrb[0].mxu0
        %4484 = vdwg.mxu0
        %v4485 = vadd.f32 %v4362, %v4480
        %s4486 = scalar_lea.vmem %s7, 16
        %v4487 = vld [vmem:[%s4486] sm:$0x3]
        %v4489 = vsel %vm3506, %v4487, 0
        %4491 = vmatprep.subr.bf16.mxu0 0
        %4492 = vmatpush1.bf16.msra.mxu0 %v3504
        %4493 = vmatprep.subr.bf16.mxu0 0
        %4494 = vmatpush1.bf16.msra.mxu0 0
        %4495 = vmatprep.subr.bf16.mxu0 0
        %4496 = vmatpush1.bf16.msra.mxu0 0
        %4497 = vmatprep.subr.bf16.mxu0 0
        %4498 = vmatpush1.bf16.msra.mxu0 0
        %4499 = vmatprep.subr.bf16.mxu0 0
        %4500 = vmatpush1.bf16.msra.mxu0 0
        %4501 = vmatprep.subr.bf16.mxu0 0
        %4502 = vmatpush1.bf16.msra.mxu0 0
        %4503 = vmatprep.subr.bf16.mxu0 0
        %4504 = vmatpush1.bf16.msra.mxu0 0
        %4505 = vmatprep.subr.bf16.mxu0 0
        %4506 = vmatpush1.bf16.msra.mxu0 0
        %4507 = vmatprep.subr.bf16.mxu0 0
        %4508 = vmatpush1.bf16.msra.mxu0 0
        %4509 = vmatprep.subr.bf16.mxu0 0
        %4510 = vmatpush1.bf16.msra.mxu0 0
        %4511 = vmatprep.subr.bf16.mxu0 0
        %4512 = vmatpush1.bf16.msra.mxu0 0
        %4513 = vmatprep.subr.bf16.mxu0 0
        %4514 = vmatpush1.bf16.msra.mxu0 0
        %4515 = vmatprep.subr.bf16.mxu0 0
        %4516 = vmatpush1.bf16.msra.mxu0 0
        %4517 = vmatprep.subr.bf16.mxu0 0
        %4518 = vmatpush1.bf16.msra.mxu0 0
        %4519 = vmatprep.subr.bf16.mxu0 0
        %4520 = vmatpush1.bf16.msra.mxu0 0
        %4521 = vmatprep.subr.bf16.mxu0 0
        %4522 = vmatpush1.bf16.msra.mxu0 0
        %4523 = vmatprep.mubr.bf16.mxu0 0
        %4524 = vmatmul.mubr.bf16.gmra.mrb[0].mxu0 %v4489
        %v4525 = vpop.f32.mrb[0].mxu0
        %v4526 = vadd.f32 0.0, %v4525
        %v4527 = vpop.f32.mrb[0].mxu0
        %v4528 = vpop.f32.mrb[0].mxu0
        %v4529 = vpop.f32.mrb[0].mxu0
        %4530 = vdwg.mxu0
        %v4531 = vpack.c.bf16 %v4526, %v4526
        %s4532 = scalar_lea.vmem %s8, 256
        %v4533 = vld [vmem:[%s4532] sm:$0xf]
        %v4534 = vld [vmem:[%s4532 + $0x4] sm:$0xf]
        %v4535 = vld [vmem:[%s4532 + $0x8] sm:$0xf]
        %v4536 = vld [vmem:[%s4532 + $0xc] sm:$0xf]
        %v4537 = vld [vmem:[%s4532 + $0x10] sm:$0xf]
        %v4538 = vld [vmem:[%s4532 + $0x14] sm:$0xf]
        %v4539 = vld [vmem:[%s4532 + $0x18] sm:$0xf]
        %v4540 = vld [vmem:[%s4532 + $0x1c] sm:$0xf]
        %v4549 = vunpack.c.l.b16 %v4533
        %v4550 = vunpack.c.l.b16 %v4534
        %v4551 = vunpack.c.l.b16 %v4535
        %v4552 = vunpack.c.l.b16 %v4536
        %v4553 = vunpack.c.l.b16 %v4537
        %v4554 = vunpack.c.l.b16 %v4538
        %v4555 = vunpack.c.l.b16 %v4539
        %v4556 = vunpack.c.l.b16 %v4540
        %v4557 = vpack.c.b16 %v4550, %v4549
        %v4558 = vpack.c.b16 %v4552, %v4551
        %v4559 = vpack.c.b16 %v4554, %v4553
        %v4560 = vpack.c.b16 %v4556, %v4555
        %v4566 = vsel %vm2460, %v4531, 0
        %4568 = vmatprep.subr.bf16.mxu0 0
        %4569 = vmatpush1.bf16.msra.mxu0 %v4557
        %4570 = vmatprep.subr.bf16.mxu0 0
        %4571 = vmatpush1.bf16.msra.mxu0 %v4558
        %4572 = vmatprep.subr.bf16.mxu0 0
        %4573 = vmatpush1.bf16.msra.mxu0 %v4559
        %4574 = vmatprep.subr.bf16.mxu0 0
        %4575 = vmatpush1.bf16.msra.mxu0 %v4560
        %4576 = vmatprep.subr.bf16.mxu0 0
        %4577 = vmatpush1.bf16.msra.mxu0 0
        %4578 = vmatprep.subr.bf16.mxu0 0
        %4579 = vmatpush1.bf16.msra.mxu0 0
        %4580 = vmatprep.subr.bf16.mxu0 0
        %4581 = vmatpush1.bf16.msra.mxu0 0
        %4582 = vmatprep.subr.bf16.mxu0 0
        %4583 = vmatpush1.bf16.msra.mxu0 0
        %4584 = vmatprep.subr.bf16.mxu0 0
        %4585 = vmatpush1.bf16.msra.mxu0 0
        %4586 = vmatprep.subr.bf16.mxu0 0
        %4587 = vmatpush1.bf16.msra.mxu0 0
        %4588 = vmatprep.subr.bf16.mxu0 0
        %4589 = vmatpush1.bf16.msra.mxu0 0
        %4590 = vmatprep.subr.bf16.mxu0 0
        %4591 = vmatpush1.bf16.msra.mxu0 0
        %4592 = vmatprep.subr.bf16.mxu0 0
        %4593 = vmatpush1.bf16.msra.mxu0 0
        %4594 = vmatprep.subr.bf16.mxu0 0
        %4595 = vmatpush1.bf16.msra.mxu0 0
        %4596 = vmatprep.subr.bf16.mxu0 0
        %4597 = vmatpush1.bf16.msra.mxu0 0
        %4598 = vmatprep.subr.bf16.mxu0 0
        %4599 = vmatpush1.bf16.msra.mxu0 0
        %4600 = vmatprep.mubr.bf16.mxu0 0
        %4601 = vmatmul.mubr.bf16.gmra.mrb[0].mxu0 %v4566
        %v4602 = vpop.f32.mrb[0].mxu0
        %v4603 = vadd.f32 0.0, %v4602
        %v4604 = vpop.f32.mrb[0].mxu0
        %v4605 = vpop.f32.mrb[0].mxu0
        %v4606 = vpop.f32.mrb[0].mxu0
        %4607 = vdwg.mxu0
        %v4608 = vadd.f32 %v4485, %v4603
        %v4609 = vld [vmem:[%s9] sm:$0x1]
        %v4611 = vlaneseq
        %v4612 = vshrl.u32 %v4611, 7
        %v4613 = vsub.s32 0, %v4612
        %v4614 = vrot.slane %v4609, %v4613
        %v4616 = vadd.f32 %v4608, %v4614
        %v4617 = vmax.f32 %v4616, 0.0
        %vm4618 = vcmask 1043456
        %v4619 = vsel %vm4618, %v4617, 0.0
        %v4620 = vrot.slane %v4619, 4
        %v4621 = vadd.f32 %v4619, %v4620
        %v4622 = vrot.slane %v4621, 2
        %v4623 = vadd.f32 %v4621, %v4622
        %v4624 = vrot.slane %v4623, 1
        %v4625 = vadd.f32 %v4623, %v4624
        %v4626 = vrcp.pop 4.0
        %v4627 = vmul.f32 %v4625, %v4626
        %v4628 = vld [vmem:[#allocation5] sm:$0xff]
        %v4629 = vld [vmem:[#allocation5 + $0x8] sm:$0xff]
        %v4630 = vld [vmem:[#allocation5 + $0x10] sm:$0xff]
        %v4631 = vld [vmem:[#allocation5 + $0x18] sm:$0xff]
        %v4632 = vld [vmem:[#allocation5 + $0x20] sm:$0xff]
        %v4633 = vld [vmem:[#allocation5 + $0x28] sm:$0xff]
        %v4634 = vld [vmem:[#allocation5 + $0x30] sm:$0xff]
        %v4635 = vld [vmem:[#allocation5 + $0x38] sm:$0xff]
        %v4636 = vld [vmem:[#allocation5 + $0x40] sm:$0xff]
        %v4637 = vld [vmem:[#allocation5 + $0x48] sm:$0xff]
        %v4638 = vld [vmem:[#allocation5 + $0x50] sm:$0xff]
        %v4639 = vld [vmem:[#allocation5 + $0x58] sm:$0xff]
        %v4640 = vld [vmem:[#allocation5 + $0x60] sm:$0xff]
        %v4641 = vld [vmem:[#allocation5 + $0x68] sm:$0xff]
        %v4642 = vld [vmem:[#allocation5 + $0x70] sm:$0xff]
        %v4643 = vld [vmem:[#allocation5 + $0x78] sm:$0xff]
        %v4644 = vld [vmem:[%s11] sm:$0x1]
        %4645 = vmatprep.subr.mxu0 0.0
        %4646 = vmatpush1.msra.mxu0 %v4628
        %4647 = vmatprep.subr.mxu0 0.0
        %4648 = vmatpush1.msra.mxu0 %v4629
        %4649 = vmatprep.subr.mxu0 0.0
        %4650 = vmatpush1.msra.mxu0 %v4630
        %4651 = vmatprep.subr.mxu0 0.0
        %4652 = vmatpush1.msra.mxu0 %v4631
        %4653 = vmatprep.subr.mxu0 0.0
        %4654 = vmatpush1.msra.mxu0 %v4632
        %4655 = vmatprep.subr.mxu0 0.0
        %4656 = vmatpush1.msra.mxu0 %v4633
        %4657 = vmatprep.subr.mxu0 0.0
        %4658 = vmatpush1.msra.mxu0 %v4634
        %4659 = vmatprep.subr.mxu0 0.0
        %4660 = vmatpush1.msra.mxu0 %v4635
        %4661 = vmatprep.subr.mxu0 0.0
        %4662 = vmatpush1.msra.mxu0 %v4636
        %4663 = vmatprep.subr.mxu0 0.0
        %4664 = vmatpush1.msra.mxu0 %v4637
        %4665 = vmatprep.subr.mxu0 0.0
        %4666 = vmatpush1.msra.mxu0 %v4638
        %4667 = vmatprep.subr.mxu0 0.0
        %4668 = vmatpush1.msra.mxu0 %v4639
        %4669 = vmatprep.subr.mxu0 0.0
        %4670 = vmatpush1.msra.mxu0 %v4640
        %4671 = vmatprep.subr.mxu0 0.0
        %4672 = vmatpush1.msra.mxu0 %v4641
        %4673 = vmatprep.subr.mxu0 0.0
        %4674 = vmatpush1.msra.mxu0 %v4642
        %4675 = vmatprep.subr.mxu0 0.0
        %4676 = vmatpush1.msra.mxu0 %v4643
        %4677 = vmatprep.subr.mxu0 0.0
        %4678 = vmatpush1.msra.mxu0 0.0
        %4679 = vmatprep.subr.mxu0 0.0
        %4680 = vmatpush1.msra.mxu0 0.0
        %4681 = vmatprep.subr.mxu0 0.0
        %4682 = vmatpush1.msra.mxu0 0.0
        %4683 = vmatprep.subr.mxu0 0.0
        %4684 = vmatpush1.msra.mxu0 0.0
        %4685 = vmatprep.subr.mxu0 0.0
        %4686 = vmatpush1.msra.mxu0 0.0
        %4687 = vmatprep.subr.mxu0 0.0
        %4688 = vmatpush1.msra.mxu0 0.0
        %4689 = vmatprep.subr.mxu0 0.0
        %4690 = vmatpush1.msra.mxu0 0.0
        %4691 = vmatprep.subr.mxu0 0.0
        %4692 = vmatpush1.msra.mxu0 0.0
        %4693 = vmatprep.subr.mxu0 0.0
        %4694 = vmatpush1.msra.mxu0 0.0
        %4695 = vmatprep.subr.mxu0 0.0
        %4696 = vmatpush1.msra.mxu0 0.0
        %4697 = vmatprep.subr.mxu0 0.0
        %4698 = vmatpush1.msra.mxu0 0.0
        %4699 = vmatprep.subr.mxu0 0.0
        %4700 = vmatpush1.msra.mxu0 0.0
        %4701 = vmatprep.subr.mxu0 0.0
        %4702 = vmatpush1.msra.mxu0 0.0
        %4703 = vmatprep.subr.mxu0 0.0
        %4704 = vmatpush1.msra.mxu0 0.0
        %4705 = vmatprep.subr.mxu0 0.0
        %4706 = vmatpush1.msra.mxu0 0.0
        %4707 = vmatprep.subr.mxu0 0.0
        %4708 = vmatpush1.msra.mxu0 0.0
        %4709 = vmatprep.mubr.f32.mxu0 0.0
        %4710 = vmatmul.mubr.f32.gmra.mrb[0].mxu0 %v4627
        %v4711 = vpop.f32.mrb[0].mxu0
        %v4712 = vadd.f32 %v4644, %v4711
        %v4713 = vpop.f32.mrb[0].mxu0
        %4714 = vdwg.mxu0
        %4715 = vst [vmem:[%s435] sm:$0x1] %v4712
        %s4716 = sand.u32 %s293, 1
        %s4717 = scalar_lea.sflag [#allocation4], %s4716
        %s4718 = sand.u32 %s293, 1
        %s4719 = scalar_lea.vmem [#allocation7], %s4718
        // Predicated region
        $region77: #{model_forward.1} parent=67 // pred_check
          %p4720 = pneg %p303
        $region78: #{model_forward.1} parent=67 // pred_check_branch
          %4722 = sbr.rel (%p4720) target = $region80
        $region79: #{model_forward.1} parent=67 // pred_region
          %s4724 = ssub.s32 16, 16
          %4725 = vsyncadd %s4717, %s4724
          %s4726 = smul.addr %s28, 16
          %s4727 = scalar_lea.hbm %s12, %s4726
          %s4729 = sshll.u32 %s4719, 4
          %s4730 = int_to_ptr.vmem [resolvable:$true] %s4729
          %4732 = dma.vmem_to_hbm [thread:$0]  %s4730, 16, %s4727, %s4717
        $region80: #{model_forward.1} parent=67 // pred_fallthru
          _
      $region68: #{model_forward.1} parent=5 // pred_fallthru
        _
      %p4733 = scmp.le.s32.totalorder 2, %s23
      // Predicated region
      $region81: #{model_forward.1} parent=5 // pred_check
        %p4734 = pneg %p4733
      $region82: #{model_forward.1} parent=5 // pred_check_branch
        %4736 = sbr.rel (%p4734) target = $region84
      $region83: #{model_forward.1} parent=5 // pred_region
        %s4737 = ssub.s32 %s23, 2
        // Predicated region
        $region85: #{model_forward.1} parent=83 // pred_check
          %p4738 = pneg %p309
        $region86: #{model_forward.1} parent=83 // pred_check_branch
          %4740 = sbr.rel (%p4738) target = $region88
        $region87: #{model_forward.1} parent=83 // pred_region
          %s4741 = sand.u32 %s294, 1
          %s4742 = scalar_lea.sflag [#allocation4], %s4741
          %s4743 = sand.u32 %s294, 1
          %s4744 = scalar_lea.vmem [#allocation7], %s4743
          %4745 = dma.done %s4742, 16
        $region88: #{model_forward.1} parent=83 // pred_fallthru
          _
      $region84: #{model_forward.1} parent=5 // pred_fallthru
        _
    $region6: #{model_forward.1} parent=1 // loop_footer
      %s27 = sadd.s32 1, %s23
    $region7: #{model_forward.1} parent=1 // loop_footer_branch
      %22 = sbr.rel target = $region3
    $region8: #{model_forward.1} parent=1 // loop_exit
      _
    %4746 = vsyncpa [#allocation3], 1
    %s4747 = scalar_lea.sflag [#allocation3], 1
    %4748 = vsyncpa %s4747, 1
    %4749 = vsyncpa [#allocation6], 1
    %4750 = vsyncpa [#allocation4], 1
    %s4751 = scalar_lea.sflag [#allocation4], 1
    %4752 = vsyncpa %s4751, 1

</llo_original>
